<compile_context>
chip_gen: v6e
topology: v6e:2x2x1
jax: 0.10.0
libtpu: 0.0.40
codegen_flags: <defaults>
</compile_context>

<pallas_src>
import jax
import jax.numpy as jnp
from jax.experimental import pallas as pl

C = 16            # conv channels (fixed by the module)
SCALE = 16.0      # self.scale_factor
DROPOUT_P = 0.3   # self.dropout_p
KEEP_SCALE = 1.0 / (1.0 - DROPOUT_P)
# keep an element iff its uniform uint32 bits >= round(p * 2**32)
DROP_THRESHOLD = int(round(DROPOUT_P * (1 << 32)))


# ------------------------------------------------------------------ #
# Kernel 1: BOTH 1x1 convs as channel matmuls (single launch, lane-dense).
#   v = W @ x_flat + b,  W: (Cout, Cin), x_flat: (Cin, B*H*W), b: (Cout, 1)
# ------------------------------------------------------------------ #
def convs_kernel(wq_ref, bq_ref, wk_ref, bk_ref, x_ref, y_ref, v1_ref, v2_ref):
    v1_ref[...] = (
        jnp.dot(wq_ref[...], x_ref[...], preferred_element_type=jnp.float32)
        + bq_ref[...]
    )
    v2_ref[...] = (
        jnp.dot(wk_ref[...], y_ref[...], preferred_element_type=jnp.float32)
        + bk_ref[...]
    )


def conv1x1_pair(wq, bq, wk, bk, x2d, y2d):
    c, nx = x2d.shape
    _, ny = y2d.shape
    return pl.pallas_call(
        convs_kernel,
        out_shape=(
            jax.ShapeDtypeStruct((c, nx), jnp.float32),
            jax.ShapeDtypeStruct((c, ny), jnp.float32),
        ),
    )(wq, bq.reshape(c, 1), wk, bk.reshape(c, 1), x2d, y2d)


# ------------------------------------------------------------------ #
# Kernel 2: whole attention-like chain for all B*C matrices in ONE step.
#   s   = q @ k^T            (batched, no explicit transpose materialized)
#   p   = softmax(s * SCALE, axis=-1)
#   d   = dropout(p)         (integer-threshold compare on precomputed bits)
#   out = d @ s              (uses the *unscaled* s, matching the module)
# ------------------------------------------------------------------ #
def attn_kernel(q_ref, k_ref, bits_ref, o_ref):
    q = q_ref[...]                       # (BC, Hx, W)
    k = k_ref[...]                       # (BC, Hy, W)

    s = jnp.einsum("bqd,bkd->bqk", q, k, preferred_element_type=jnp.float32)

    z = s * SCALE
    z = z - jnp.max(z, axis=-1, keepdims=True)
    e = jnp.exp(z)
    p = e / jnp.sum(e, axis=-1, keepdims=True)

    keep = bits_ref[...] >= jnp.uint32(DROP_THRESHOLD)
    d = jnp.where(keep, p * KEEP_SCALE, jnp.float32(0.0))

    o_ref[...] = jnp.einsum(
        "bqk,bkj->bqj", d, s, preferred_element_type=jnp.float32
    )


def attention_chain(v1, v2, bits):
    bc, hx, _ = v1.shape
    _, hy, _ = v2.shape
    return pl.pallas_call(
        attn_kernel,
        out_shape=jax.ShapeDtypeStruct((bc, hx, hy), jnp.float32),
    )(v1, v2, bits)


# ------------------------------------------------------------------ #
# Full forward
# ------------------------------------------------------------------ #
@jax.jit
def model_forward(x, y, wq, bq, wk, bk, dropout_key):
    b, c, hx, wx = x.shape
    _, _, hy, wy = y.shape

    # NCHW -> (Cin, B*H*W).  For B == 1 (the module's configuration) moving a
    # size-1 axis + reshape is free (no data movement).
    x2d = jnp.moveaxis(x, 1, 0).reshape(c, b * hx * wx)
    y2d = jnp.moveaxis(y, 1, 0).reshape(c, b * hy * wy)

    v1_2d, v2_2d = conv1x1_pair(wq, bq, wk, bk, x2d, y2d)

    # (Cout, B*H*W) -> (B*Cout, H, W) "matrix batch" layout (free for B == 1).
    v1 = jnp.moveaxis(v1_2d.reshape(c, b, hx, wx), 1, 0).reshape(b * c, hx, wx)
    v2 = jnp.moveaxis(v2_2d.reshape(c, b, hy, wy), 1, 0).reshape(b * c, hy, wy)

    # One uniform-bits draw for the whole batch (independent per element).
    bits = jax.random.bits(dropout_key, (b * c, hx, hy), dtype=jnp.uint32)

    out = attention_chain(v1, v2, bits)          # (B*C, Hx, Hy)
    return out.reshape(b, c, hx, hy)


if __name__ == "__main__":
    key = jax.random.PRNGKey(0)
    kx, ky, kwq, kbq, kwk, kbk, kwv, kbv, kdrop = jax.random.split(key, 9)

    # The matmul chain requires Hx == Hy and Wx == Wy: NCHW = (1, 16, 16, 16).
    x = jax.random.normal(kx, (1, C, 16, 16), dtype=jnp.float32)
    y = jax.random.normal(ky, (1, C, 16, 16), dtype=jnp.float32)

    # Conv2d(16,16,1): weight (16,16,1,1) -> (16,16), bias (16,).
    wq = jax.random.normal(kwq, (C, C), dtype=jnp.float32) * 0.1
    bq = jax.random.normal(kbq, (C,), dtype=jnp.float32) * 0.1
    wk = jax.random.normal(kwk, (C, C), dtype=jnp.float32) * 0.1
    bk = jax.random.normal(kbk, (C,), dtype=jnp.float32) * 0.1
    # value_conv parameters exist in __init__ but are unused by forward().
    wv = jax.random.normal(kwv, (C, C), dtype=jnp.float32) * 0.1  # noqa: F841
    bv = jax.random.normal(kbv, (C,), dtype=jnp.float32) * 0.1    # noqa: F841

    out = model_forward(x, y, wq, bq, wk, bk, kdrop)
    jax.block_until_ready(out)
    assert out.shape == (1, C, 16, 16) and out.dtype == jnp.float32
    assert bool(jnp.all(jnp.isfinite(out)))
    print("KERNEL_OK")
</pallas_src>

<mosaic_0001>
module attributes {stable_mosaic.version = 11 : i64} {
  func.func @convs_kernel(%arg0: memref<16x16xf32, #tpu.memory_space<vmem>>, %arg1: memref<16x1xf32, #tpu.memory_space<vmem>>, %arg2: memref<16x16xf32, #tpu.memory_space<vmem>>, %arg3: memref<16x1xf32, #tpu.memory_space<vmem>>, %arg4: memref<16x256xf32, #tpu.memory_space<vmem>>, %arg5: memref<16x256xf32, #tpu.memory_space<vmem>>, %arg6: memref<16x256xf32, #tpu.memory_space<vmem>>, %arg7: memref<16x256xf32, #tpu.memory_space<vmem>>) attributes {dimension_semantics = [], scalar_prefetch = 0 : i64, scratch_operands = 0 : i64, tpu.core_type = #tpu.core_type<tc>} {
    %c0 = arith.constant 0 : index
    %c0_0 = arith.constant 0 : index
    %0 = vector.load %arg0[%c0, %c0_0] : memref<16x16xf32, #tpu.memory_space<vmem>>, vector<16x16xf32>
    %c0_1 = arith.constant 0 : index
    %c0_2 = arith.constant 0 : index
    %1 = vector.load %arg4[%c0_1, %c0_2] : memref<16x256xf32, #tpu.memory_space<vmem>>, vector<16x256xf32>
    %cst = arith.constant dense<0.000000e+00> : vector<16x256xf32>
    %2 = tpu.matmul %0, %1, %cst {dimension_numbers = #tpu.dot_dimension_numbers<[1], [0], [0], [1], [0, 0, 1, 1], [], []>} : vector<16x16xf32>, vector<16x256xf32>, vector<16x256xf32> -> vector<16x256xf32>
    %c0_3 = arith.constant 0 : index
    %c0_4 = arith.constant 0 : index
    %3 = vector.load %arg1[%c0_3, %c0_4] : memref<16x1xf32, #tpu.memory_space<vmem>>, vector<16x1xf32>
    %4 = vector.broadcast %3 : vector<16x1xf32> to vector<16x256xf32>
    %5 = arith.addf %2, %4 : vector<16x256xf32>
    %c0_5 = arith.constant 0 : index
    %c0_6 = arith.constant 0 : index
    %6 = vector.load %arg6[%c0_5, %c0_6] : memref<16x256xf32, #tpu.memory_space<vmem>>, vector<16x256xf32>
    tpu.vector_store %arg6[%c0_5, %c0_6], %5 {strides = array<i32>} : memref<16x256xf32, #tpu.memory_space<vmem>>, vector<16x256xf32>,
    %c0_7 = arith.constant 0 : index
    %c0_8 = arith.constant 0 : index
    %7 = vector.load %arg2[%c0_7, %c0_8] : memref<16x16xf32, #tpu.memory_space<vmem>>, vector<16x16xf32>
    %c0_9 = arith.constant 0 : index
    %c0_10 = arith.constant 0 : index
    %8 = vector.load %arg5[%c0_9, %c0_10] : memref<16x256xf32, #tpu.memory_space<vmem>>, vector<16x256xf32>
    %cst_11 = arith.constant dense<0.000000e+00> : vector<16x256xf32>
    %9 = tpu.matmul %7, %8, %cst_11 {dimension_numbers = #tpu.dot_dimension_numbers<[1], [0], [0], [1], [0, 0, 1, 1], [], []>} : vector<16x16xf32>, vector<16x256xf32>, vector<16x256xf32> -> vector<16x256xf32>
    %c0_12 = arith.constant 0 : index
    %c0_13 = arith.constant 0 : index
    %10 = vector.load %arg3[%c0_12, %c0_13] : memref<16x1xf32, #tpu.memory_space<vmem>>, vector<16x1xf32>
    %11 = vector.broadcast %10 : vector<16x1xf32> to vector<16x256xf32>
    %12 = arith.addf %9, %11 : vector<16x256xf32>
    %c0_14 = arith.constant 0 : index
    %c0_15 = arith.constant 0 : index
    %13 = vector.load %arg7[%c0_14, %c0_15] : memref<16x256xf32, #tpu.memory_space<vmem>>, vector<16x256xf32>
    tpu.vector_store %arg7[%c0_14, %c0_15], %12 {strides = array<i32>} : memref<16x256xf32, #tpu.memory_space<vmem>>, vector<16x256xf32>,
    return
  }
}

module attributes {stable_mosaic.version = 11 : i64} {
  func.func @attn_kernel(%arg0: memref<16x16x16xf32, #tpu.memory_space<vmem>>, %arg1: memref<16x16x16xf32, #tpu.memory_space<vmem>>, %arg2: memref<16x16x16xi32, #tpu.memory_space<vmem>>, %arg3: memref<16x16x16xf32, #tpu.memory_space<vmem>>) attributes {dimension_semantics = [], scalar_prefetch = 0 : i64, scratch_operands = 0 : i64, tpu.core_type = #tpu.core_type<tc>} {
    %c0 = arith.constant 0 : index
    %c0_0 = arith.constant 0 : index
    %c0_1 = arith.constant 0 : index
    %0 = vector.load %arg0[%c0, %c0_0, %c0_1] : memref<16x16x16xf32, #tpu.memory_space<vmem>>, vector<16x16x16xf32>
    %c0_2 = arith.constant 0 : index
    %c0_3 = arith.constant 0 : index
    %c0_4 = arith.constant 0 : index
    %1 = vector.load %arg1[%c0_2, %c0_3, %c0_4] : memref<16x16x16xf32, #tpu.memory_space<vmem>>, vector<16x16x16xf32>
    "tpu.trace_start"() <{level = 10 : i32, message = "bqd,bkd->bqk"}> : () -> ()
    %cst = arith.constant dense<0.000000e+00> : vector<16x16x16xf32>
    %2 = tpu.matmul %0, %1, %cst {dimension_numbers = #tpu.dot_dimension_numbers<[2], [2], [1], [1], [0, 0, 0, 1, 1, 1], [0], [0]>} : vector<16x16x16xf32>, vector<16x16x16xf32>, vector<16x16x16xf32> -> vector<16x16x16xf32>
    "tpu.trace_stop"() : () -> ()
    %cst_5 = arith.constant 1.600000e+01 : f32
    %3 = vector.broadcast %cst_5 : f32 to vector<16x16x16xf32>
    %4 = arith.mulf %2, %3 : vector<16x16x16xf32>
    %cst_6 = arith.constant dense<0xFF800000> : vector<16x16xf32>
    %5 = vector.multi_reduction <maximumf>, %4, %cst_6 [2] : vector<16x16x16xf32> to vector<16x16xf32>
    %6 = vector.shape_cast %5 : vector<16x16xf32> to vector<16x16x1xf32>
    %7 = vector.broadcast %6 : vector<16x16x1xf32> to vector<16x16x16xf32>
    %8 = arith.subf %4, %7 : vector<16x16x16xf32>
    %9 = math.exp %8 : vector<16x16x16xf32>
    %cst_7 = arith.constant dense<0.000000e+00> : vector<16x16xf32>
    %10 = vector.multi_reduction <add>, %9, %cst_7 [2] : vector<16x16x16xf32> to vector<16x16xf32>
    %11 = vector.shape_cast %10 : vector<16x16xf32> to vector<16x16x1xf32>
    %12 = vector.broadcast %11 : vector<16x16x1xf32> to vector<16x16x16xf32>
    %13 = arith.divf %9, %12 : vector<16x16x16xf32>
    %c0_8 = arith.constant 0 : index
    %c0_9 = arith.constant 0 : index
    %c0_10 = arith.constant 0 : index
    %14 = vector.load %arg2[%c0_8, %c0_9, %c0_10] : memref<16x16x16xi32, #tpu.memory_space<vmem>>, vector<16x16x16xi32>
    %c1288490189_i32 = arith.constant 1288490189 : i32
    %15 = vector.broadcast %c1288490189_i32 : i32 to vector<16x16x16xi32>
    %16 = arith.cmpi uge, %14, %15 : vector<16x16x16xi32>
    %cst_11 = arith.constant 1.42857146 : f32
    %17 = vector.broadcast %cst_11 : f32 to vector<16x16x16xf32>
    %18 = arith.mulf %13, %17 : vector<16x16x16xf32>
    %cst_12 = arith.constant 0.000000e+00 : f32
    %19 = vector.broadcast %cst_12 : f32 to vector<16x16x16xf32>
    %20 = arith.select %16, %18, %19 : vector<16x16x16xi1>, vector<16x16x16xf32>
    "tpu.trace_start"() <{level = 10 : i32, message = "bqk,bkj->bqj"}> : () -> ()
    %cst_13 = arith.constant dense<0.000000e+00> : vector<16x16x16xf32>
    %21 = tpu.matmul %20, %2, %cst_13 {dimension_numbers = #tpu.dot_dimension_numbers<[2], [1], [1], [2], [0, 0, 0, 1, 1, 2], [0], [0]>} : vector<16x16x16xf32>, vector<16x16x16xf32>, vector<16x16x16xf32> -> vector<16x16x16xf32>
    "tpu.trace_stop"() : () -> ()
    %c0_14 = arith.constant 0 : index
    %c0_15 = arith.constant 0 : index
    %c0_16 = arith.constant 0 : index
    %22 = vector.load %arg3[%c0_14, %c0_15, %c0_16] : memref<16x16x16xf32, #tpu.memory_space<vmem>>, vector<16x16x16xf32>
    tpu.vector_store %arg3[%c0_14, %c0_15, %c0_16], %21 {strides = array<i32>} : memref<16x16x16xf32, #tpu.memory_space<vmem>>, vector<16x16x16xf32>,
    return
  }
}

</mosaic_0001>

<llo_original>
// kernel: model_forward.2
$region0: #{model_forward.2}
  #allocation0 [shape = 'u32[]', space=smem, size = 0x4, offset = 0x4, fixed_abs, tag = 'smem constant byte address 0x4 - core index']
  #allocation1 [shape = 'u32[144,128]{1,0:T(1,128)}', space=vmem, size = 0x12000, scoped, tag = 'internal scratch']
  %s0 = inlined_call_operand.vmem [shape: f32[16,16], index: 0, kind: input, shape index: {}]
  %s1 = inlined_call_operand.vmem [shape: f32[16,1], index: 1, kind: input, shape index: {}]
  %s2 = inlined_call_operand.vmem [shape: f32[16,16], index: 2, kind: input, shape index: {}]
  %s3 = inlined_call_operand.vmem [shape: f32[16,1], index: 3, kind: input, shape index: {}]
  %s4 = inlined_call_operand.vmem [shape: f32[16,256], index: 4, kind: input, shape index: {}]
  %s5 = inlined_call_operand.vmem [shape: f32[16,256], index: 5, kind: input, shape index: {}]
  %s6 = inlined_call_operand.vmem [shape: f32[16,256], index: 6, kind: output, shape index: {0}]
  %s7 = inlined_call_operand.vmem [shape: f32[16,256], index: 7, kind: output, shape index: {1}]
  %8 = xla_tuple %s6, %s7
  %s9 = sld [smem:[#allocation0]]
  $region42: #{model_forward.2} parent=0
    _
  %s11 = ssub.s32 1, %s9
  %s12 = scalar_select 0, %s11, %s9
  // Predicated region
  $region2: #{model_forward.2} parent=0 // pred_check
    _
  $region3: #{model_forward.2} parent=0 // pred_check_branch
    %14 = sbr.rel (0) target = $region5
  $region4: #{model_forward.2} parent=0 // pred_region
    _
  $region5: #{model_forward.2} parent=0 // pred_fallthru
    _
  // Predicated region
  $region6: #{model_forward.2} parent=0 // pred_check
    _
  $region7: #{model_forward.2} parent=0 // pred_check_branch
    %16 = sbr.rel (0) target = $region9
  $region8: #{model_forward.2} parent=0 // pred_region
    _
  $region9: #{model_forward.2} parent=0 // pred_fallthru
    _
  // Predicated region
  $region10: #{model_forward.2} parent=0 // pred_check
    _
  $region11: #{model_forward.2} parent=0 // pred_check_branch
    %18 = sbr.rel (0) target = $region13
  $region12: #{model_forward.2} parent=0 // pred_region
    _
  $region13: #{model_forward.2} parent=0 // pred_fallthru
    _
  // Predicated region
  $region14: #{model_forward.2} parent=0 // pred_check
    _
  $region15: #{model_forward.2} parent=0 // pred_check_branch
    %20 = sbr.rel (0) target = $region17
  $region16: #{model_forward.2} parent=0 // pred_region
    _
  $region17: #{model_forward.2} parent=0 // pred_fallthru
    _
  // Predicated region
  $region18: #{model_forward.2} parent=0 // pred_check
    _
  $region19: #{model_forward.2} parent=0 // pred_check_branch
    %22 = sbr.rel (0) target = $region21
  $region20: #{model_forward.2} parent=0 // pred_region
    _
  $region21: #{model_forward.2} parent=0 // pred_fallthru
    _
  // Predicated region
  $region22: #{model_forward.2} parent=0 // pred_check
    _
  $region23: #{model_forward.2} parent=0 // pred_check_branch
    %24 = sbr.rel (0) target = $region25
  $region24: #{model_forward.2} parent=0 // pred_region
    _
  $region25: #{model_forward.2} parent=0 // pred_fallthru
    _
  %v25 = vld [vmem:[%s0] sm:$0xff]
  %v26 = vld [vmem:[%s0 + $0x8] sm:$0xff]
  %v27 = vld [vmem:[%s4] sm:$0xff]
  %v28 = vld [vmem:[%s4 + $0x8] sm:$0xff]
  %v29 = vld [vmem:[%s4 + $0x10] sm:$0xff]
  %v30 = vld [vmem:[%s4 + $0x18] sm:$0xff]
  %v31 = vld [vmem:[%s1] sm:$0xff]
  %v32 = vld [vmem:[%s1 + $0x8] sm:$0xff]
  %34 = vset.pattern.permute.xlu0 0
  %35 = vperm.xlu0 %34, %v31
  %v36 = vpop.permute.xlu0 %35
  %39 = vset.pattern.permute.xlu0 0
  %40 = vperm.xlu0 %39, %v32
  %v41 = vpop.permute.xlu0 %40
  %vm43 = vcmask 130048
  %v45 = vsel %vm43, %v25, 0
  %v48 = vsel %vm43, %v26, 0
  %50 = vmatprep.subr.mxu0 0.0
  %51 = vmatpush1.msra.mxu0 0.0
  %52 = vmatprep.subr.mxu0 0.0
  %53 = vmatpush1.msra.mxu0 0.0
  %54 = vmatprep.subr.mxu0 0.0
  %55 = vmatpush1.msra.mxu0 0.0
  %56 = vmatprep.subr.mxu0 0.0
  %57 = vmatpush1.msra.mxu0 0.0
  %58 = vmatprep.subr.mxu0 0.0
  %59 = vmatpush1.msra.mxu0 0.0
  %60 = vmatprep.subr.mxu0 0.0
  %61 = vmatpush1.msra.mxu0 0.0
  %62 = vmatprep.subr.mxu0 0.0
  %63 = vmatpush1.msra.mxu0 0.0
  %64 = vmatprep.subr.mxu0 0.0
  %65 = vmatpush1.msra.mxu0 0.0
  %66 = vmatprep.subr.mxu0 0.0
  %67 = vmatpush1.msra.mxu0 0.0
  %68 = vmatprep.subr.mxu0 0.0
  %69 = vmatpush1.msra.mxu0 0.0
  %70 = vmatprep.subr.mxu0 0.0
  %71 = vmatpush1.msra.mxu0 0.0
  %72 = vmatprep.subr.mxu0 0.0
  %73 = vmatpush1.msra.mxu0 0.0
  %74 = vmatprep.subr.mxu0 0.0
  %75 = vmatpush1.msra.mxu0 0.0
  %76 = vmatprep.subr.mxu0 0.0
  %77 = vmatpush1.msra.mxu0 0.0
  %78 = vmatprep.subr.mxu0 %v30
  %79 = vmatpush1.msra.mxu0 %v29
  %80 = vmatprep.subr.mxu0 %v28
  %81 = vmatpush1.msra.mxu0 %v27
  %82 = vmatprep.subr.mxu0 0.0
  %83 = vmatpush2.msra.mxu0 0.0
  %84 = vmatprep.subr.mxu0 0.0
  %85 = vmatpush2.msra.mxu0 0.0
  %86 = vmatprep.subr.mxu0 0.0
  %87 = vmatpush2.msra.mxu0 0.0
  %88 = vmatprep.subr.mxu0 0.0
  %89 = vmatpush2.msra.mxu0 0.0
  %90 = vmatprep.subr.mxu0 0.0
  %91 = vmatpush2.msra.mxu0 0.0
  %92 = vmatprep.subr.mxu0 0.0
  %93 = vmatpush2.msra.mxu0 0.0
  %94 = vmatprep.subr.mxu0 0.0
  %95 = vmatpush2.msra.mxu0 0.0
  %96 = vmatprep.subr.mxu0 0.0
  %97 = vmatpush2.msra.mxu0 0.0
  %98 = vmatprep.subr.mxu0 0.0
  %99 = vmatpush2.msra.mxu0 0.0
  %100 = vmatprep.subr.mxu0 0.0
  %101 = vmatpush2.msra.mxu0 0.0
  %102 = vmatprep.subr.mxu0 0.0
  %103 = vmatpush2.msra.mxu0 0.0
  %104 = vmatprep.subr.mxu0 0.0
  %105 = vmatpush2.msra.mxu0 0.0
  %106 = vmatprep.subr.mxu0 0.0
  %107 = vmatpush2.msra.mxu0 0.0
  %108 = vmatprep.subr.mxu0 0.0
  %109 = vmatpush2.msra.mxu0 0.0
  %110 = vmatprep.subr.mxu0 0.0
  %111 = vmatpush2.msra.mxu0 0.0
  %112 = vmatprep.subr.mxu0 0.0
  %113 = vmatpush2.msra.mxu0 0.0
  %114 = vmatprep.mubr.f32.mxu0 0.0
  %115 = vmatmul.mubr.f32.gmra.mxu0 %v45
  %v116 = vpop.f32.mrf.mxu0
  %v117 = vadd.f32 %v36, %v116
  %v118 = vpop.f32.mrf.mxu0
  %v119 = vadd.f32 %v36, %v118
  %120 = vmatprep.mubr.f32.mxu0 0.0
  %121 = vmatmul.mubr.f32.gmra.mxu0 %v48
  %v122 = vpop.f32.mrf.mxu0
  %v123 = vadd.f32 %v41, %v122
  %v124 = vpop.f32.mrf.mxu0
  %v125 = vadd.f32 %v41, %v124
  %126 = vdwg.mxu0
  %127 = vst [vmem:[%s6] sm:$0xff] %v117
  %128 = vst [vmem:[%s6 + $0x8] sm:$0xff] %v119
  %129 = vst [vmem:[%s6 + $0x10] sm:$0xff] %v123
  %130 = vst [vmem:[%s6 + $0x18] sm:$0xff] %v125
  %v131 = vld [vmem:[%s2] sm:$0xff]
  %v132 = vld [vmem:[%s2 + $0x8] sm:$0xff]
  %v133 = vld [vmem:[%s5] sm:$0xff]
  %v134 = vld [vmem:[%s5 + $0x8] sm:$0xff]
  %v135 = vld [vmem:[%s5 + $0x10] sm:$0xff]
  %v136 = vld [vmem:[%s5 + $0x18] sm:$0xff]
  %v137 = vld [vmem:[%s3] sm:$0xff]
  %v138 = vld [vmem:[%s3 + $0x8] sm:$0xff]
  %140 = vset.pattern.permute.xlu0 0
  %141 = vperm.xlu0 %140, %v137
  %v142 = vpop.permute.xlu0 %141
  %145 = vset.pattern.permute.xlu0 0
  %146 = vperm.xlu0 %145, %v138
  %v147 = vpop.permute.xlu0 %146
  %v150 = vsel %vm43, %v131, 0
  %v153 = vsel %vm43, %v132, 0
  %155 = vmatprep.subr.mxu0 0.0
  %156 = vmatpush1.msra.mxu0 0.0
  %157 = vmatprep.subr.mxu0 0.0
  %158 = vmatpush1.msra.mxu0 0.0
  %159 = vmatprep.subr.mxu0 0.0
  %160 = vmatpush1.msra.mxu0 0.0
  %161 = vmatprep.subr.mxu0 0.0
  %162 = vmatpush1.msra.mxu0 0.0
  %163 = vmatprep.subr.mxu0 0.0
  %164 = vmatpush1.msra.mxu0 0.0
  %165 = vmatprep.subr.mxu0 0.0
  %166 = vmatpush1.msra.mxu0 0.0
  %167 = vmatprep.subr.mxu0 0.0
  %168 = vmatpush1.msra.mxu0 0.0
  %169 = vmatprep.subr.mxu0 0.0
  %170 = vmatpush1.msra.mxu0 0.0
  %171 = vmatprep.subr.mxu0 0.0
  %172 = vmatpush1.msra.mxu0 0.0
  %173 = vmatprep.subr.mxu0 0.0
  %174 = vmatpush1.msra.mxu0 0.0
  %175 = vmatprep.subr.mxu0 0.0
  %176 = vmatpush1.msra.mxu0 0.0
  %177 = vmatprep.subr.mxu0 0.0
  %178 = vmatpush1.msra.mxu0 0.0
  %179 = vmatprep.subr.mxu0 0.0
  %180 = vmatpush1.msra.mxu0 0.0
  %181 = vmatprep.subr.mxu0 0.0
  %182 = vmatpush1.msra.mxu0 0.0
  %183 = vmatprep.subr.mxu0 %v136
  %184 = vmatpush1.msra.mxu0 %v135
  %185 = vmatprep.subr.mxu0 %v134
  %186 = vmatpush1.msra.mxu0 %v133
  %187 = vmatprep.subr.mxu0 0.0
  %188 = vmatpush2.msra.mxu0 0.0
  %189 = vmatprep.subr.mxu0 0.0
  %190 = vmatpush2.msra.mxu0 0.0
  %191 = vmatprep.subr.mxu0 0.0
  %192 = vmatpush2.msra.mxu0 0.0
  %193 = vmatprep.subr.mxu0 0.0
  %194 = vmatpush2.msra.mxu0 0.0
  %195 = vmatprep.subr.mxu0 0.0
  %196 = vmatpush2.msra.mxu0 0.0
  %197 = vmatprep.subr.mxu0 0.0
  %198 = vmatpush2.msra.mxu0 0.0
  %199 = vmatprep.subr.mxu0 0.0
  %200 = vmatpush2.msra.mxu0 0.0
  %201 = vmatprep.subr.mxu0 0.0
  %202 = vmatpush2.msra.mxu0 0.0
  %203 = vmatprep.subr.mxu0 0.0
  %204 = vmatpush2.msra.mxu0 0.0
  %205 = vmatprep.subr.mxu0 0.0
  %206 = vmatpush2.msra.mxu0 0.0
  %207 = vmatprep.subr.mxu0 0.0
  %208 = vmatpush2.msra.mxu0 0.0
  %209 = vmatprep.subr.mxu0 0.0
  %210 = vmatpush2.msra.mxu0 0.0
  %211 = vmatprep.subr.mxu0 0.0
  %212 = vmatpush2.msra.mxu0 0.0
  %213 = vmatprep.subr.mxu0 0.0
  %214 = vmatpush2.msra.mxu0 0.0
  %215 = vmatprep.subr.mxu0 0.0
  %216 = vmatpush2.msra.mxu0 0.0
  %217 = vmatprep.subr.mxu0 0.0
  %218 = vmatpush2.msra.mxu0 0.0
  %219 = vmatprep.mubr.f32.mxu0 0.0
  %220 = vmatmul.mubr.f32.gmra.mxu0 %v150
  %v221 = vpop.f32.mrf.mxu0
  %v222 = vadd.f32 %v142, %v221
  %v223 = vpop.f32.mrf.mxu0
  %v224 = vadd.f32 %v142, %v223
  %225 = vmatprep.mubr.f32.mxu0 0.0
  %226 = vmatmul.mubr.f32.gmra.mxu0 %v153
  %v227 = vpop.f32.mrf.mxu0
  %v228 = vadd.f32 %v147, %v227
  %v229 = vpop.f32.mrf.mxu0
  %v230 = vadd.f32 %v147, %v229
  %231 = vdwg.mxu0
  %232 = vst [vmem:[%s7] sm:$0xff] %v222
  %233 = vst [vmem:[%s7 + $0x8] sm:$0xff] %v224
  %234 = vst [vmem:[%s7 + $0x10] sm:$0xff] %v228
  %235 = vst [vmem:[%s7 + $0x18] sm:$0xff] %v230
  // Predicated region
  $region26: #{model_forward.2} parent=0 // pred_check
    _
  $region27: #{model_forward.2} parent=0 // pred_check_branch
    %237 = sbr.rel (0) target = $region29
  $region28: #{model_forward.2} parent=0 // pred_region
    _
  $region29: #{model_forward.2} parent=0 // pred_fallthru
    _
  // Predicated region
  $region30: #{model_forward.2} parent=0 // pred_check
    _
  $region31: #{model_forward.2} parent=0 // pred_check_branch
    %239 = sbr.rel (0) target = $region33
  $region32: #{model_forward.2} parent=0 // pred_region
    _
  $region33: #{model_forward.2} parent=0 // pred_fallthru
    _
  // Predicated region
  $region34: #{model_forward.2} parent=0 // pred_check
    _
  $region35: #{model_forward.2} parent=0 // pred_check_branch
    %241 = sbr.rel (0) target = $region37
  $region36: #{model_forward.2} parent=0 // pred_region
    _
  $region37: #{model_forward.2} parent=0 // pred_fallthru
    _
  // Predicated region
  $region38: #{model_forward.2} parent=0 // pred_check
    _
  $region39: #{model_forward.2} parent=0 // pred_check_branch
    %243 = sbr.rel (0) target = $region41
  $region40: #{model_forward.2} parent=0 // pred_region
    _
  $region41: #{model_forward.2} parent=0 // pred_fallthru
    _

// kernel: model_forward.3
$region0: #{model_forward.3}
  #allocation0 [shape = 'u32[]', space=smem, size = 0x4, offset = 0x4, fixed_abs, tag = 'smem constant byte address 0x4 - core index']
  #allocation1 [shape = 'u32[144,128]{1,0:T(1,128)}', space=vmem, size = 0x12000, scoped, tag = 'internal scratch']
  %s0 = inlined_call_operand.vmem [shape: f32[16,16,16], index: 0, kind: input, shape index: {}]
  %s1 = inlined_call_operand.vmem [shape: f32[16,16,16], index: 1, kind: input, shape index: {}]
  %s2 = inlined_call_operand.vmem [shape: u32[16,16,16], index: 2, kind: input, shape index: {}]
  %s3 = inlined_call_operand.hbm [shape: f32[16,16,16], index: 3, kind: output, shape index: {}]
  %s4 = sld [smem:[#allocation0]]
  $region22: #{model_forward.3} parent=0
    _
  %s6 = ssub.s32 1, %s4
  %s7 = scalar_select 0, %s6, %s4
  $region1: #{model_forward.3} parent=0
    #allocation2 [shape = 'u8[131072]{0}', space=vmem, size = 0x20000, scoped, tag = 'output window, operand 0, single buffered']
    #allocation3 [shape = 's32[1]{0}', space=sflag, size = 0x4, scoped, tag = 'scoped memory for model_forward.3']
    %8 = vsyncpa [#allocation3], 0
    // Predicated region
    $region2: #{model_forward.3} parent=1 // pred_check
      _
    $region3: #{model_forward.3} parent=1 // pred_check_branch
      %10 = sbr.rel (0) target = $region5
    $region4: #{model_forward.3} parent=1 // pred_region
      _
    $region5: #{model_forward.3} parent=1 // pred_fallthru
      _
    // Predicated region
    $region6: #{model_forward.3} parent=1 // pred_check
      _
    $region7: #{model_forward.3} parent=1 // pred_check_branch
      %12 = sbr.rel (0) target = $region9
    $region8: #{model_forward.3} parent=1 // pred_region
      _
    $region9: #{model_forward.3} parent=1 // pred_fallthru
      _
    // Predicated region
    $region10: #{model_forward.3} parent=1 // pred_check
      _
    $region11: #{model_forward.3} parent=1 // pred_check_branch
      %14 = sbr.rel (0) target = $region13
    $region12: #{model_forward.3} parent=1 // pred_region
      _
    $region13: #{model_forward.3} parent=1 // pred_fallthru
      _
    %v15 = vld [vmem:[%s0] sm:$0xff]
    %v16 = vld [vmem:[%s0 + $0x8] sm:$0xff]
    %v17 = vld [vmem:[%s0 + $0x10] sm:$0xff]
    %v18 = vld [vmem:[%s0 + $0x18] sm:$0xff]
    %v19 = vld [vmem:[%s0 + $0x20] sm:$0xff]
    %v20 = vld [vmem:[%s0 + $0x28] sm:$0xff]
    %v21 = vld [vmem:[%s0 + $0x30] sm:$0xff]
    %v22 = vld [vmem:[%s0 + $0x38] sm:$0xff]
    %v23 = vld [vmem:[%s0 + $0x40] sm:$0xff]
    %v24 = vld [vmem:[%s0 + $0x48] sm:$0xff]
    %v25 = vld [vmem:[%s0 + $0x50] sm:$0xff]
    %v26 = vld [vmem:[%s0 + $0x58] sm:$0xff]
    %v27 = vld [vmem:[%s0 + $0x60] sm:$0xff]
    %v28 = vld [vmem:[%s0 + $0x68] sm:$0xff]
    %v29 = vld [vmem:[%s0 + $0x70] sm:$0xff]
    %v30 = vld [vmem:[%s0 + $0x78] sm:$0xff]
    %v31 = vld [vmem:[%s0 + $0x80] sm:$0xff]
    %v32 = vld [vmem:[%s0 + $0x88] sm:$0xff]
    %v33 = vld [vmem:[%s0 + $0x90] sm:$0xff]
    %v34 = vld [vmem:[%s0 + $0x98] sm:$0xff]
    %v35 = vld [vmem:[%s0 + $0xa0] sm:$0xff]
    %v36 = vld [vmem:[%s0 + $0xa8] sm:$0xff]
    %v37 = vld [vmem:[%s0 + $0xb0] sm:$0xff]
    %v38 = vld [vmem:[%s0 + $0xb8] sm:$0xff]
    %v39 = vld [vmem:[%s0 + $0xc0] sm:$0xff]
    %v40 = vld [vmem:[%s0 + $0xc8] sm:$0xff]
    %v41 = vld [vmem:[%s0 + $0xd0] sm:$0xff]
    %v42 = vld [vmem:[%s0 + $0xd8] sm:$0xff]
    %v43 = vld [vmem:[%s0 + $0xe0] sm:$0xff]
    %v44 = vld [vmem:[%s0 + $0xe8] sm:$0xff]
    %v45 = vld [vmem:[%s0 + $0xf0] sm:$0xff]
    %v46 = vld [vmem:[%s0 + $0xf8] sm:$0xff]
    %v47 = vld [vmem:[%s1] sm:$0xff]
    %v48 = vld [vmem:[%s1 + $0x8] sm:$0xff]
    %v49 = vld [vmem:[%s1 + $0x10] sm:$0xff]
    %v50 = vld [vmem:[%s1 + $0x18] sm:$0xff]
    %v51 = vld [vmem:[%s1 + $0x20] sm:$0xff]
    %v52 = vld [vmem:[%s1 + $0x28] sm:$0xff]
    %v53 = vld [vmem:[%s1 + $0x30] sm:$0xff]
    %v54 = vld [vmem:[%s1 + $0x38] sm:$0xff]
    %v55 = vld [vmem:[%s1 + $0x40] sm:$0xff]
    %v56 = vld [vmem:[%s1 + $0x48] sm:$0xff]
    %v57 = vld [vmem:[%s1 + $0x50] sm:$0xff]
    %v58 = vld [vmem:[%s1 + $0x58] sm:$0xff]
    %v59 = vld [vmem:[%s1 + $0x60] sm:$0xff]
    %v60 = vld [vmem:[%s1 + $0x68] sm:$0xff]
    %v61 = vld [vmem:[%s1 + $0x70] sm:$0xff]
    %v62 = vld [vmem:[%s1 + $0x78] sm:$0xff]
    %v63 = vld [vmem:[%s1 + $0x80] sm:$0xff]
    %v64 = vld [vmem:[%s1 + $0x88] sm:$0xff]
    %v65 = vld [vmem:[%s1 + $0x90] sm:$0xff]
    %v66 = vld [vmem:[%s1 + $0x98] sm:$0xff]
    %v67 = vld [vmem:[%s1 + $0xa0] sm:$0xff]
    %v68 = vld [vmem:[%s1 + $0xa8] sm:$0xff]
    %v69 = vld [vmem:[%s1 + $0xb0] sm:$0xff]
    %v70 = vld [vmem:[%s1 + $0xb8] sm:$0xff]
    %v71 = vld [vmem:[%s1 + $0xc0] sm:$0xff]
    %v72 = vld [vmem:[%s1 + $0xc8] sm:$0xff]
    %v73 = vld [vmem:[%s1 + $0xd0] sm:$0xff]
    %v74 = vld [vmem:[%s1 + $0xd8] sm:$0xff]
    %v75 = vld [vmem:[%s1 + $0xe0] sm:$0xff]
    %v76 = vld [vmem:[%s1 + $0xe8] sm:$0xff]
    %v77 = vld [vmem:[%s1 + $0xf0] sm:$0xff]
    %v78 = vld [vmem:[%s1 + $0xf8] sm:$0xff]
    %vm79 = vcmask 130048
    %v81 = vsel %vm79, %v15, 0
    %v84 = vsel %vm79, %v16, 0
    %v87 = vsel %vm79, %v47, 0
    %v90 = vsel %vm79, %v48, 0
    %92 = vmatprep.subr.mxu0 0.0
    %93 = vmatpush1.xpose.msra.mxu0 0.0
    %94 = vmatprep.subr.mxu0 0.0
    %95 = vmatpush1.xpose.msra.mxu0 0.0
    %96 = vmatprep.subr.mxu0 0.0
    %97 = vmatpush1.xpose.msra.mxu0 0.0
    %98 = vmatprep.subr.mxu0 0.0
    %99 = vmatpush1.xpose.msra.mxu0 0.0
    %100 = vmatprep.subr.mxu0 0.0
    %101 = vmatpush1.xpose.msra.mxu0 0.0
    %102 = vmatprep.subr.mxu0 0.0
    %103 = vmatpush1.xpose.msra.mxu0 0.0
    %104 = vmatprep.subr.mxu0 0.0
    %105 = vmatpush1.xpose.msra.mxu0 0.0
    %106 = vmatprep.subr.mxu0 0.0
    %107 = vmatpush1.xpose.msra.mxu0 0.0
    %108 = vmatprep.subr.mxu0 0.0
    %109 = vmatpush1.xpose.msra.mxu0 0.0
    %110 = vmatprep.subr.mxu0 0.0
    %111 = vmatpush1.xpose.msra.mxu0 0.0
    %112 = vmatprep.subr.mxu0 0.0
    %113 = vmatpush1.xpose.msra.mxu0 0.0
    %114 = vmatprep.subr.mxu0 0.0
    %115 = vmatpush1.xpose.msra.mxu0 0.0
    %116 = vmatprep.subr.mxu0 0.0
    %117 = vmatpush1.xpose.msra.mxu0 0.0
    %118 = vmatprep.subr.mxu0 0.0
    %119 = vmatpush1.xpose.msra.mxu0 0.0
    %120 = vmatprep.subr.mxu0 0.0
    %121 = vmatpush1.xpose.msra.mxu0 %v90
    %122 = vmatprep.subr.mxu0 0.0
    %123 = vmatpush1.xpose.msra.mxu0 %v87
    %124 = vmatprep.subr.mxu0 0.0
    %125 = vmatpush2.xpose.msra.mxu0 0.0
    %126 = vmatprep.subr.mxu0 0.0
    %127 = vmatpush2.xpose.msra.mxu0 0.0
    %128 = vmatprep.subr.mxu0 0.0
    %129 = vmatpush2.xpose.msra.mxu0 0.0
    %130 = vmatprep.subr.mxu0 0.0
    %131 = vmatpush2.xpose.msra.mxu0 0.0
    %132 = vmatprep.subr.mxu0 0.0
    %133 = vmatpush2.xpose.msra.mxu0 0.0
    %134 = vmatprep.subr.mxu0 0.0
    %135 = vmatpush2.xpose.msra.mxu0 0.0
    %136 = vmatprep.subr.mxu0 0.0
    %137 = vmatpush2.xpose.msra.mxu0 0.0
    %138 = vmatprep.subr.mxu0 0.0
    %139 = vmatpush2.xpose.msra.mxu0 0.0
    %140 = vmatprep.subr.mxu0 0.0
    %141 = vmatpush2.xpose.msra.mxu0 0.0
    %142 = vmatprep.subr.mxu0 0.0
    %143 = vmatpush2.xpose.msra.mxu0 0.0
    %144 = vmatprep.subr.mxu0 0.0
    %145 = vmatpush2.xpose.msra.mxu0 0.0
    %146 = vmatprep.subr.mxu0 0.0
    %147 = vmatpush2.xpose.msra.mxu0 0.0
    %148 = vmatprep.subr.mxu0 0.0
    %149 = vmatpush2.xpose.msra.mxu0 0.0
    %150 = vmatprep.subr.mxu0 0.0
    %151 = vmatpush2.xpose.msra.mxu0 0.0
    %152 = vmatprep.subr.mxu0 0.0
    %153 = vmatpush2.xpose.msra.mxu0 0.0
    %154 = vmatprep.subr.mxu0 0.0
    %155 = vmatpush2.xpose.msra.mxu0 0.0
    %156 = vmatprep.mubr.f32.mxu0 0.0
    %157 = vmatmul.mubr.f32.gmra.mxu0 %v81
    %v158 = vpop.f32.mrf.mxu0
    %v159 = vadd.f32 0.0, %v158
    %v160 = vpop.f32.mrf.mxu0
    %161 = vmatprep.mubr.f32.mxu0 0.0
    %162 = vmatmul.mubr.f32.gmra.mxu0 %v84
    %v163 = vpop.f32.mrf.mxu0
    %v164 = vadd.f32 0.0, %v163
    %v165 = vpop.f32.mrf.mxu0
    %166 = vdwg.mxu0
    %v168 = vsel %vm79, %v17, 0
    %v171 = vsel %vm79, %v18, 0
    %v174 = vsel %vm79, %v49, 0
    %v177 = vsel %vm79, %v50, 0
    %179 = vmatprep.subr.mxu0 0.0
    %180 = vmatpush1.xpose.msra.mxu0 0.0
    %181 = vmatprep.subr.mxu0 0.0
    %182 = vmatpush1.xpose.msra.mxu0 0.0
    %183 = vmatprep.subr.mxu0 0.0
    %184 = vmatpush1.xpose.msra.mxu0 0.0
    %185 = vmatprep.subr.mxu0 0.0
    %186 = vmatpush1.xpose.msra.mxu0 0.0
    %187 = vmatprep.subr.mxu0 0.0
    %188 = vmatpush1.xpose.msra.mxu0 0.0
    %189 = vmatprep.subr.mxu0 0.0
    %190 = vmatpush1.xpose.msra.mxu0 0.0
    %191 = vmatprep.subr.mxu0 0.0
    %192 = vmatpush1.xpose.msra.mxu0 0.0
    %193 = vmatprep.subr.mxu0 0.0
    %194 = vmatpush1.xpose.msra.mxu0 0.0
    %195 = vmatprep.subr.mxu0 0.0
    %196 = vmatpush1.xpose.msra.mxu0 0.0
    %197 = vmatprep.subr.mxu0 0.0
    %198 = vmatpush1.xpose.msra.mxu0 0.0
    %199 = vmatprep.subr.mxu0 0.0
    %200 = vmatpush1.xpose.msra.mxu0 0.0
    %201 = vmatprep.subr.mxu0 0.0
    %202 = vmatpush1.xpose.msra.mxu0 0.0
    %203 = vmatprep.subr.mxu0 0.0
    %204 = vmatpush1.xpose.msra.mxu0 0.0
    %205 = vmatprep.subr.mxu0 0.0
    %206 = vmatpush1.xpose.msra.mxu0 0.0
    %207 = vmatprep.subr.mxu0 0.0
    %208 = vmatpush1.xpose.msra.mxu0 %v177
    %209 = vmatprep.subr.mxu0 0.0
    %210 = vmatpush1.xpose.msra.mxu0 %v174
    %211 = vmatprep.subr.mxu0 0.0
    %212 = vmatpush2.xpose.msra.mxu0 0.0
    %213 = vmatprep.subr.mxu0 0.0
    %214 = vmatpush2.xpose.msra.mxu0 0.0
    %215 = vmatprep.subr.mxu0 0.0
    %216 = vmatpush2.xpose.msra.mxu0 0.0
    %217 = vmatprep.subr.mxu0 0.0
    %218 = vmatpush2.xpose.msra.mxu0 0.0
    %219 = vmatprep.subr.mxu0 0.0
    %220 = vmatpush2.xpose.msra.mxu0 0.0
    %221 = vmatprep.subr.mxu0 0.0
    %222 = vmatpush2.xpose.msra.mxu0 0.0
    %223 = vmatprep.subr.mxu0 0.0
    %224 = vmatpush2.xpose.msra.mxu0 0.0
    %225 = vmatprep.subr.mxu0 0.0
    %226 = vmatpush2.xpose.msra.mxu0 0.0
    %227 = vmatprep.subr.mxu0 0.0
    %228 = vmatpush2.xpose.msra.mxu0 0.0
    %229 = vmatprep.subr.mxu0 0.0
    %230 = vmatpush2.xpose.msra.mxu0 0.0
    %231 = vmatprep.subr.mxu0 0.0
    %232 = vmatpush2.xpose.msra.mxu0 0.0
    %233 = vmatprep.subr.mxu0 0.0
    %234 = vmatpush2.xpose.msra.mxu0 0.0
    %235 = vmatprep.subr.mxu0 0.0
    %236 = vmatpush2.xpose.msra.mxu0 0.0
    %237 = vmatprep.subr.mxu0 0.0
    %238 = vmatpush2.xpose.msra.mxu0 0.0
    %239 = vmatprep.subr.mxu0 0.0
    %240 = vmatpush2.xpose.msra.mxu0 0.0
    %241 = vmatprep.subr.mxu0 0.0
    %242 = vmatpush2.xpose.msra.mxu0 0.0
    %243 = vmatprep.mubr.f32.mxu0 0.0
    %244 = vmatmul.mubr.f32.gmra.mxu0 %v168
    %v245 = vpop.f32.mrf.mxu0
    %v246 = vadd.f32 0.0, %v245
    %v247 = vpop.f32.mrf.mxu0
    %248 = vmatprep.mubr.f32.mxu0 0.0
    %249 = vmatmul.mubr.f32.gmra.mxu0 %v171
    %v250 = vpop.f32.mrf.mxu0
    %v251 = vadd.f32 0.0, %v250
    %v252 = vpop.f32.mrf.mxu0
    %253 = vdwg.mxu0
    %v255 = vsel %vm79, %v19, 0
    %v258 = vsel %vm79, %v20, 0
    %v261 = vsel %vm79, %v51, 0
    %v264 = vsel %vm79, %v52, 0
    %266 = vmatprep.subr.mxu0 0.0
    %267 = vmatpush1.xpose.msra.mxu0 0.0
    %268 = vmatprep.subr.mxu0 0.0
    %269 = vmatpush1.xpose.msra.mxu0 0.0
    %270 = vmatprep.subr.mxu0 0.0
    %271 = vmatpush1.xpose.msra.mxu0 0.0
    %272 = vmatprep.subr.mxu0 0.0
    %273 = vmatpush1.xpose.msra.mxu0 0.0
    %274 = vmatprep.subr.mxu0 0.0
    %275 = vmatpush1.xpose.msra.mxu0 0.0
    %276 = vmatprep.subr.mxu0 0.0
    %277 = vmatpush1.xpose.msra.mxu0 0.0
    %278 = vmatprep.subr.mxu0 0.0
    %279 = vmatpush1.xpose.msra.mxu0 0.0
    %280 = vmatprep.subr.mxu0 0.0
    %281 = vmatpush1.xpose.msra.mxu0 0.0
    %282 = vmatprep.subr.mxu0 0.0
    %283 = vmatpush1.xpose.msra.mxu0 0.0
    %284 = vmatprep.subr.mxu0 0.0
    %285 = vmatpush1.xpose.msra.mxu0 0.0
    %286 = vmatprep.subr.mxu0 0.0
    %287 = vmatpush1.xpose.msra.mxu0 0.0
    %288 = vmatprep.subr.mxu0 0.0
    %289 = vmatpush1.xpose.msra.mxu0 0.0
    %290 = vmatprep.subr.mxu0 0.0
    %291 = vmatpush1.xpose.msra.mxu0 0.0
    %292 = vmatprep.subr.mxu0 0.0
    %293 = vmatpush1.xpose.msra.mxu0 0.0
    %294 = vmatprep.subr.mxu0 0.0
    %295 = vmatpush1.xpose.msra.mxu0 %v264
    %296 = vmatprep.subr.mxu0 0.0
    %297 = vmatpush1.xpose.msra.mxu0 %v261
    %298 = vmatprep.subr.mxu0 0.0
    %299 = vmatpush2.xpose.msra.mxu0 0.0
    %300 = vmatprep.subr.mxu0 0.0
    %301 = vmatpush2.xpose.msra.mxu0 0.0
    %302 = vmatprep.subr.mxu0 0.0
    %303 = vmatpush2.xpose.msra.mxu0 0.0
    %304 = vmatprep.subr.mxu0 0.0
    %305 = vmatpush2.xpose.msra.mxu0 0.0
    %306 = vmatprep.subr.mxu0 0.0
    %307 = vmatpush2.xpose.msra.mxu0 0.0
    %308 = vmatprep.subr.mxu0 0.0
    %309 = vmatpush2.xpose.msra.mxu0 0.0
    %310 = vmatprep.subr.mxu0 0.0
    %311 = vmatpush2.xpose.msra.mxu0 0.0
    %312 = vmatprep.subr.mxu0 0.0
    %313 = vmatpush2.xpose.msra.mxu0 0.0
    %314 = vmatprep.subr.mxu0 0.0
    %315 = vmatpush2.xpose.msra.mxu0 0.0
    %316 = vmatprep.subr.mxu0 0.0
    %317 = vmatpush2.xpose.msra.mxu0 0.0
    %318 = vmatprep.subr.mxu0 0.0
    %319 = vmatpush2.xpose.msra.mxu0 0.0
    %320 = vmatprep.subr.mxu0 0.0
    %321 = vmatpush2.xpose.msra.mxu0 0.0
    %322 = vmatprep.subr.mxu0 0.0
    %323 = vmatpush2.xpose.msra.mxu0 0.0
    %324 = vmatprep.subr.mxu0 0.0
    %325 = vmatpush2.xpose.msra.mxu0 0.0
    %326 = vmatprep.subr.mxu0 0.0
    %327 = vmatpush2.xpose.msra.mxu0 0.0
    %328 = vmatprep.subr.mxu0 0.0
    %329 = vmatpush2.xpose.msra.mxu0 0.0
    %330 = vmatprep.mubr.f32.mxu0 0.0
    %331 = vmatmul.mubr.f32.gmra.mxu0 %v255
    %v332 = vpop.f32.mrf.mxu0
    %v333 = vadd.f32 0.0, %v332
    %v334 = vpop.f32.mrf.mxu0
    %335 = vmatprep.mubr.f32.mxu0 0.0
    %336 = vmatmul.mubr.f32.gmra.mxu0 %v258
    %v337 = vpop.f32.mrf.mxu0
    %v338 = vadd.f32 0.0, %v337
    %v339 = vpop.f32.mrf.mxu0
    %340 = vdwg.mxu0
    %v342 = vsel %vm79, %v21, 0
    %v345 = vsel %vm79, %v22, 0
    %v348 = vsel %vm79, %v53, 0
    %v351 = vsel %vm79, %v54, 0
    %353 = vmatprep.subr.mxu0 0.0
    %354 = vmatpush1.xpose.msra.mxu0 0.0
    %355 = vmatprep.subr.mxu0 0.0
    %356 = vmatpush1.xpose.msra.mxu0 0.0
    %357 = vmatprep.subr.mxu0 0.0
    %358 = vmatpush1.xpose.msra.mxu0 0.0
    %359 = vmatprep.subr.mxu0 0.0
    %360 = vmatpush1.xpose.msra.mxu0 0.0
    %361 = vmatprep.subr.mxu0 0.0
    %362 = vmatpush1.xpose.msra.mxu0 0.0
    %363 = vmatprep.subr.mxu0 0.0
    %364 = vmatpush1.xpose.msra.mxu0 0.0
    %365 = vmatprep.subr.mxu0 0.0
    %366 = vmatpush1.xpose.msra.mxu0 0.0
    %367 = vmatprep.subr.mxu0 0.0
    %368 = vmatpush1.xpose.msra.mxu0 0.0
    %369 = vmatprep.subr.mxu0 0.0
    %370 = vmatpush1.xpose.msra.mxu0 0.0
    %371 = vmatprep.subr.mxu0 0.0
    %372 = vmatpush1.xpose.msra.mxu0 0.0
    %373 = vmatprep.subr.mxu0 0.0
    %374 = vmatpush1.xpose.msra.mxu0 0.0
    %375 = vmatprep.subr.mxu0 0.0
    %376 = vmatpush1.xpose.msra.mxu0 0.0
    %377 = vmatprep.subr.mxu0 0.0
    %378 = vmatpush1.xpose.msra.mxu0 0.0
    %379 = vmatprep.subr.mxu0 0.0
    %380 = vmatpush1.xpose.msra.mxu0 0.0
    %381 = vmatprep.subr.mxu0 0.0
    %382 = vmatpush1.xpose.msra.mxu0 %v351
    %383 = vmatprep.subr.mxu0 0.0
    %384 = vmatpush1.xpose.msra.mxu0 %v348
    %385 = vmatprep.subr.mxu0 0.0
    %386 = vmatpush2.xpose.msra.mxu0 0.0
    %387 = vmatprep.subr.mxu0 0.0
    %388 = vmatpush2.xpose.msra.mxu0 0.0
    %389 = vmatprep.subr.mxu0 0.0
    %390 = vmatpush2.xpose.msra.mxu0 0.0
    %391 = vmatprep.subr.mxu0 0.0
    %392 = vmatpush2.xpose.msra.mxu0 0.0
    %393 = vmatprep.subr.mxu0 0.0
    %394 = vmatpush2.xpose.msra.mxu0 0.0
    %395 = vmatprep.subr.mxu0 0.0
    %396 = vmatpush2.xpose.msra.mxu0 0.0
    %397 = vmatprep.subr.mxu0 0.0
    %398 = vmatpush2.xpose.msra.mxu0 0.0
    %399 = vmatprep.subr.mxu0 0.0
    %400 = vmatpush2.xpose.msra.mxu0 0.0
    %401 = vmatprep.subr.mxu0 0.0
    %402 = vmatpush2.xpose.msra.mxu0 0.0
    %403 = vmatprep.subr.mxu0 0.0
    %404 = vmatpush2.xpose.msra.mxu0 0.0
    %405 = vmatprep.subr.mxu0 0.0
    %406 = vmatpush2.xpose.msra.mxu0 0.0
    %407 = vmatprep.subr.mxu0 0.0
    %408 = vmatpush2.xpose.msra.mxu0 0.0
    %409 = vmatprep.subr.mxu0 0.0
    %410 = vmatpush2.xpose.msra.mxu0 0.0
    %411 = vmatprep.subr.mxu0 0.0
    %412 = vmatpush2.xpose.msra.mxu0 0.0
    %413 = vmatprep.subr.mxu0 0.0
    %414 = vmatpush2.xpose.msra.mxu0 0.0
    %415 = vmatprep.subr.mxu0 0.0
    %416 = vmatpush2.xpose.msra.mxu0 0.0
    %417 = vmatprep.mubr.f32.mxu0 0.0
    %418 = vmatmul.mubr.f32.gmra.mxu0 %v342
    %v419 = vpop.f32.mrf.mxu0
    %v420 = vadd.f32 0.0, %v419
    %v421 = vpop.f32.mrf.mxu0
    %422 = vmatprep.mubr.f32.mxu0 0.0
    %423 = vmatmul.mubr.f32.gmra.mxu0 %v345
    %v424 = vpop.f32.mrf.mxu0
    %v425 = vadd.f32 0.0, %v424
    %v426 = vpop.f32.mrf.mxu0
    %427 = vdwg.mxu0
    %v429 = vsel %vm79, %v23, 0
    %v432 = vsel %vm79, %v24, 0
    %v435 = vsel %vm79, %v55, 0
    %v438 = vsel %vm79, %v56, 0
    %440 = vmatprep.subr.mxu0 0.0
    %441 = vmatpush1.xpose.msra.mxu0 0.0
    %442 = vmatprep.subr.mxu0 0.0
    %443 = vmatpush1.xpose.msra.mxu0 0.0
    %444 = vmatprep.subr.mxu0 0.0
    %445 = vmatpush1.xpose.msra.mxu0 0.0
    %446 = vmatprep.subr.mxu0 0.0
    %447 = vmatpush1.xpose.msra.mxu0 0.0
    %448 = vmatprep.subr.mxu0 0.0
    %449 = vmatpush1.xpose.msra.mxu0 0.0
    %450 = vmatprep.subr.mxu0 0.0
    %451 = vmatpush1.xpose.msra.mxu0 0.0
    %452 = vmatprep.subr.mxu0 0.0
    %453 = vmatpush1.xpose.msra.mxu0 0.0
    %454 = vmatprep.subr.mxu0 0.0
    %455 = vmatpush1.xpose.msra.mxu0 0.0
    %456 = vmatprep.subr.mxu0 0.0
    %457 = vmatpush1.xpose.msra.mxu0 0.0
    %458 = vmatprep.subr.mxu0 0.0
    %459 = vmatpush1.xpose.msra.mxu0 0.0
    %460 = vmatprep.subr.mxu0 0.0
    %461 = vmatpush1.xpose.msra.mxu0 0.0
    %462 = vmatprep.subr.mxu0 0.0
    %463 = vmatpush1.xpose.msra.mxu0 0.0
    %464 = vmatprep.subr.mxu0 0.0
    %465 = vmatpush1.xpose.msra.mxu0 0.0
    %466 = vmatprep.subr.mxu0 0.0
    %467 = vmatpush1.xpose.msra.mxu0 0.0
    %468 = vmatprep.subr.mxu0 0.0
    %469 = vmatpush1.xpose.msra.mxu0 %v438
    %470 = vmatprep.subr.mxu0 0.0
    %471 = vmatpush1.xpose.msra.mxu0 %v435
    %472 = vmatprep.subr.mxu0 0.0
    %473 = vmatpush2.xpose.msra.mxu0 0.0
    %474 = vmatprep.subr.mxu0 0.0
    %475 = vmatpush2.xpose.msra.mxu0 0.0
    %476 = vmatprep.subr.mxu0 0.0
    %477 = vmatpush2.xpose.msra.mxu0 0.0
    %478 = vmatprep.subr.mxu0 0.0
    %479 = vmatpush2.xpose.msra.mxu0 0.0
    %480 = vmatprep.subr.mxu0 0.0
    %481 = vmatpush2.xpose.msra.mxu0 0.0
    %482 = vmatprep.subr.mxu0 0.0
    %483 = vmatpush2.xpose.msra.mxu0 0.0
    %484 = vmatprep.subr.mxu0 0.0
    %485 = vmatpush2.xpose.msra.mxu0 0.0
    %486 = vmatprep.subr.mxu0 0.0
    %487 = vmatpush2.xpose.msra.mxu0 0.0
    %488 = vmatprep.subr.mxu0 0.0
    %489 = vmatpush2.xpose.msra.mxu0 0.0
    %490 = vmatprep.subr.mxu0 0.0
    %491 = vmatpush2.xpose.msra.mxu0 0.0
    %492 = vmatprep.subr.mxu0 0.0
    %493 = vmatpush2.xpose.msra.mxu0 0.0
    %494 = vmatprep.subr.mxu0 0.0
    %495 = vmatpush2.xpose.msra.mxu0 0.0
    %496 = vmatprep.subr.mxu0 0.0
    %497 = vmatpush2.xpose.msra.mxu0 0.0
    %498 = vmatprep.subr.mxu0 0.0
    %499 = vmatpush2.xpose.msra.mxu0 0.0
    %500 = vmatprep.subr.mxu0 0.0
    %501 = vmatpush2.xpose.msra.mxu0 0.0
    %502 = vmatprep.subr.mxu0 0.0
    %503 = vmatpush2.xpose.msra.mxu0 0.0
    %504 = vmatprep.mubr.f32.mxu0 0.0
    %505 = vmatmul.mubr.f32.gmra.mxu0 %v429
    %v506 = vpop.f32.mrf.mxu0
    %v507 = vadd.f32 0.0, %v506
    %v508 = vpop.f32.mrf.mxu0
    %509 = vmatprep.mubr.f32.mxu0 0.0
    %510 = vmatmul.mubr.f32.gmra.mxu0 %v432
    %v511 = vpop.f32.mrf.mxu0
    %v512 = vadd.f32 0.0, %v511
    %v513 = vpop.f32.mrf.mxu0
    %514 = vdwg.mxu0
    %v516 = vsel %vm79, %v25, 0
    %v519 = vsel %vm79, %v26, 0
    %v522 = vsel %vm79, %v57, 0
    %v525 = vsel %vm79, %v58, 0
    %527 = vmatprep.subr.mxu0 0.0
    %528 = vmatpush1.xpose.msra.mxu0 0.0
    %529 = vmatprep.subr.mxu0 0.0
    %530 = vmatpush1.xpose.msra.mxu0 0.0
    %531 = vmatprep.subr.mxu0 0.0
    %532 = vmatpush1.xpose.msra.mxu0 0.0
    %533 = vmatprep.subr.mxu0 0.0
    %534 = vmatpush1.xpose.msra.mxu0 0.0
    %535 = vmatprep.subr.mxu0 0.0
    %536 = vmatpush1.xpose.msra.mxu0 0.0
    %537 = vmatprep.subr.mxu0 0.0
    %538 = vmatpush1.xpose.msra.mxu0 0.0
    %539 = vmatprep.subr.mxu0 0.0
    %540 = vmatpush1.xpose.msra.mxu0 0.0
    %541 = vmatprep.subr.mxu0 0.0
    %542 = vmatpush1.xpose.msra.mxu0 0.0
    %543 = vmatprep.subr.mxu0 0.0
    %544 = vmatpush1.xpose.msra.mxu0 0.0
    %545 = vmatprep.subr.mxu0 0.0
    %546 = vmatpush1.xpose.msra.mxu0 0.0
    %547 = vmatprep.subr.mxu0 0.0
    %548 = vmatpush1.xpose.msra.mxu0 0.0
    %549 = vmatprep.subr.mxu0 0.0
    %550 = vmatpush1.xpose.msra.mxu0 0.0
    %551 = vmatprep.subr.mxu0 0.0
    %552 = vmatpush1.xpose.msra.mxu0 0.0
    %553 = vmatprep.subr.mxu0 0.0
    %554 = vmatpush1.xpose.msra.mxu0 0.0
    %555 = vmatprep.subr.mxu0 0.0
    %556 = vmatpush1.xpose.msra.mxu0 %v525
    %557 = vmatprep.subr.mxu0 0.0
    %558 = vmatpush1.xpose.msra.mxu0 %v522
    %559 = vmatprep.subr.mxu0 0.0
    %560 = vmatpush2.xpose.msra.mxu0 0.0
    %561 = vmatprep.subr.mxu0 0.0
    %562 = vmatpush2.xpose.msra.mxu0 0.0
    %563 = vmatprep.subr.mxu0 0.0
    %564 = vmatpush2.xpose.msra.mxu0 0.0
    %565 = vmatprep.subr.mxu0 0.0
    %566 = vmatpush2.xpose.msra.mxu0 0.0
    %567 = vmatprep.subr.mxu0 0.0
    %568 = vmatpush2.xpose.msra.mxu0 0.0
    %569 = vmatprep.subr.mxu0 0.0
    %570 = vmatpush2.xpose.msra.mxu0 0.0
    %571 = vmatprep.subr.mxu0 0.0
    %572 = vmatpush2.xpose.msra.mxu0 0.0
    %573 = vmatprep.subr.mxu0 0.0
    %574 = vmatpush2.xpose.msra.mxu0 0.0
    %575 = vmatprep.subr.mxu0 0.0
    %576 = vmatpush2.xpose.msra.mxu0 0.0
    %577 = vmatprep.subr.mxu0 0.0
    %578 = vmatpush2.xpose.msra.mxu0 0.0
    %579 = vmatprep.subr.mxu0 0.0
    %580 = vmatpush2.xpose.msra.mxu0 0.0
    %581 = vmatprep.subr.mxu0 0.0
    %582 = vmatpush2.xpose.msra.mxu0 0.0
    %583 = vmatprep.subr.mxu0 0.0
    %584 = vmatpush2.xpose.msra.mxu0 0.0
    %585 = vmatprep.subr.mxu0 0.0
    %586 = vmatpush2.xpose.msra.mxu0 0.0
    %587 = vmatprep.subr.mxu0 0.0
    %588 = vmatpush2.xpose.msra.mxu0 0.0
    %589 = vmatprep.subr.mxu0 0.0
    %590 = vmatpush2.xpose.msra.mxu0 0.0
    %591 = vmatprep.mubr.f32.mxu0 0.0
    %592 = vmatmul.mubr.f32.gmra.mxu0 %v516
    %v593 = vpop.f32.mrf.mxu0
    %v594 = vadd.f32 0.0, %v593
    %v595 = vpop.f32.mrf.mxu0
    %596 = vmatprep.mubr.f32.mxu0 0.0
    %597 = vmatmul.mubr.f32.gmra.mxu0 %v519
    %v598 = vpop.f32.mrf.mxu0
    %v599 = vadd.f32 0.0, %v598
    %v600 = vpop.f32.mrf.mxu0
    %601 = vdwg.mxu0
    %v603 = vsel %vm79, %v27, 0
    %v606 = vsel %vm79, %v28, 0
    %v609 = vsel %vm79, %v59, 0
    %v612 = vsel %vm79, %v60, 0
    %614 = vmatprep.subr.mxu0 0.0
    %615 = vmatpush1.xpose.msra.mxu0 0.0
    %616 = vmatprep.subr.mxu0 0.0
    %617 = vmatpush1.xpose.msra.mxu0 0.0
    %618 = vmatprep.subr.mxu0 0.0
    %619 = vmatpush1.xpose.msra.mxu0 0.0
    %620 = vmatprep.subr.mxu0 0.0
    %621 = vmatpush1.xpose.msra.mxu0 0.0
    %622 = vmatprep.subr.mxu0 0.0
    %623 = vmatpush1.xpose.msra.mxu0 0.0
    %624 = vmatprep.subr.mxu0 0.0
    %625 = vmatpush1.xpose.msra.mxu0 0.0
    %626 = vmatprep.subr.mxu0 0.0
    %627 = vmatpush1.xpose.msra.mxu0 0.0
    %628 = vmatprep.subr.mxu0 0.0
    %629 = vmatpush1.xpose.msra.mxu0 0.0
    %630 = vmatprep.subr.mxu0 0.0
    %631 = vmatpush1.xpose.msra.mxu0 0.0
    %632 = vmatprep.subr.mxu0 0.0
    %633 = vmatpush1.xpose.msra.mxu0 0.0
    %634 = vmatprep.subr.mxu0 0.0
    %635 = vmatpush1.xpose.msra.mxu0 0.0
    %636 = vmatprep.subr.mxu0 0.0
    %637 = vmatpush1.xpose.msra.mxu0 0.0
    %638 = vmatprep.subr.mxu0 0.0
    %639 = vmatpush1.xpose.msra.mxu0 0.0
    %640 = vmatprep.subr.mxu0 0.0
    %641 = vmatpush1.xpose.msra.mxu0 0.0
    %642 = vmatprep.subr.mxu0 0.0
    %643 = vmatpush1.xpose.msra.mxu0 %v612
    %644 = vmatprep.subr.mxu0 0.0
    %645 = vmatpush1.xpose.msra.mxu0 %v609
    %646 = vmatprep.subr.mxu0 0.0
    %647 = vmatpush2.xpose.msra.mxu0 0.0
    %648 = vmatprep.subr.mxu0 0.0
    %649 = vmatpush2.xpose.msra.mxu0 0.0
    %650 = vmatprep.subr.mxu0 0.0
    %651 = vmatpush2.xpose.msra.mxu0 0.0
    %652 = vmatprep.subr.mxu0 0.0
    %653 = vmatpush2.xpose.msra.mxu0 0.0
    %654 = vmatprep.subr.mxu0 0.0
    %655 = vmatpush2.xpose.msra.mxu0 0.0
    %656 = vmatprep.subr.mxu0 0.0
    %657 = vmatpush2.xpose.msra.mxu0 0.0
    %658 = vmatprep.subr.mxu0 0.0
    %659 = vmatpush2.xpose.msra.mxu0 0.0
    %660 = vmatprep.subr.mxu0 0.0
    %661 = vmatpush2.xpose.msra.mxu0 0.0
    %662 = vmatprep.subr.mxu0 0.0
    %663 = vmatpush2.xpose.msra.mxu0 0.0
    %664 = vmatprep.subr.mxu0 0.0
    %665 = vmatpush2.xpose.msra.mxu0 0.0
    %666 = vmatprep.subr.mxu0 0.0
    %667 = vmatpush2.xpose.msra.mxu0 0.0
    %668 = vmatprep.subr.mxu0 0.0
    %669 = vmatpush2.xpose.msra.mxu0 0.0
    %670 = vmatprep.subr.mxu0 0.0
    %671 = vmatpush2.xpose.msra.mxu0 0.0
    %672 = vmatprep.subr.mxu0 0.0
    %673 = vmatpush2.xpose.msra.mxu0 0.0
    %674 = vmatprep.subr.mxu0 0.0
    %675 = vmatpush2.xpose.msra.mxu0 0.0
    %676 = vmatprep.subr.mxu0 0.0
    %677 = vmatpush2.xpose.msra.mxu0 0.0
    %678 = vmatprep.mubr.f32.mxu0 0.0
    %679 = vmatmul.mubr.f32.gmra.mxu0 %v603
    %v680 = vpop.f32.mrf.mxu0
    %v681 = vadd.f32 0.0, %v680
    %v682 = vpop.f32.mrf.mxu0
    %683 = vmatprep.mubr.f32.mxu0 0.0
    %684 = vmatmul.mubr.f32.gmra.mxu0 %v606
    %v685 = vpop.f32.mrf.mxu0
    %v686 = vadd.f32 0.0, %v685
    %v687 = vpop.f32.mrf.mxu0
    %688 = vdwg.mxu0
    %v690 = vsel %vm79, %v29, 0
    %v693 = vsel %vm79, %v30, 0
    %v696 = vsel %vm79, %v61, 0
    %v699 = vsel %vm79, %v62, 0
    %701 = vmatprep.subr.mxu0 0.0
    %702 = vmatpush1.xpose.msra.mxu0 0.0
    %703 = vmatprep.subr.mxu0 0.0
    %704 = vmatpush1.xpose.msra.mxu0 0.0
    %705 = vmatprep.subr.mxu0 0.0
    %706 = vmatpush1.xpose.msra.mxu0 0.0
    %707 = vmatprep.subr.mxu0 0.0
    %708 = vmatpush1.xpose.msra.mxu0 0.0
    %709 = vmatprep.subr.mxu0 0.0
    %710 = vmatpush1.xpose.msra.mxu0 0.0
    %711 = vmatprep.subr.mxu0 0.0
    %712 = vmatpush1.xpose.msra.mxu0 0.0
    %713 = vmatprep.subr.mxu0 0.0
    %714 = vmatpush1.xpose.msra.mxu0 0.0
    %715 = vmatprep.subr.mxu0 0.0
    %716 = vmatpush1.xpose.msra.mxu0 0.0
    %717 = vmatprep.subr.mxu0 0.0
    %718 = vmatpush1.xpose.msra.mxu0 0.0
    %719 = vmatprep.subr.mxu0 0.0
    %720 = vmatpush1.xpose.msra.mxu0 0.0
    %721 = vmatprep.subr.mxu0 0.0
    %722 = vmatpush1.xpose.msra.mxu0 0.0
    %723 = vmatprep.subr.mxu0 0.0
    %724 = vmatpush1.xpose.msra.mxu0 0.0
    %725 = vmatprep.subr.mxu0 0.0
    %726 = vmatpush1.xpose.msra.mxu0 0.0
    %727 = vmatprep.subr.mxu0 0.0
    %728 = vmatpush1.xpose.msra.mxu0 0.0
    %729 = vmatprep.subr.mxu0 0.0
    %730 = vmatpush1.xpose.msra.mxu0 %v699
    %731 = vmatprep.subr.mxu0 0.0
    %732 = vmatpush1.xpose.msra.mxu0 %v696
    %733 = vmatprep.subr.mxu0 0.0
    %734 = vmatpush2.xpose.msra.mxu0 0.0
    %735 = vmatprep.subr.mxu0 0.0
    %736 = vmatpush2.xpose.msra.mxu0 0.0
    %737 = vmatprep.subr.mxu0 0.0
    %738 = vmatpush2.xpose.msra.mxu0 0.0
    %739 = vmatprep.subr.mxu0 0.0
    %740 = vmatpush2.xpose.msra.mxu0 0.0
    %741 = vmatprep.subr.mxu0 0.0
    %742 = vmatpush2.xpose.msra.mxu0 0.0
    %743 = vmatprep.subr.mxu0 0.0
    %744 = vmatpush2.xpose.msra.mxu0 0.0
    %745 = vmatprep.subr.mxu0 0.0
    %746 = vmatpush2.xpose.msra.mxu0 0.0
    %747 = vmatprep.subr.mxu0 0.0
    %748 = vmatpush2.xpose.msra.mxu0 0.0
    %749 = vmatprep.subr.mxu0 0.0
    %750 = vmatpush2.xpose.msra.mxu0 0.0
    %751 = vmatprep.subr.mxu0 0.0
    %752 = vmatpush2.xpose.msra.mxu0 0.0
    %753 = vmatprep.subr.mxu0 0.0
    %754 = vmatpush2.xpose.msra.mxu0 0.0
    %755 = vmatprep.subr.mxu0 0.0
    %756 = vmatpush2.xpose.msra.mxu0 0.0
    %757 = vmatprep.subr.mxu0 0.0
    %758 = vmatpush2.xpose.msra.mxu0 0.0
    %759 = vmatprep.subr.mxu0 0.0
    %760 = vmatpush2.xpose.msra.mxu0 0.0
    %761 = vmatprep.subr.mxu0 0.0
    %762 = vmatpush2.xpose.msra.mxu0 0.0
    %763 = vmatprep.subr.mxu0 0.0
    %764 = vmatpush2.xpose.msra.mxu0 0.0
    %765 = vmatprep.mubr.f32.mxu0 0.0
    %766 = vmatmul.mubr.f32.gmra.mxu0 %v690
    %v767 = vpop.f32.mrf.mxu0
    %v768 = vadd.f32 0.0, %v767
    %v769 = vpop.f32.mrf.mxu0
    %770 = vmatprep.mubr.f32.mxu0 0.0
    %771 = vmatmul.mubr.f32.gmra.mxu0 %v693
    %v772 = vpop.f32.mrf.mxu0
    %v773 = vadd.f32 0.0, %v772
    %v774 = vpop.f32.mrf.mxu0
    %775 = vdwg.mxu0
    %v777 = vsel %vm79, %v31, 0
    %v780 = vsel %vm79, %v32, 0
    %v783 = vsel %vm79, %v63, 0
    %v786 = vsel %vm79, %v64, 0
    %788 = vmatprep.subr.mxu0 0.0
    %789 = vmatpush1.xpose.msra.mxu0 0.0
    %790 = vmatprep.subr.mxu0 0.0
    %791 = vmatpush1.xpose.msra.mxu0 0.0
    %792 = vmatprep.subr.mxu0 0.0
    %793 = vmatpush1.xpose.msra.mxu0 0.0
    %794 = vmatprep.subr.mxu0 0.0
    %795 = vmatpush1.xpose.msra.mxu0 0.0
    %796 = vmatprep.subr.mxu0 0.0
    %797 = vmatpush1.xpose.msra.mxu0 0.0
    %798 = vmatprep.subr.mxu0 0.0
    %799 = vmatpush1.xpose.msra.mxu0 0.0
    %800 = vmatprep.subr.mxu0 0.0
    %801 = vmatpush1.xpose.msra.mxu0 0.0
    %802 = vmatprep.subr.mxu0 0.0
    %803 = vmatpush1.xpose.msra.mxu0 0.0
    %804 = vmatprep.subr.mxu0 0.0
    %805 = vmatpush1.xpose.msra.mxu0 0.0
    %806 = vmatprep.subr.mxu0 0.0
    %807 = vmatpush1.xpose.msra.mxu0 0.0
    %808 = vmatprep.subr.mxu0 0.0
    %809 = vmatpush1.xpose.msra.mxu0 0.0
    %810 = vmatprep.subr.mxu0 0.0
    %811 = vmatpush1.xpose.msra.mxu0 0.0
    %812 = vmatprep.subr.mxu0 0.0
    %813 = vmatpush1.xpose.msra.mxu0 0.0
    %814 = vmatprep.subr.mxu0 0.0
    %815 = vmatpush1.xpose.msra.mxu0 0.0
    %816 = vmatprep.subr.mxu0 0.0
    %817 = vmatpush1.xpose.msra.mxu0 %v786
    %818 = vmatprep.subr.mxu0 0.0
    %819 = vmatpush1.xpose.msra.mxu0 %v783
    %820 = vmatprep.subr.mxu0 0.0
    %821 = vmatpush2.xpose.msra.mxu0 0.0
    %822 = vmatprep.subr.mxu0 0.0
    %823 = vmatpush2.xpose.msra.mxu0 0.0
    %824 = vmatprep.subr.mxu0 0.0
    %825 = vmatpush2.xpose.msra.mxu0 0.0
    %826 = vmatprep.subr.mxu0 0.0
    %827 = vmatpush2.xpose.msra.mxu0 0.0
    %828 = vmatprep.subr.mxu0 0.0
    %829 = vmatpush2.xpose.msra.mxu0 0.0
    %830 = vmatprep.subr.mxu0 0.0
    %831 = vmatpush2.xpose.msra.mxu0 0.0
    %832 = vmatprep.subr.mxu0 0.0
    %833 = vmatpush2.xpose.msra.mxu0 0.0
    %834 = vmatprep.subr.mxu0 0.0
    %835 = vmatpush2.xpose.msra.mxu0 0.0
    %836 = vmatprep.subr.mxu0 0.0
    %837 = vmatpush2.xpose.msra.mxu0 0.0
    %838 = vmatprep.subr.mxu0 0.0
    %839 = vmatpush2.xpose.msra.mxu0 0.0
    %840 = vmatprep.subr.mxu0 0.0
    %841 = vmatpush2.xpose.msra.mxu0 0.0
    %842 = vmatprep.subr.mxu0 0.0
    %843 = vmatpush2.xpose.msra.mxu0 0.0
    %844 = vmatprep.subr.mxu0 0.0
    %845 = vmatpush2.xpose.msra.mxu0 0.0
    %846 = vmatprep.subr.mxu0 0.0
    %847 = vmatpush2.xpose.msra.mxu0 0.0
    %848 = vmatprep.subr.mxu0 0.0
    %849 = vmatpush2.xpose.msra.mxu0 0.0
    %850 = vmatprep.subr.mxu0 0.0
    %851 = vmatpush2.xpose.msra.mxu0 0.0
    %852 = vmatprep.mubr.f32.mxu0 0.0
    %853 = vmatmul.mubr.f32.gmra.mxu0 %v777
    %v854 = vpop.f32.mrf.mxu0
    %v855 = vadd.f32 0.0, %v854
    %v856 = vpop.f32.mrf.mxu0
    %857 = vmatprep.mubr.f32.mxu0 0.0
    %858 = vmatmul.mubr.f32.gmra.mxu0 %v780
    %v859 = vpop.f32.mrf.mxu0
    %v860 = vadd.f32 0.0, %v859
    %v861 = vpop.f32.mrf.mxu0
    %862 = vdwg.mxu0
    %v864 = vsel %vm79, %v33, 0
    %v867 = vsel %vm79, %v34, 0
    %v870 = vsel %vm79, %v65, 0
    %v873 = vsel %vm79, %v66, 0
    %875 = vmatprep.subr.mxu0 0.0
    %876 = vmatpush1.xpose.msra.mxu0 0.0
    %877 = vmatprep.subr.mxu0 0.0
    %878 = vmatpush1.xpose.msra.mxu0 0.0
    %879 = vmatprep.subr.mxu0 0.0
    %880 = vmatpush1.xpose.msra.mxu0 0.0
    %881 = vmatprep.subr.mxu0 0.0
    %882 = vmatpush1.xpose.msra.mxu0 0.0
    %883 = vmatprep.subr.mxu0 0.0
    %884 = vmatpush1.xpose.msra.mxu0 0.0
    %885 = vmatprep.subr.mxu0 0.0
    %886 = vmatpush1.xpose.msra.mxu0 0.0
    %887 = vmatprep.subr.mxu0 0.0
    %888 = vmatpush1.xpose.msra.mxu0 0.0
    %889 = vmatprep.subr.mxu0 0.0
    %890 = vmatpush1.xpose.msra.mxu0 0.0
    %891 = vmatprep.subr.mxu0 0.0
    %892 = vmatpush1.xpose.msra.mxu0 0.0
    %893 = vmatprep.subr.mxu0 0.0
    %894 = vmatpush1.xpose.msra.mxu0 0.0
    %895 = vmatprep.subr.mxu0 0.0
    %896 = vmatpush1.xpose.msra.mxu0 0.0
    %897 = vmatprep.subr.mxu0 0.0
    %898 = vmatpush1.xpose.msra.mxu0 0.0
    %899 = vmatprep.subr.mxu0 0.0
    %900 = vmatpush1.xpose.msra.mxu0 0.0
    %901 = vmatprep.subr.mxu0 0.0
    %902 = vmatpush1.xpose.msra.mxu0 0.0
    %903 = vmatprep.subr.mxu0 0.0
    %904 = vmatpush1.xpose.msra.mxu0 %v873
    %905 = vmatprep.subr.mxu0 0.0
    %906 = vmatpush1.xpose.msra.mxu0 %v870
    %907 = vmatprep.subr.mxu0 0.0
    %908 = vmatpush2.xpose.msra.mxu0 0.0
    %909 = vmatprep.subr.mxu0 0.0
    %910 = vmatpush2.xpose.msra.mxu0 0.0
    %911 = vmatprep.subr.mxu0 0.0
    %912 = vmatpush2.xpose.msra.mxu0 0.0
    %913 = vmatprep.subr.mxu0 0.0
    %914 = vmatpush2.xpose.msra.mxu0 0.0
    %915 = vmatprep.subr.mxu0 0.0
    %916 = vmatpush2.xpose.msra.mxu0 0.0
    %917 = vmatprep.subr.mxu0 0.0
    %918 = vmatpush2.xpose.msra.mxu0 0.0
    %919 = vmatprep.subr.mxu0 0.0
    %920 = vmatpush2.xpose.msra.mxu0 0.0
    %921 = vmatprep.subr.mxu0 0.0
    %922 = vmatpush2.xpose.msra.mxu0 0.0
    %923 = vmatprep.subr.mxu0 0.0
    %924 = vmatpush2.xpose.msra.mxu0 0.0
    %925 = vmatprep.subr.mxu0 0.0
    %926 = vmatpush2.xpose.msra.mxu0 0.0
    %927 = vmatprep.subr.mxu0 0.0
    %928 = vmatpush2.xpose.msra.mxu0 0.0
    %929 = vmatprep.subr.mxu0 0.0
    %930 = vmatpush2.xpose.msra.mxu0 0.0
    %931 = vmatprep.subr.mxu0 0.0
    %932 = vmatpush2.xpose.msra.mxu0 0.0
    %933 = vmatprep.subr.mxu0 0.0
    %934 = vmatpush2.xpose.msra.mxu0 0.0
    %935 = vmatprep.subr.mxu0 0.0
    %936 = vmatpush2.xpose.msra.mxu0 0.0
    %937 = vmatprep.subr.mxu0 0.0
    %938 = vmatpush2.xpose.msra.mxu0 0.0
    %939 = vmatprep.mubr.f32.mxu0 0.0
    %940 = vmatmul.mubr.f32.gmra.mxu0 %v864
    %v941 = vpop.f32.mrf.mxu0
    %v942 = vadd.f32 0.0, %v941
    %v943 = vpop.f32.mrf.mxu0
    %944 = vmatprep.mubr.f32.mxu0 0.0
    %945 = vmatmul.mubr.f32.gmra.mxu0 %v867
    %v946 = vpop.f32.mrf.mxu0
    %v947 = vadd.f32 0.0, %v946
    %v948 = vpop.f32.mrf.mxu0
    %949 = vdwg.mxu0
    %v951 = vsel %vm79, %v35, 0
    %v954 = vsel %vm79, %v36, 0
    %v957 = vsel %vm79, %v67, 0
    %v960 = vsel %vm79, %v68, 0
    %962 = vmatprep.subr.mxu0 0.0
    %963 = vmatpush1.xpose.msra.mxu0 0.0
    %964 = vmatprep.subr.mxu0 0.0
    %965 = vmatpush1.xpose.msra.mxu0 0.0
    %966 = vmatprep.subr.mxu0 0.0
    %967 = vmatpush1.xpose.msra.mxu0 0.0
    %968 = vmatprep.subr.mxu0 0.0
    %969 = vmatpush1.xpose.msra.mxu0 0.0
    %970 = vmatprep.subr.mxu0 0.0
    %971 = vmatpush1.xpose.msra.mxu0 0.0
    %972 = vmatprep.subr.mxu0 0.0
    %973 = vmatpush1.xpose.msra.mxu0 0.0
    %974 = vmatprep.subr.mxu0 0.0
    %975 = vmatpush1.xpose.msra.mxu0 0.0
    %976 = vmatprep.subr.mxu0 0.0
    %977 = vmatpush1.xpose.msra.mxu0 0.0
    %978 = vmatprep.subr.mxu0 0.0
    %979 = vmatpush1.xpose.msra.mxu0 0.0
    %980 = vmatprep.subr.mxu0 0.0
    %981 = vmatpush1.xpose.msra.mxu0 0.0
    %982 = vmatprep.subr.mxu0 0.0
    %983 = vmatpush1.xpose.msra.mxu0 0.0
    %984 = vmatprep.subr.mxu0 0.0
    %985 = vmatpush1.xpose.msra.mxu0 0.0
    %986 = vmatprep.subr.mxu0 0.0
    %987 = vmatpush1.xpose.msra.mxu0 0.0
    %988 = vmatprep.subr.mxu0 0.0
    %989 = vmatpush1.xpose.msra.mxu0 0.0
    %990 = vmatprep.subr.mxu0 0.0
    %991 = vmatpush1.xpose.msra.mxu0 %v960
    %992 = vmatprep.subr.mxu0 0.0
    %993 = vmatpush1.xpose.msra.mxu0 %v957
    %994 = vmatprep.subr.mxu0 0.0
    %995 = vmatpush2.xpose.msra.mxu0 0.0
    %996 = vmatprep.subr.mxu0 0.0
    %997 = vmatpush2.xpose.msra.mxu0 0.0
    %998 = vmatprep.subr.mxu0 0.0
    %999 = vmatpush2.xpose.msra.mxu0 0.0
    %1000 = vmatprep.subr.mxu0 0.0
    %1001 = vmatpush2.xpose.msra.mxu0 0.0
    %1002 = vmatprep.subr.mxu0 0.0
    %1003 = vmatpush2.xpose.msra.mxu0 0.0
    %1004 = vmatprep.subr.mxu0 0.0
    %1005 = vmatpush2.xpose.msra.mxu0 0.0
    %1006 = vmatprep.subr.mxu0 0.0
    %1007 = vmatpush2.xpose.msra.mxu0 0.0
    %1008 = vmatprep.subr.mxu0 0.0
    %1009 = vmatpush2.xpose.msra.mxu0 0.0
    %1010 = vmatprep.subr.mxu0 0.0
    %1011 = vmatpush2.xpose.msra.mxu0 0.0
    %1012 = vmatprep.subr.mxu0 0.0
    %1013 = vmatpush2.xpose.msra.mxu0 0.0
    %1014 = vmatprep.subr.mxu0 0.0
    %1015 = vmatpush2.xpose.msra.mxu0 0.0
    %1016 = vmatprep.subr.mxu0 0.0
    %1017 = vmatpush2.xpose.msra.mxu0 0.0
    %1018 = vmatprep.subr.mxu0 0.0
    %1019 = vmatpush2.xpose.msra.mxu0 0.0
    %1020 = vmatprep.subr.mxu0 0.0
    %1021 = vmatpush2.xpose.msra.mxu0 0.0
    %1022 = vmatprep.subr.mxu0 0.0
    %1023 = vmatpush2.xpose.msra.mxu0 0.0
    %1024 = vmatprep.subr.mxu0 0.0
    %1025 = vmatpush2.xpose.msra.mxu0 0.0
    %1026 = vmatprep.mubr.f32.mxu0 0.0
    %1027 = vmatmul.mubr.f32.gmra.mxu0 %v951
    %v1028 = vpop.f32.mrf.mxu0
    %v1029 = vadd.f32 0.0, %v1028
    %v1030 = vpop.f32.mrf.mxu0
    %1031 = vmatprep.mubr.f32.mxu0 0.0
    %1032 = vmatmul.mubr.f32.gmra.mxu0 %v954
    %v1033 = vpop.f32.mrf.mxu0
    %v1034 = vadd.f32 0.0, %v1033
    %v1035 = vpop.f32.mrf.mxu0
    %1036 = vdwg.mxu0
    %v1038 = vsel %vm79, %v37, 0
    %v1041 = vsel %vm79, %v38, 0
    %v1044 = vsel %vm79, %v69, 0
    %v1047 = vsel %vm79, %v70, 0
    %1049 = vmatprep.subr.mxu0 0.0
    %1050 = vmatpush1.xpose.msra.mxu0 0.0
    %1051 = vmatprep.subr.mxu0 0.0
    %1052 = vmatpush1.xpose.msra.mxu0 0.0
    %1053 = vmatprep.subr.mxu0 0.0
    %1054 = vmatpush1.xpose.msra.mxu0 0.0
    %1055 = vmatprep.subr.mxu0 0.0
    %1056 = vmatpush1.xpose.msra.mxu0 0.0
    %1057 = vmatprep.subr.mxu0 0.0
    %1058 = vmatpush1.xpose.msra.mxu0 0.0
    %1059 = vmatprep.subr.mxu0 0.0
    %1060 = vmatpush1.xpose.msra.mxu0 0.0
    %1061 = vmatprep.subr.mxu0 0.0
    %1062 = vmatpush1.xpose.msra.mxu0 0.0
    %1063 = vmatprep.subr.mxu0 0.0
    %1064 = vmatpush1.xpose.msra.mxu0 0.0
    %1065 = vmatprep.subr.mxu0 0.0
    %1066 = vmatpush1.xpose.msra.mxu0 0.0
    %1067 = vmatprep.subr.mxu0 0.0
    %1068 = vmatpush1.xpose.msra.mxu0 0.0
    %1069 = vmatprep.subr.mxu0 0.0
    %1070 = vmatpush1.xpose.msra.mxu0 0.0
    %1071 = vmatprep.subr.mxu0 0.0
    %1072 = vmatpush1.xpose.msra.mxu0 0.0
    %1073 = vmatprep.subr.mxu0 0.0
    %1074 = vmatpush1.xpose.msra.mxu0 0.0
    %1075 = vmatprep.subr.mxu0 0.0
    %1076 = vmatpush1.xpose.msra.mxu0 0.0
    %1077 = vmatprep.subr.mxu0 0.0
    %1078 = vmatpush1.xpose.msra.mxu0 %v1047
    %1079 = vmatprep.subr.mxu0 0.0
    %1080 = vmatpush1.xpose.msra.mxu0 %v1044
    %1081 = vmatprep.subr.mxu0 0.0
    %1082 = vmatpush2.xpose.msra.mxu0 0.0
    %1083 = vmatprep.subr.mxu0 0.0
    %1084 = vmatpush2.xpose.msra.mxu0 0.0
    %1085 = vmatprep.subr.mxu0 0.0
    %1086 = vmatpush2.xpose.msra.mxu0 0.0
    %1087 = vmatprep.subr.mxu0 0.0
    %1088 = vmatpush2.xpose.msra.mxu0 0.0
    %1089 = vmatprep.subr.mxu0 0.0
    %1090 = vmatpush2.xpose.msra.mxu0 0.0
    %1091 = vmatprep.subr.mxu0 0.0
    %1092 = vmatpush2.xpose.msra.mxu0 0.0
    %1093 = vmatprep.subr.mxu0 0.0
    %1094 = vmatpush2.xpose.msra.mxu0 0.0
    %1095 = vmatprep.subr.mxu0 0.0
    %1096 = vmatpush2.xpose.msra.mxu0 0.0
    %1097 = vmatprep.subr.mxu0 0.0
    %1098 = vmatpush2.xpose.msra.mxu0 0.0
    %1099 = vmatprep.subr.mxu0 0.0
    %1100 = vmatpush2.xpose.msra.mxu0 0.0
    %1101 = vmatprep.subr.mxu0 0.0
    %1102 = vmatpush2.xpose.msra.mxu0 0.0
    %1103 = vmatprep.subr.mxu0 0.0
    %1104 = vmatpush2.xpose.msra.mxu0 0.0
    %1105 = vmatprep.subr.mxu0 0.0
    %1106 = vmatpush2.xpose.msra.mxu0 0.0
    %1107 = vmatprep.subr.mxu0 0.0
    %1108 = vmatpush2.xpose.msra.mxu0 0.0
    %1109 = vmatprep.subr.mxu0 0.0
    %1110 = vmatpush2.xpose.msra.mxu0 0.0
    %1111 = vmatprep.subr.mxu0 0.0
    %1112 = vmatpush2.xpose.msra.mxu0 0.0
    %1113 = vmatprep.mubr.f32.mxu0 0.0
    %1114 = vmatmul.mubr.f32.gmra.mxu0 %v1038
    %v1115 = vpop.f32.mrf.mxu0
    %v1116 = vadd.f32 0.0, %v1115
    %v1117 = vpop.f32.mrf.mxu0
    %1118 = vmatprep.mubr.f32.mxu0 0.0
    %1119 = vmatmul.mubr.f32.gmra.mxu0 %v1041
    %v1120 = vpop.f32.mrf.mxu0
    %v1121 = vadd.f32 0.0, %v1120
    %v1122 = vpop.f32.mrf.mxu0
    %1123 = vdwg.mxu0
    %v1125 = vsel %vm79, %v39, 0
    %v1128 = vsel %vm79, %v40, 0
    %v1131 = vsel %vm79, %v71, 0
    %v1134 = vsel %vm79, %v72, 0
    %1136 = vmatprep.subr.mxu0 0.0
    %1137 = vmatpush1.xpose.msra.mxu0 0.0
    %1138 = vmatprep.subr.mxu0 0.0
    %1139 = vmatpush1.xpose.msra.mxu0 0.0
    %1140 = vmatprep.subr.mxu0 0.0
    %1141 = vmatpush1.xpose.msra.mxu0 0.0
    %1142 = vmatprep.subr.mxu0 0.0
    %1143 = vmatpush1.xpose.msra.mxu0 0.0
    %1144 = vmatprep.subr.mxu0 0.0
    %1145 = vmatpush1.xpose.msra.mxu0 0.0
    %1146 = vmatprep.subr.mxu0 0.0
    %1147 = vmatpush1.xpose.msra.mxu0 0.0
    %1148 = vmatprep.subr.mxu0 0.0
    %1149 = vmatpush1.xpose.msra.mxu0 0.0
    %1150 = vmatprep.subr.mxu0 0.0
    %1151 = vmatpush1.xpose.msra.mxu0 0.0
    %1152 = vmatprep.subr.mxu0 0.0
    %1153 = vmatpush1.xpose.msra.mxu0 0.0
    %1154 = vmatprep.subr.mxu0 0.0
    %1155 = vmatpush1.xpose.msra.mxu0 0.0
    %1156 = vmatprep.subr.mxu0 0.0
    %1157 = vmatpush1.xpose.msra.mxu0 0.0
    %1158 = vmatprep.subr.mxu0 0.0
    %1159 = vmatpush1.xpose.msra.mxu0 0.0
    %1160 = vmatprep.subr.mxu0 0.0
    %1161 = vmatpush1.xpose.msra.mxu0 0.0
    %1162 = vmatprep.subr.mxu0 0.0
    %1163 = vmatpush1.xpose.msra.mxu0 0.0
    %1164 = vmatprep.subr.mxu0 0.0
    %1165 = vmatpush1.xpose.msra.mxu0 %v1134
    %1166 = vmatprep.subr.mxu0 0.0
    %1167 = vmatpush1.xpose.msra.mxu0 %v1131
    %1168 = vmatprep.subr.mxu0 0.0
    %1169 = vmatpush2.xpose.msra.mxu0 0.0
    %1170 = vmatprep.subr.mxu0 0.0
    %1171 = vmatpush2.xpose.msra.mxu0 0.0
    %1172 = vmatprep.subr.mxu0 0.0
    %1173 = vmatpush2.xpose.msra.mxu0 0.0
    %1174 = vmatprep.subr.mxu0 0.0
    %1175 = vmatpush2.xpose.msra.mxu0 0.0
    %1176 = vmatprep.subr.mxu0 0.0
    %1177 = vmatpush2.xpose.msra.mxu0 0.0
    %1178 = vmatprep.subr.mxu0 0.0
    %1179 = vmatpush2.xpose.msra.mxu0 0.0
    %1180 = vmatprep.subr.mxu0 0.0
    %1181 = vmatpush2.xpose.msra.mxu0 0.0
    %1182 = vmatprep.subr.mxu0 0.0
    %1183 = vmatpush2.xpose.msra.mxu0 0.0
    %1184 = vmatprep.subr.mxu0 0.0
    %1185 = vmatpush2.xpose.msra.mxu0 0.0
    %1186 = vmatprep.subr.mxu0 0.0
    %1187 = vmatpush2.xpose.msra.mxu0 0.0
    %1188 = vmatprep.subr.mxu0 0.0
    %1189 = vmatpush2.xpose.msra.mxu0 0.0
    %1190 = vmatprep.subr.mxu0 0.0
    %1191 = vmatpush2.xpose.msra.mxu0 0.0
    %1192 = vmatprep.subr.mxu0 0.0
    %1193 = vmatpush2.xpose.msra.mxu0 0.0
    %1194 = vmatprep.subr.mxu0 0.0
    %1195 = vmatpush2.xpose.msra.mxu0 0.0
    %1196 = vmatprep.subr.mxu0 0.0
    %1197 = vmatpush2.xpose.msra.mxu0 0.0
    %1198 = vmatprep.subr.mxu0 0.0
    %1199 = vmatpush2.xpose.msra.mxu0 0.0
    %1200 = vmatprep.mubr.f32.mxu0 0.0
    %1201 = vmatmul.mubr.f32.gmra.mxu0 %v1125
    %v1202 = vpop.f32.mrf.mxu0
    %v1203 = vadd.f32 0.0, %v1202
    %v1204 = vpop.f32.mrf.mxu0
    %1205 = vmatprep.mubr.f32.mxu0 0.0
    %1206 = vmatmul.mubr.f32.gmra.mxu0 %v1128
    %v1207 = vpop.f32.mrf.mxu0
    %v1208 = vadd.f32 0.0, %v1207
    %v1209 = vpop.f32.mrf.mxu0
    %1210 = vdwg.mxu0
    %v1212 = vsel %vm79, %v41, 0
    %v1215 = vsel %vm79, %v42, 0
    %v1218 = vsel %vm79, %v73, 0
    %v1221 = vsel %vm79, %v74, 0
    %1223 = vmatprep.subr.mxu0 0.0
    %1224 = vmatpush1.xpose.msra.mxu0 0.0
    %1225 = vmatprep.subr.mxu0 0.0
    %1226 = vmatpush1.xpose.msra.mxu0 0.0
    %1227 = vmatprep.subr.mxu0 0.0
    %1228 = vmatpush1.xpose.msra.mxu0 0.0
    %1229 = vmatprep.subr.mxu0 0.0
    %1230 = vmatpush1.xpose.msra.mxu0 0.0
    %1231 = vmatprep.subr.mxu0 0.0
    %1232 = vmatpush1.xpose.msra.mxu0 0.0
    %1233 = vmatprep.subr.mxu0 0.0
    %1234 = vmatpush1.xpose.msra.mxu0 0.0
    %1235 = vmatprep.subr.mxu0 0.0
    %1236 = vmatpush1.xpose.msra.mxu0 0.0
    %1237 = vmatprep.subr.mxu0 0.0
    %1238 = vmatpush1.xpose.msra.mxu0 0.0
    %1239 = vmatprep.subr.mxu0 0.0
    %1240 = vmatpush1.xpose.msra.mxu0 0.0
    %1241 = vmatprep.subr.mxu0 0.0
    %1242 = vmatpush1.xpose.msra.mxu0 0.0
    %1243 = vmatprep.subr.mxu0 0.0
    %1244 = vmatpush1.xpose.msra.mxu0 0.0
    %1245 = vmatprep.subr.mxu0 0.0
    %1246 = vmatpush1.xpose.msra.mxu0 0.0
    %1247 = vmatprep.subr.mxu0 0.0
    %1248 = vmatpush1.xpose.msra.mxu0 0.0
    %1249 = vmatprep.subr.mxu0 0.0
    %1250 = vmatpush1.xpose.msra.mxu0 0.0
    %1251 = vmatprep.subr.mxu0 0.0
    %1252 = vmatpush1.xpose.msra.mxu0 %v1221
    %1253 = vmatprep.subr.mxu0 0.0
    %1254 = vmatpush1.xpose.msra.mxu0 %v1218
    %1255 = vmatprep.subr.mxu0 0.0
    %1256 = vmatpush2.xpose.msra.mxu0 0.0
    %1257 = vmatprep.subr.mxu0 0.0
    %1258 = vmatpush2.xpose.msra.mxu0 0.0
    %1259 = vmatprep.subr.mxu0 0.0
    %1260 = vmatpush2.xpose.msra.mxu0 0.0
    %1261 = vmatprep.subr.mxu0 0.0
    %1262 = vmatpush2.xpose.msra.mxu0 0.0
    %1263 = vmatprep.subr.mxu0 0.0
    %1264 = vmatpush2.xpose.msra.mxu0 0.0
    %1265 = vmatprep.subr.mxu0 0.0
    %1266 = vmatpush2.xpose.msra.mxu0 0.0
    %1267 = vmatprep.subr.mxu0 0.0
    %1268 = vmatpush2.xpose.msra.mxu0 0.0
    %1269 = vmatprep.subr.mxu0 0.0
    %1270 = vmatpush2.xpose.msra.mxu0 0.0
    %1271 = vmatprep.subr.mxu0 0.0
    %1272 = vmatpush2.xpose.msra.mxu0 0.0
    %1273 = vmatprep.subr.mxu0 0.0
    %1274 = vmatpush2.xpose.msra.mxu0 0.0
    %1275 = vmatprep.subr.mxu0 0.0
    %1276 = vmatpush2.xpose.msra.mxu0 0.0
    %1277 = vmatprep.subr.mxu0 0.0
    %1278 = vmatpush2.xpose.msra.mxu0 0.0
    %1279 = vmatprep.subr.mxu0 0.0
    %1280 = vmatpush2.xpose.msra.mxu0 0.0
    %1281 = vmatprep.subr.mxu0 0.0
    %1282 = vmatpush2.xpose.msra.mxu0 0.0
    %1283 = vmatprep.subr.mxu0 0.0
    %1284 = vmatpush2.xpose.msra.mxu0 0.0
    %1285 = vmatprep.subr.mxu0 0.0
    %1286 = vmatpush2.xpose.msra.mxu0 0.0
    %1287 = vmatprep.mubr.f32.mxu0 0.0
    %1288 = vmatmul.mubr.f32.gmra.mxu0 %v1212
    %v1289 = vpop.f32.mrf.mxu0
    %v1290 = vadd.f32 0.0, %v1289
    %v1291 = vpop.f32.mrf.mxu0
    %1292 = vmatprep.mubr.f32.mxu0 0.0
    %1293 = vmatmul.mubr.f32.gmra.mxu0 %v1215
    %v1294 = vpop.f32.mrf.mxu0
    %v1295 = vadd.f32 0.0, %v1294
    %v1296 = vpop.f32.mrf.mxu0
    %1297 = vdwg.mxu0
    %v1299 = vsel %vm79, %v43, 0
    %v1302 = vsel %vm79, %v44, 0
    %v1305 = vsel %vm79, %v75, 0
    %v1308 = vsel %vm79, %v76, 0
    %1310 = vmatprep.subr.mxu0 0.0
    %1311 = vmatpush1.xpose.msra.mxu0 0.0
    %1312 = vmatprep.subr.mxu0 0.0
    %1313 = vmatpush1.xpose.msra.mxu0 0.0
    %1314 = vmatprep.subr.mxu0 0.0
    %1315 = vmatpush1.xpose.msra.mxu0 0.0
    %1316 = vmatprep.subr.mxu0 0.0
    %1317 = vmatpush1.xpose.msra.mxu0 0.0
    %1318 = vmatprep.subr.mxu0 0.0
    %1319 = vmatpush1.xpose.msra.mxu0 0.0
    %1320 = vmatprep.subr.mxu0 0.0
    %1321 = vmatpush1.xpose.msra.mxu0 0.0
    %1322 = vmatprep.subr.mxu0 0.0
    %1323 = vmatpush1.xpose.msra.mxu0 0.0
    %1324 = vmatprep.subr.mxu0 0.0
    %1325 = vmatpush1.xpose.msra.mxu0 0.0
    %1326 = vmatprep.subr.mxu0 0.0
    %1327 = vmatpush1.xpose.msra.mxu0 0.0
    %1328 = vmatprep.subr.mxu0 0.0
    %1329 = vmatpush1.xpose.msra.mxu0 0.0
    %1330 = vmatprep.subr.mxu0 0.0
    %1331 = vmatpush1.xpose.msra.mxu0 0.0
    %1332 = vmatprep.subr.mxu0 0.0
    %1333 = vmatpush1.xpose.msra.mxu0 0.0
    %1334 = vmatprep.subr.mxu0 0.0
    %1335 = vmatpush1.xpose.msra.mxu0 0.0
    %1336 = vmatprep.subr.mxu0 0.0
    %1337 = vmatpush1.xpose.msra.mxu0 0.0
    %1338 = vmatprep.subr.mxu0 0.0
    %1339 = vmatpush1.xpose.msra.mxu0 %v1308
    %1340 = vmatprep.subr.mxu0 0.0
    %1341 = vmatpush1.xpose.msra.mxu0 %v1305
    %1342 = vmatprep.subr.mxu0 0.0
    %1343 = vmatpush2.xpose.msra.mxu0 0.0
    %1344 = vmatprep.subr.mxu0 0.0
    %1345 = vmatpush2.xpose.msra.mxu0 0.0
    %1346 = vmatprep.subr.mxu0 0.0
    %1347 = vmatpush2.xpose.msra.mxu0 0.0
    %1348 = vmatprep.subr.mxu0 0.0
    %1349 = vmatpush2.xpose.msra.mxu0 0.0
    %1350 = vmatprep.subr.mxu0 0.0
    %1351 = vmatpush2.xpose.msra.mxu0 0.0
    %1352 = vmatprep.subr.mxu0 0.0
    %1353 = vmatpush2.xpose.msra.mxu0 0.0
    %1354 = vmatprep.subr.mxu0 0.0
    %1355 = vmatpush2.xpose.msra.mxu0 0.0
    %1356 = vmatprep.subr.mxu0 0.0
    %1357 = vmatpush2.xpose.msra.mxu0 0.0
    %1358 = vmatprep.subr.mxu0 0.0
    %1359 = vmatpush2.xpose.msra.mxu0 0.0
    %1360 = vmatprep.subr.mxu0 0.0
    %1361 = vmatpush2.xpose.msra.mxu0 0.0
    %1362 = vmatprep.subr.mxu0 0.0
    %1363 = vmatpush2.xpose.msra.mxu0 0.0
    %1364 = vmatprep.subr.mxu0 0.0
    %1365 = vmatpush2.xpose.msra.mxu0 0.0
    %1366 = vmatprep.subr.mxu0 0.0
    %1367 = vmatpush2.xpose.msra.mxu0 0.0
    %1368 = vmatprep.subr.mxu0 0.0
    %1369 = vmatpush2.xpose.msra.mxu0 0.0
    %1370 = vmatprep.subr.mxu0 0.0
    %1371 = vmatpush2.xpose.msra.mxu0 0.0
    %1372 = vmatprep.subr.mxu0 0.0
    %1373 = vmatpush2.xpose.msra.mxu0 0.0
    %1374 = vmatprep.mubr.f32.mxu0 0.0
    %1375 = vmatmul.mubr.f32.gmra.mxu0 %v1299
    %v1376 = vpop.f32.mrf.mxu0
    %v1377 = vadd.f32 0.0, %v1376
    %v1378 = vpop.f32.mrf.mxu0
    %1379 = vmatprep.mubr.f32.mxu0 0.0
    %1380 = vmatmul.mubr.f32.gmra.mxu0 %v1302
    %v1381 = vpop.f32.mrf.mxu0
    %v1382 = vadd.f32 0.0, %v1381
    %v1383 = vpop.f32.mrf.mxu0
    %1384 = vdwg.mxu0
    %v1386 = vsel %vm79, %v45, 0
    %v1389 = vsel %vm79, %v46, 0
    %v1392 = vsel %vm79, %v77, 0
    %v1395 = vsel %vm79, %v78, 0
    %1397 = vmatprep.subr.mxu0 0.0
    %1398 = vmatpush1.xpose.msra.mxu0 0.0
    %1399 = vmatprep.subr.mxu0 0.0
    %1400 = vmatpush1.xpose.msra.mxu0 0.0
    %1401 = vmatprep.subr.mxu0 0.0
    %1402 = vmatpush1.xpose.msra.mxu0 0.0
    %1403 = vmatprep.subr.mxu0 0.0
    %1404 = vmatpush1.xpose.msra.mxu0 0.0
    %1405 = vmatprep.subr.mxu0 0.0
    %1406 = vmatpush1.xpose.msra.mxu0 0.0
    %1407 = vmatprep.subr.mxu0 0.0
    %1408 = vmatpush1.xpose.msra.mxu0 0.0
    %1409 = vmatprep.subr.mxu0 0.0
    %1410 = vmatpush1.xpose.msra.mxu0 0.0
    %1411 = vmatprep.subr.mxu0 0.0
    %1412 = vmatpush1.xpose.msra.mxu0 0.0
    %1413 = vmatprep.subr.mxu0 0.0
    %1414 = vmatpush1.xpose.msra.mxu0 0.0
    %1415 = vmatprep.subr.mxu0 0.0
    %1416 = vmatpush1.xpose.msra.mxu0 0.0
    %1417 = vmatprep.subr.mxu0 0.0
    %1418 = vmatpush1.xpose.msra.mxu0 0.0
    %1419 = vmatprep.subr.mxu0 0.0
    %1420 = vmatpush1.xpose.msra.mxu0 0.0
    %1421 = vmatprep.subr.mxu0 0.0
    %1422 = vmatpush1.xpose.msra.mxu0 0.0
    %1423 = vmatprep.subr.mxu0 0.0
    %1424 = vmatpush1.xpose.msra.mxu0 0.0
    %1425 = vmatprep.subr.mxu0 0.0
    %1426 = vmatpush1.xpose.msra.mxu0 %v1395
    %1427 = vmatprep.subr.mxu0 0.0
    %1428 = vmatpush1.xpose.msra.mxu0 %v1392
    %1429 = vmatprep.subr.mxu0 0.0
    %1430 = vmatpush2.xpose.msra.mxu0 0.0
    %1431 = vmatprep.subr.mxu0 0.0
    %1432 = vmatpush2.xpose.msra.mxu0 0.0
    %1433 = vmatprep.subr.mxu0 0.0
    %1434 = vmatpush2.xpose.msra.mxu0 0.0
    %1435 = vmatprep.subr.mxu0 0.0
    %1436 = vmatpush2.xpose.msra.mxu0 0.0
    %1437 = vmatprep.subr.mxu0 0.0
    %1438 = vmatpush2.xpose.msra.mxu0 0.0
    %1439 = vmatprep.subr.mxu0 0.0
    %1440 = vmatpush2.xpose.msra.mxu0 0.0
    %1441 = vmatprep.subr.mxu0 0.0
    %1442 = vmatpush2.xpose.msra.mxu0 0.0
    %1443 = vmatprep.subr.mxu0 0.0
    %1444 = vmatpush2.xpose.msra.mxu0 0.0
    %1445 = vmatprep.subr.mxu0 0.0
    %1446 = vmatpush2.xpose.msra.mxu0 0.0
    %1447 = vmatprep.subr.mxu0 0.0
    %1448 = vmatpush2.xpose.msra.mxu0 0.0
    %1449 = vmatprep.subr.mxu0 0.0
    %1450 = vmatpush2.xpose.msra.mxu0 0.0
    %1451 = vmatprep.subr.mxu0 0.0
    %1452 = vmatpush2.xpose.msra.mxu0 0.0
    %1453 = vmatprep.subr.mxu0 0.0
    %1454 = vmatpush2.xpose.msra.mxu0 0.0
    %1455 = vmatprep.subr.mxu0 0.0
    %1456 = vmatpush2.xpose.msra.mxu0 0.0
    %1457 = vmatprep.subr.mxu0 0.0
    %1458 = vmatpush2.xpose.msra.mxu0 0.0
    %1459 = vmatprep.subr.mxu0 0.0
    %1460 = vmatpush2.xpose.msra.mxu0 0.0
    %1461 = vmatprep.mubr.f32.mxu0 0.0
    %1462 = vmatmul.mubr.f32.gmra.mxu0 %v1386
    %v1463 = vpop.f32.mrf.mxu0
    %v1464 = vadd.f32 0.0, %v1463
    %v1465 = vpop.f32.mrf.mxu0
    %1466 = vmatprep.mubr.f32.mxu0 0.0
    %1467 = vmatmul.mubr.f32.gmra.mxu0 %v1389
    %v1468 = vpop.f32.mrf.mxu0
    %v1469 = vadd.f32 0.0, %v1468
    %v1470 = vpop.f32.mrf.mxu0
    %1471 = vdwg.mxu0
    %v1472 = vmul.f32 %v159, 16.0
    %v1473 = vmul.f32 %v164, 16.0
    %v1474 = vmul.f32 %v246, 16.0
    %v1475 = vmul.f32 %v251, 16.0
    %v1476 = vmul.f32 %v333, 16.0
    %v1477 = vmul.f32 %v338, 16.0
    %v1478 = vmul.f32 %v420, 16.0
    %v1479 = vmul.f32 %v425, 16.0
    %v1480 = vmul.f32 %v507, 16.0
    %v1481 = vmul.f32 %v512, 16.0
    %v1482 = vmul.f32 %v594, 16.0
    %v1483 = vmul.f32 %v599, 16.0
    %v1484 = vmul.f32 %v681, 16.0
    %v1485 = vmul.f32 %v686, 16.0
    %v1486 = vmul.f32 %v768, 16.0
    %v1487 = vmul.f32 %v773, 16.0
    %v1488 = vmul.f32 %v855, 16.0
    %v1489 = vmul.f32 %v860, 16.0
    %v1490 = vmul.f32 %v942, 16.0
    %v1491 = vmul.f32 %v947, 16.0
    %v1492 = vmul.f32 %v1029, 16.0
    %v1493 = vmul.f32 %v1034, 16.0
    %v1494 = vmul.f32 %v1116, 16.0
    %v1495 = vmul.f32 %v1121, 16.0
    %v1496 = vmul.f32 %v1203, 16.0
    %v1497 = vmul.f32 %v1208, 16.0
    %v1498 = vmul.f32 %v1290, 16.0
    %v1499 = vmul.f32 %v1295, 16.0
    %v1500 = vmul.f32 %v1377, 16.0
    %v1501 = vmul.f32 %v1382, 16.0
    %v1502 = vmul.f32 %v1464, 16.0
    %v1503 = vmul.f32 %v1469, 16.0
    %v1504 = vsel %vm79, %v1472, -inf
    %1505 = vmax.xlane.f32.xlu0 %v1504
    %v1506 = vpop.xlane.xlu0 %1505
    %v1507 = vsel %vm79, %v1473, -inf
    %1508 = vmax.xlane.f32.xlu0 %v1507
    %v1509 = vpop.xlane.xlu0 %1508
    %v1510 = vsel %vm79, %v1474, -inf
    %1511 = vmax.xlane.f32.xlu0 %v1510
    %v1512 = vpop.xlane.xlu0 %1511
    %v1513 = vsel %vm79, %v1475, -inf
    %1514 = vmax.xlane.f32.xlu0 %v1513
    %v1515 = vpop.xlane.xlu0 %1514
    %v1516 = vsel %vm79, %v1476, -inf
    %1517 = vmax.xlane.f32.xlu0 %v1516
    %v1518 = vpop.xlane.xlu0 %1517
    %v1519 = vsel %vm79, %v1477, -inf
    %1520 = vmax.xlane.f32.xlu0 %v1519
    %v1521 = vpop.xlane.xlu0 %1520
    %v1522 = vsel %vm79, %v1478, -inf
    %1523 = vmax.xlane.f32.xlu0 %v1522
    %v1524 = vpop.xlane.xlu0 %1523
    %v1525 = vsel %vm79, %v1479, -inf
    %1526 = vmax.xlane.f32.xlu0 %v1525
    %v1527 = vpop.xlane.xlu0 %1526
    %v1528 = vsel %vm79, %v1480, -inf
    %1529 = vmax.xlane.f32.xlu0 %v1528
    %v1530 = vpop.xlane.xlu0 %1529
    %v1531 = vsel %vm79, %v1481, -inf
    %1532 = vmax.xlane.f32.xlu0 %v1531
    %v1533 = vpop.xlane.xlu0 %1532
    %v1534 = vsel %vm79, %v1482, -inf
    %1535 = vmax.xlane.f32.xlu0 %v1534
    %v1536 = vpop.xlane.xlu0 %1535
    %v1537 = vsel %vm79, %v1483, -inf
    %1538 = vmax.xlane.f32.xlu0 %v1537
    %v1539 = vpop.xlane.xlu0 %1538
    %v1540 = vsel %vm79, %v1484, -inf
    %1541 = vmax.xlane.f32.xlu0 %v1540
    %v1542 = vpop.xlane.xlu0 %1541
    %v1543 = vsel %vm79, %v1485, -inf
    %1544 = vmax.xlane.f32.xlu0 %v1543
    %v1545 = vpop.xlane.xlu0 %1544
    %v1546 = vsel %vm79, %v1486, -inf
    %1547 = vmax.xlane.f32.xlu0 %v1546
    %v1548 = vpop.xlane.xlu0 %1547
    %v1549 = vsel %vm79, %v1487, -inf
    %1550 = vmax.xlane.f32.xlu0 %v1549
    %v1551 = vpop.xlane.xlu0 %1550
    %v1552 = vsel %vm79, %v1488, -inf
    %1553 = vmax.xlane.f32.xlu0 %v1552
    %v1554 = vpop.xlane.xlu0 %1553
    %v1555 = vsel %vm79, %v1489, -inf
    %1556 = vmax.xlane.f32.xlu0 %v1555
    %v1557 = vpop.xlane.xlu0 %1556
    %v1558 = vsel %vm79, %v1490, -inf
    %1559 = vmax.xlane.f32.xlu0 %v1558
    %v1560 = vpop.xlane.xlu0 %1559
    %v1561 = vsel %vm79, %v1491, -inf
    %1562 = vmax.xlane.f32.xlu0 %v1561
    %v1563 = vpop.xlane.xlu0 %1562
    %v1564 = vsel %vm79, %v1492, -inf
    %1565 = vmax.xlane.f32.xlu0 %v1564
    %v1566 = vpop.xlane.xlu0 %1565
    %v1567 = vsel %vm79, %v1493, -inf
    %1568 = vmax.xlane.f32.xlu0 %v1567
    %v1569 = vpop.xlane.xlu0 %1568
    %v1570 = vsel %vm79, %v1494, -inf
    %1571 = vmax.xlane.f32.xlu0 %v1570
    %v1572 = vpop.xlane.xlu0 %1571
    %v1573 = vsel %vm79, %v1495, -inf
    %1574 = vmax.xlane.f32.xlu0 %v1573
    %v1575 = vpop.xlane.xlu0 %1574
    %v1576 = vsel %vm79, %v1496, -inf
    %1577 = vmax.xlane.f32.xlu0 %v1576
    %v1578 = vpop.xlane.xlu0 %1577
    %v1579 = vsel %vm79, %v1497, -inf
    %1580 = vmax.xlane.f32.xlu0 %v1579
    %v1581 = vpop.xlane.xlu0 %1580
    %v1582 = vsel %vm79, %v1498, -inf
    %1583 = vmax.xlane.f32.xlu0 %v1582
    %v1584 = vpop.xlane.xlu0 %1583
    %v1585 = vsel %vm79, %v1499, -inf
    %1586 = vmax.xlane.f32.xlu0 %v1585
    %v1587 = vpop.xlane.xlu0 %1586
    %v1588 = vsel %vm79, %v1500, -inf
    %1589 = vmax.xlane.f32.xlu0 %v1588
    %v1590 = vpop.xlane.xlu0 %1589
    %v1591 = vsel %vm79, %v1501, -inf
    %1592 = vmax.xlane.f32.xlu0 %v1591
    %v1593 = vpop.xlane.xlu0 %1592
    %v1594 = vsel %vm79, %v1502, -inf
    %1595 = vmax.xlane.f32.xlu0 %v1594
    %v1596 = vpop.xlane.xlu0 %1595
    %v1597 = vsel %vm79, %v1503, -inf
    %1598 = vmax.xlane.f32.xlu0 %v1597
    %v1599 = vpop.xlane.xlu0 %1598
    %v1600 = vsub.f32 %v1472, %v1506
    %v1601 = vsub.f32 %v1473, %v1509
    %v1602 = vsub.f32 %v1474, %v1512
    %v1603 = vsub.f32 %v1475, %v1515
    %v1604 = vsub.f32 %v1476, %v1518
    %v1605 = vsub.f32 %v1477, %v1521
    %v1606 = vsub.f32 %v1478, %v1524
    %v1607 = vsub.f32 %v1479, %v1527
    %v1608 = vsub.f32 %v1480, %v1530
    %v1609 = vsub.f32 %v1481, %v1533
    %v1610 = vsub.f32 %v1482, %v1536
    %v1611 = vsub.f32 %v1483, %v1539
    %v1612 = vsub.f32 %v1484, %v1542
    %v1613 = vsub.f32 %v1485, %v1545
    %v1614 = vsub.f32 %v1486, %v1548
    %v1615 = vsub.f32 %v1487, %v1551
    %v1616 = vsub.f32 %v1488, %v1554
    %v1617 = vsub.f32 %v1489, %v1557
    %v1618 = vsub.f32 %v1490, %v1560
    %v1619 = vsub.f32 %v1491, %v1563
    %v1620 = vsub.f32 %v1492, %v1566
    %v1621 = vsub.f32 %v1493, %v1569
    %v1622 = vsub.f32 %v1494, %v1572
    %v1623 = vsub.f32 %v1495, %v1575
    %v1624 = vsub.f32 %v1496, %v1578
    %v1625 = vsub.f32 %v1497, %v1581
    %v1626 = vsub.f32 %v1498, %v1584
    %v1627 = vsub.f32 %v1499, %v1587
    %v1628 = vsub.f32 %v1500, %v1590
    %v1629 = vsub.f32 %v1501, %v1593
    %v1630 = vsub.f32 %v1502, %v1596
    %v1631 = vsub.f32 %v1503, %v1599
    %v1632 = vmul.f32 %v1600, 1.442695
    %v1633 = vpow.pop %v1632
    %v1634 = vmul.f32 %v1601, 1.442695
    %v1635 = vpow.pop %v1634
    %v1636 = vmul.f32 %v1602, 1.442695
    %v1637 = vpow.pop %v1636
    %v1638 = vmul.f32 %v1603, 1.442695
    %v1639 = vpow.pop %v1638
    %v1640 = vmul.f32 %v1604, 1.442695
    %v1641 = vpow.pop %v1640
    %v1642 = vmul.f32 %v1605, 1.442695
    %v1643 = vpow.pop %v1642
    %v1644 = vmul.f32 %v1606, 1.442695
    %v1645 = vpow.pop %v1644
    %v1646 = vmul.f32 %v1607, 1.442695
    %v1647 = vpow.pop %v1646
    %v1648 = vmul.f32 %v1608, 1.442695
    %v1649 = vpow.pop %v1648
    %v1650 = vmul.f32 %v1609, 1.442695
    %v1651 = vpow.pop %v1650
    %v1652 = vmul.f32 %v1610, 1.442695
    %v1653 = vpow.pop %v1652
    %v1654 = vmul.f32 %v1611, 1.442695
    %v1655 = vpow.pop %v1654
    %v1656 = vmul.f32 %v1612, 1.442695
    %v1657 = vpow.pop %v1656
    %v1658 = vmul.f32 %v1613, 1.442695
    %v1659 = vpow.pop %v1658
    %v1660 = vmul.f32 %v1614, 1.442695
    %v1661 = vpow.pop %v1660
    %v1662 = vmul.f32 %v1615, 1.442695
    %v1663 = vpow.pop %v1662
    %v1664 = vmul.f32 %v1616, 1.442695
    %v1665 = vpow.pop %v1664
    %v1666 = vmul.f32 %v1617, 1.442695
    %v1667 = vpow.pop %v1666
    %v1668 = vmul.f32 %v1618, 1.442695
    %v1669 = vpow.pop %v1668
    %v1670 = vmul.f32 %v1619, 1.442695
    %v1671 = vpow.pop %v1670
    %v1672 = vmul.f32 %v1620, 1.442695
    %v1673 = vpow.pop %v1672
    %v1674 = vmul.f32 %v1621, 1.442695
    %v1675 = vpow.pop %v1674
    %v1676 = vmul.f32 %v1622, 1.442695
    %v1677 = vpow.pop %v1676
    %v1678 = vmul.f32 %v1623, 1.442695
    %v1679 = vpow.pop %v1678
    %v1680 = vmul.f32 %v1624, 1.442695
    %v1681 = vpow.pop %v1680
    %v1682 = vmul.f32 %v1625, 1.442695
    %v1683 = vpow.pop %v1682
    %v1684 = vmul.f32 %v1626, 1.442695
    %v1685 = vpow.pop %v1684
    %v1686 = vmul.f32 %v1627, 1.442695
    %v1687 = vpow.pop %v1686
    %v1688 = vmul.f32 %v1628, 1.442695
    %v1689 = vpow.pop %v1688
    %v1690 = vmul.f32 %v1629, 1.442695
    %v1691 = vpow.pop %v1690
    %v1692 = vmul.f32 %v1630, 1.442695
    %v1693 = vpow.pop %v1692
    %v1694 = vmul.f32 %v1631, 1.442695
    %v1695 = vpow.pop %v1694
    %v1696 = vsel %vm79, %v1633, 0.0
    %1697 = vadd.xlane.f32.xlu0 %v1696
    %v1698 = vpop.xlane.xlu0 %1697
    %v1699 = vsel %vm79, %v1635, 0.0
    %1700 = vadd.xlane.f32.xlu0 %v1699
    %v1701 = vpop.xlane.xlu0 %1700
    %v1702 = vsel %vm79, %v1637, 0.0
    %1703 = vadd.xlane.f32.xlu0 %v1702
    %v1704 = vpop.xlane.xlu0 %1703
    %v1705 = vsel %vm79, %v1639, 0.0
    %1706 = vadd.xlane.f32.xlu0 %v1705
    %v1707 = vpop.xlane.xlu0 %1706
    %v1708 = vsel %vm79, %v1641, 0.0
    %1709 = vadd.xlane.f32.xlu0 %v1708
    %v1710 = vpop.xlane.xlu0 %1709
    %v1711 = vsel %vm79, %v1643, 0.0
    %1712 = vadd.xlane.f32.xlu0 %v1711
    %v1713 = vpop.xlane.xlu0 %1712
    %v1714 = vsel %vm79, %v1645, 0.0
    %1715 = vadd.xlane.f32.xlu0 %v1714
    %v1716 = vpop.xlane.xlu0 %1715
    %v1717 = vsel %vm79, %v1647, 0.0
    %1718 = vadd.xlane.f32.xlu0 %v1717
    %v1719 = vpop.xlane.xlu0 %1718
    %v1720 = vsel %vm79, %v1649, 0.0
    %1721 = vadd.xlane.f32.xlu0 %v1720
    %v1722 = vpop.xlane.xlu0 %1721
    %v1723 = vsel %vm79, %v1651, 0.0
    %1724 = vadd.xlane.f32.xlu0 %v1723
    %v1725 = vpop.xlane.xlu0 %1724
    %v1726 = vsel %vm79, %v1653, 0.0
    %1727 = vadd.xlane.f32.xlu0 %v1726
    %v1728 = vpop.xlane.xlu0 %1727
    %v1729 = vsel %vm79, %v1655, 0.0
    %1730 = vadd.xlane.f32.xlu0 %v1729
    %v1731 = vpop.xlane.xlu0 %1730
    %v1732 = vsel %vm79, %v1657, 0.0
    %1733 = vadd.xlane.f32.xlu0 %v1732
    %v1734 = vpop.xlane.xlu0 %1733
    %v1735 = vsel %vm79, %v1659, 0.0
    %1736 = vadd.xlane.f32.xlu0 %v1735
    %v1737 = vpop.xlane.xlu0 %1736
    %v1738 = vsel %vm79, %v1661, 0.0
    %1739 = vadd.xlane.f32.xlu0 %v1738
    %v1740 = vpop.xlane.xlu0 %1739
    %v1741 = vsel %vm79, %v1663, 0.0
    %1742 = vadd.xlane.f32.xlu0 %v1741
    %v1743 = vpop.xlane.xlu0 %1742
    %v1744 = vsel %vm79, %v1665, 0.0
    %1745 = vadd.xlane.f32.xlu0 %v1744
    %v1746 = vpop.xlane.xlu0 %1745
    %v1747 = vsel %vm79, %v1667, 0.0
    %1748 = vadd.xlane.f32.xlu0 %v1747
    %v1749 = vpop.xlane.xlu0 %1748
    %v1750 = vsel %vm79, %v1669, 0.0
    %1751 = vadd.xlane.f32.xlu0 %v1750
    %v1752 = vpop.xlane.xlu0 %1751
    %v1753 = vsel %vm79, %v1671, 0.0
    %1754 = vadd.xlane.f32.xlu0 %v1753
    %v1755 = vpop.xlane.xlu0 %1754
    %v1756 = vsel %vm79, %v1673, 0.0
    %1757 = vadd.xlane.f32.xlu0 %v1756
    %v1758 = vpop.xlane.xlu0 %1757
    %v1759 = vsel %vm79, %v1675, 0.0
    %1760 = vadd.xlane.f32.xlu0 %v1759
    %v1761 = vpop.xlane.xlu0 %1760
    %v1762 = vsel %vm79, %v1677, 0.0
    %1763 = vadd.xlane.f32.xlu0 %v1762
    %v1764 = vpop.xlane.xlu0 %1763
    %v1765 = vsel %vm79, %v1679, 0.0
    %1766 = vadd.xlane.f32.xlu0 %v1765
    %v1767 = vpop.xlane.xlu0 %1766
    %v1768 = vsel %vm79, %v1681, 0.0
    %1769 = vadd.xlane.f32.xlu0 %v1768
    %v1770 = vpop.xlane.xlu0 %1769
    %v1771 = vsel %vm79, %v1683, 0.0
    %1772 = vadd.xlane.f32.xlu0 %v1771
    %v1773 = vpop.xlane.xlu0 %1772
    %v1774 = vsel %vm79, %v1685, 0.0
    %1775 = vadd.xlane.f32.xlu0 %v1774
    %v1776 = vpop.xlane.xlu0 %1775
    %v1777 = vsel %vm79, %v1687, 0.0
    %1778 = vadd.xlane.f32.xlu0 %v1777
    %v1779 = vpop.xlane.xlu0 %1778
    %v1780 = vsel %vm79, %v1689, 0.0
    %1781 = vadd.xlane.f32.xlu0 %v1780
    %v1782 = vpop.xlane.xlu0 %1781
    %v1783 = vsel %vm79, %v1691, 0.0
    %1784 = vadd.xlane.f32.xlu0 %v1783
    %v1785 = vpop.xlane.xlu0 %1784
    %v1786 = vsel %vm79, %v1693, 0.0
    %1787 = vadd.xlane.f32.xlu0 %v1786
    %v1788 = vpop.xlane.xlu0 %1787
    %v1789 = vsel %vm79, %v1695, 0.0
    %1790 = vadd.xlane.f32.xlu0 %v1789
    %v1791 = vpop.xlane.xlu0 %1790
    %v1792 = vrcp.pop %v1698
    %v1793 = vmul.f32 %v1633, %v1792
    %v1794 = vrcp.pop %v1701
    %v1795 = vmul.f32 %v1635, %v1794
    %v1796 = vrcp.pop %v1704
    %v1797 = vmul.f32 %v1637, %v1796
    %v1798 = vrcp.pop %v1707
    %v1799 = vmul.f32 %v1639, %v1798
    %v1800 = vrcp.pop %v1710
    %v1801 = vmul.f32 %v1641, %v1800
    %v1802 = vrcp.pop %v1713
    %v1803 = vmul.f32 %v1643, %v1802
    %v1804 = vrcp.pop %v1716
    %v1805 = vmul.f32 %v1645, %v1804
    %v1806 = vrcp.pop %v1719
    %v1807 = vmul.f32 %v1647, %v1806
    %v1808 = vrcp.pop %v1722
    %v1809 = vmul.f32 %v1649, %v1808
    %v1810 = vrcp.pop %v1725
    %v1811 = vmul.f32 %v1651, %v1810
    %v1812 = vrcp.pop %v1728
    %v1813 = vmul.f32 %v1653, %v1812
    %v1814 = vrcp.pop %v1731
    %v1815 = vmul.f32 %v1655, %v1814
    %v1816 = vrcp.pop %v1734
    %v1817 = vmul.f32 %v1657, %v1816
    %v1818 = vrcp.pop %v1737
    %v1819 = vmul.f32 %v1659, %v1818
    %v1820 = vrcp.pop %v1740
    %v1821 = vmul.f32 %v1661, %v1820
    %v1822 = vrcp.pop %v1743
    %v1823 = vmul.f32 %v1663, %v1822
    %v1824 = vrcp.pop %v1746
    %v1825 = vmul.f32 %v1665, %v1824
    %v1826 = vrcp.pop %v1749
    %v1827 = vmul.f32 %v1667, %v1826
    %v1828 = vrcp.pop %v1752
    %v1829 = vmul.f32 %v1669, %v1828
    %v1830 = vrcp.pop %v1755
    %v1831 = vmul.f32 %v1671, %v1830
    %v1832 = vrcp.pop %v1758
    %v1833 = vmul.f32 %v1673, %v1832
    %v1834 = vrcp.pop %v1761
    %v1835 = vmul.f32 %v1675, %v1834
    %v1836 = vrcp.pop %v1764
    %v1837 = vmul.f32 %v1677, %v1836
    %v1838 = vrcp.pop %v1767
    %v1839 = vmul.f32 %v1679, %v1838
    %v1840 = vrcp.pop %v1770
    %v1841 = vmul.f32 %v1681, %v1840
    %v1842 = vrcp.pop %v1773
    %v1843 = vmul.f32 %v1683, %v1842
    %v1844 = vrcp.pop %v1776
    %v1845 = vmul.f32 %v1685, %v1844
    %v1846 = vrcp.pop %v1779
    %v1847 = vmul.f32 %v1687, %v1846
    %v1848 = vrcp.pop %v1782
    %v1849 = vmul.f32 %v1689, %v1848
    %v1850 = vrcp.pop %v1785
    %v1851 = vmul.f32 %v1691, %v1850
    %v1852 = vrcp.pop %v1788
    %v1853 = vmul.f32 %v1693, %v1852
    %v1854 = vrcp.pop %v1791
    %v1855 = vmul.f32 %v1695, %v1854
    %v1856 = vld [vmem:[%s2] sm:$0xff]
    %v1857 = vld [vmem:[%s2 + $0x8] sm:$0xff]
    %v1858 = vld [vmem:[%s2 + $0x10] sm:$0xff]
    %v1859 = vld [vmem:[%s2 + $0x18] sm:$0xff]
    %v1860 = vld [vmem:[%s2 + $0x20] sm:$0xff]
    %v1861 = vld [vmem:[%s2 + $0x28] sm:$0xff]
    %v1862 = vld [vmem:[%s2 + $0x30] sm:$0xff]
    %v1863 = vld [vmem:[%s2 + $0x38] sm:$0xff]
    %v1864 = vld [vmem:[%s2 + $0x40] sm:$0xff]
    %v1865 = vld [vmem:[%s2 + $0x48] sm:$0xff]
    %v1866 = vld [vmem:[%s2 + $0x50] sm:$0xff]
    %v1867 = vld [vmem:[%s2 + $0x58] sm:$0xff]
    %v1868 = vld [vmem:[%s2 + $0x60] sm:$0xff]
    %v1869 = vld [vmem:[%s2 + $0x68] sm:$0xff]
    %v1870 = vld [vmem:[%s2 + $0x70] sm:$0xff]
    %v1871 = vld [vmem:[%s2 + $0x78] sm:$0xff]
    %v1872 = vld [vmem:[%s2 + $0x80] sm:$0xff]
    %v1873 = vld [vmem:[%s2 + $0x88] sm:$0xff]
    %v1874 = vld [vmem:[%s2 + $0x90] sm:$0xff]
    %v1875 = vld [vmem:[%s2 + $0x98] sm:$0xff]
    %v1876 = vld [vmem:[%s2 + $0xa0] sm:$0xff]
    %v1877 = vld [vmem:[%s2 + $0xa8] sm:$0xff]
    %v1878 = vld [vmem:[%s2 + $0xb0] sm:$0xff]
    %v1879 = vld [vmem:[%s2 + $0xb8] sm:$0xff]
    %v1880 = vld [vmem:[%s2 + $0xc0] sm:$0xff]
    %v1881 = vld [vmem:[%s2 + $0xc8] sm:$0xff]
    %v1882 = vld [vmem:[%s2 + $0xd0] sm:$0xff]
    %v1883 = vld [vmem:[%s2 + $0xd8] sm:$0xff]
    %v1884 = vld [vmem:[%s2 + $0xe0] sm:$0xff]
    %v1885 = vld [vmem:[%s2 + $0xe8] sm:$0xff]
    %v1886 = vld [vmem:[%s2 + $0xf0] sm:$0xff]
    %v1887 = vld [vmem:[%s2 + $0xf8] sm:$0xff]
    %vm1888 = vcmp.ge.u32.totalorder %v1856, 1288490189
    %vm1889 = vcmp.ge.u32.totalorder %v1857, 1288490189
    %vm1890 = vcmp.ge.u32.totalorder %v1858, 1288490189
    %vm1891 = vcmp.ge.u32.totalorder %v1859, 1288490189
    %vm1892 = vcmp.ge.u32.totalorder %v1860, 1288490189
    %vm1893 = vcmp.ge.u32.totalorder %v1861, 1288490189
    %vm1894 = vcmp.ge.u32.totalorder %v1862, 1288490189
    %vm1895 = vcmp.ge.u32.totalorder %v1863, 1288490189
    %vm1896 = vcmp.ge.u32.totalorder %v1864, 1288490189
    %vm1897 = vcmp.ge.u32.totalorder %v1865, 1288490189
    %vm1898 = vcmp.ge.u32.totalorder %v1866, 1288490189
    %vm1899 = vcmp.ge.u32.totalorder %v1867, 1288490189
    %vm1900 = vcmp.ge.u32.totalorder %v1868, 1288490189
    %vm1901 = vcmp.ge.u32.totalorder %v1869, 1288490189
    %vm1902 = vcmp.ge.u32.totalorder %v1870, 1288490189
    %vm1903 = vcmp.ge.u32.totalorder %v1871, 1288490189
    %vm1904 = vcmp.ge.u32.totalorder %v1872, 1288490189
    %vm1905 = vcmp.ge.u32.totalorder %v1873, 1288490189
    %vm1906 = vcmp.ge.u32.totalorder %v1874, 1288490189
    %vm1907 = vcmp.ge.u32.totalorder %v1875, 1288490189
    %vm1908 = vcmp.ge.u32.totalorder %v1876, 1288490189
    %vm1909 = vcmp.ge.u32.totalorder %v1877, 1288490189
    %vm1910 = vcmp.ge.u32.totalorder %v1878, 1288490189
    %vm1911 = vcmp.ge.u32.totalorder %v1879, 1288490189
    %vm1912 = vcmp.ge.u32.totalorder %v1880, 1288490189
    %vm1913 = vcmp.ge.u32.totalorder %v1881, 1288490189
    %vm1914 = vcmp.ge.u32.totalorder %v1882, 1288490189
    %vm1915 = vcmp.ge.u32.totalorder %v1883, 1288490189
    %vm1916 = vcmp.ge.u32.totalorder %v1884, 1288490189
    %vm1917 = vcmp.ge.u32.totalorder %v1885, 1288490189
    %vm1918 = vcmp.ge.u32.totalorder %v1886, 1288490189
    %vm1919 = vcmp.ge.u32.totalorder %v1887, 1288490189
    %v1920 = vmul.f32 %v1793, 1.4285715
    %v1921 = vmul.f32 %v1795, 1.4285715
    %v1922 = vmul.f32 %v1797, 1.4285715
    %v1923 = vmul.f32 %v1799, 1.4285715
    %v1924 = vmul.f32 %v1801, 1.4285715
    %v1925 = vmul.f32 %v1803, 1.4285715
    %v1926 = vmul.f32 %v1805, 1.4285715
    %v1927 = vmul.f32 %v1807, 1.4285715
    %v1928 = vmul.f32 %v1809, 1.4285715
    %v1929 = vmul.f32 %v1811, 1.4285715
    %v1930 = vmul.f32 %v1813, 1.4285715
    %v1931 = vmul.f32 %v1815, 1.4285715
    %v1932 = vmul.f32 %v1817, 1.4285715
    %v1933 = vmul.f32 %v1819, 1.4285715
    %v1934 = vmul.f32 %v1821, 1.4285715
    %v1935 = vmul.f32 %v1823, 1.4285715
    %v1936 = vmul.f32 %v1825, 1.4285715
    %v1937 = vmul.f32 %v1827, 1.4285715
    %v1938 = vmul.f32 %v1829, 1.4285715
    %v1939 = vmul.f32 %v1831, 1.4285715
    %v1940 = vmul.f32 %v1833, 1.4285715
    %v1941 = vmul.f32 %v1835, 1.4285715
    %v1942 = vmul.f32 %v1837, 1.4285715
    %v1943 = vmul.f32 %v1839, 1.4285715
    %v1944 = vmul.f32 %v1841, 1.4285715
    %v1945 = vmul.f32 %v1843, 1.4285715
    %v1946 = vmul.f32 %v1845, 1.4285715
    %v1947 = vmul.f32 %v1847, 1.4285715
    %v1948 = vmul.f32 %v1849, 1.4285715
    %v1949 = vmul.f32 %v1851, 1.4285715
    %v1950 = vmul.f32 %v1853, 1.4285715
    %v1951 = vmul.f32 %v1855, 1.4285715
    %v1952 = vsel %vm1888, %v1920, 0.0
    %v1953 = vsel %vm1889, %v1921, 0.0
    %v1954 = vsel %vm1890, %v1922, 0.0
    %v1955 = vsel %vm1891, %v1923, 0.0
    %v1956 = vsel %vm1892, %v1924, 0.0
    %v1957 = vsel %vm1893, %v1925, 0.0
    %v1958 = vsel %vm1894, %v1926, 0.0
    %v1959 = vsel %vm1895, %v1927, 0.0
    %v1960 = vsel %vm1896, %v1928, 0.0
    %v1961 = vsel %vm1897, %v1929, 0.0
    %v1962 = vsel %vm1898, %v1930, 0.0
    %v1963 = vsel %vm1899, %v1931, 0.0
    %v1964 = vsel %vm1900, %v1932, 0.0
    %v1965 = vsel %vm1901, %v1933, 0.0
    %v1966 = vsel %vm1902, %v1934, 0.0
    %v1967 = vsel %vm1903, %v1935, 0.0
    %v1968 = vsel %vm1904, %v1936, 0.0
    %v1969 = vsel %vm1905, %v1937, 0.0
    %v1970 = vsel %vm1906, %v1938, 0.0
    %v1971 = vsel %vm1907, %v1939, 0.0
    %v1972 = vsel %vm1908, %v1940, 0.0
    %v1973 = vsel %vm1909, %v1941, 0.0
    %v1974 = vsel %vm1910, %v1942, 0.0
    %v1975 = vsel %vm1911, %v1943, 0.0
    %v1976 = vsel %vm1912, %v1944, 0.0
    %v1977 = vsel %vm1913, %v1945, 0.0
    %v1978 = vsel %vm1914, %v1946, 0.0
    %v1979 = vsel %vm1915, %v1947, 0.0
    %v1980 = vsel %vm1916, %v1948, 0.0
    %v1981 = vsel %vm1917, %v1949, 0.0
    %v1982 = vsel %vm1918, %v1950, 0.0
    %v1983 = vsel %vm1919, %v1951, 0.0
    %v1985 = vsel %vm79, %v1952, 0
    %v1988 = vsel %vm79, %v1953, 0
    %1990 = vmatprep.subr.mxu0 0.0
    %1991 = vmatpush1.msra.mxu0 0.0
    %1992 = vmatprep.subr.mxu0 0.0
    %1993 = vmatpush1.msra.mxu0 0.0
    %1994 = vmatprep.subr.mxu0 0.0
    %1995 = vmatpush1.msra.mxu0 0.0
    %1996 = vmatprep.subr.mxu0 0.0
    %1997 = vmatpush1.msra.mxu0 0.0
    %1998 = vmatprep.subr.mxu0 0.0
    %1999 = vmatpush1.msra.mxu0 0.0
    %2000 = vmatprep.subr.mxu0 0.0
    %2001 = vmatpush1.msra.mxu0 0.0
    %2002 = vmatprep.subr.mxu0 0.0
    %2003 = vmatpush1.msra.mxu0 0.0
    %2004 = vmatprep.subr.mxu0 0.0
    %2005 = vmatpush1.msra.mxu0 0.0
    %2006 = vmatprep.subr.mxu0 0.0
    %2007 = vmatpush1.msra.mxu0 0.0
    %2008 = vmatprep.subr.mxu0 0.0
    %2009 = vmatpush1.msra.mxu0 0.0
    %2010 = vmatprep.subr.mxu0 0.0
    %2011 = vmatpush1.msra.mxu0 0.0
    %2012 = vmatprep.subr.mxu0 0.0
    %2013 = vmatpush1.msra.mxu0 0.0
    %2014 = vmatprep.subr.mxu0 0.0
    %2015 = vmatpush1.msra.mxu0 0.0
    %2016 = vmatprep.subr.mxu0 0.0
    %2017 = vmatpush1.msra.mxu0 0.0
    %2018 = vmatprep.subr.mxu0 0.0
    %2019 = vmatpush1.msra.mxu0 %v164
    %2020 = vmatprep.subr.mxu0 0.0
    %2021 = vmatpush1.msra.mxu0 %v159
    %2022 = vmatprep.subr.mxu0 0.0
    %2023 = vmatpush2.msra.mxu0 0.0
    %2024 = vmatprep.subr.mxu0 0.0
    %2025 = vmatpush2.msra.mxu0 0.0
    %2026 = vmatprep.subr.mxu0 0.0
    %2027 = vmatpush2.msra.mxu0 0.0
    %2028 = vmatprep.subr.mxu0 0.0
    %2029 = vmatpush2.msra.mxu0 0.0
    %2030 = vmatprep.subr.mxu0 0.0
    %2031 = vmatpush2.msra.mxu0 0.0
    %2032 = vmatprep.subr.mxu0 0.0
    %2033 = vmatpush2.msra.mxu0 0.0
    %2034 = vmatprep.subr.mxu0 0.0
    %2035 = vmatpush2.msra.mxu0 0.0
    %2036 = vmatprep.subr.mxu0 0.0
    %2037 = vmatpush2.msra.mxu0 0.0
    %2038 = vmatprep.subr.mxu0 0.0
    %2039 = vmatpush2.msra.mxu0 0.0
    %2040 = vmatprep.subr.mxu0 0.0
    %2041 = vmatpush2.msra.mxu0 0.0
    %2042 = vmatprep.subr.mxu0 0.0
    %2043 = vmatpush2.msra.mxu0 0.0
    %2044 = vmatprep.subr.mxu0 0.0
    %2045 = vmatpush2.msra.mxu0 0.0
    %2046 = vmatprep.subr.mxu0 0.0
    %2047 = vmatpush2.msra.mxu0 0.0
    %2048 = vmatprep.subr.mxu0 0.0
    %2049 = vmatpush2.msra.mxu0 0.0
    %2050 = vmatprep.subr.mxu0 0.0
    %2051 = vmatpush2.msra.mxu0 0.0
    %2052 = vmatprep.subr.mxu0 0.0
    %2053 = vmatpush2.msra.mxu0 0.0
    %2054 = vmatprep.mubr.f32.mxu0 0.0
    %2055 = vmatmul.mubr.f32.gmra.mxu0 %v1985
    %v2056 = vpop.f32.mrf.mxu0
    %v2057 = vadd.f32 0.0, %v2056
    %v2058 = vpop.f32.mrf.mxu0
    %2059 = vmatprep.mubr.f32.mxu0 0.0
    %2060 = vmatmul.mubr.f32.gmra.mxu0 %v1988
    %v2061 = vpop.f32.mrf.mxu0
    %v2062 = vadd.f32 0.0, %v2061
    %v2063 = vpop.f32.mrf.mxu0
    %2064 = vdwg.mxu0
    %v2066 = vsel %vm79, %v1954, 0
    %v2069 = vsel %vm79, %v1955, 0
    %2071 = vmatprep.subr.mxu0 0.0
    %2072 = vmatpush1.msra.mxu0 0.0
    %2073 = vmatprep.subr.mxu0 0.0
    %2074 = vmatpush1.msra.mxu0 0.0
    %2075 = vmatprep.subr.mxu0 0.0
    %2076 = vmatpush1.msra.mxu0 0.0
    %2077 = vmatprep.subr.mxu0 0.0
    %2078 = vmatpush1.msra.mxu0 0.0
    %2079 = vmatprep.subr.mxu0 0.0
    %2080 = vmatpush1.msra.mxu0 0.0
    %2081 = vmatprep.subr.mxu0 0.0
    %2082 = vmatpush1.msra.mxu0 0.0
    %2083 = vmatprep.subr.mxu0 0.0
    %2084 = vmatpush1.msra.mxu0 0.0
    %2085 = vmatprep.subr.mxu0 0.0
    %2086 = vmatpush1.msra.mxu0 0.0
    %2087 = vmatprep.subr.mxu0 0.0
    %2088 = vmatpush1.msra.mxu0 0.0
    %2089 = vmatprep.subr.mxu0 0.0
    %2090 = vmatpush1.msra.mxu0 0.0
    %2091 = vmatprep.subr.mxu0 0.0
    %2092 = vmatpush1.msra.mxu0 0.0
    %2093 = vmatprep.subr.mxu0 0.0
    %2094 = vmatpush1.msra.mxu0 0.0
    %2095 = vmatprep.subr.mxu0 0.0
    %2096 = vmatpush1.msra.mxu0 0.0
    %2097 = vmatprep.subr.mxu0 0.0
    %2098 = vmatpush1.msra.mxu0 0.0
    %2099 = vmatprep.subr.mxu0 0.0
    %2100 = vmatpush1.msra.mxu0 %v251
    %2101 = vmatprep.subr.mxu0 0.0
    %2102 = vmatpush1.msra.mxu0 %v246
    %2103 = vmatprep.subr.mxu0 0.0
    %2104 = vmatpush2.msra.mxu0 0.0
    %2105 = vmatprep.subr.mxu0 0.0
    %2106 = vmatpush2.msra.mxu0 0.0
    %2107 = vmatprep.subr.mxu0 0.0
    %2108 = vmatpush2.msra.mxu0 0.0
    %2109 = vmatprep.subr.mxu0 0.0
    %2110 = vmatpush2.msra.mxu0 0.0
    %2111 = vmatprep.subr.mxu0 0.0
    %2112 = vmatpush2.msra.mxu0 0.0
    %2113 = vmatprep.subr.mxu0 0.0
    %2114 = vmatpush2.msra.mxu0 0.0
    %2115 = vmatprep.subr.mxu0 0.0
    %2116 = vmatpush2.msra.mxu0 0.0
    %2117 = vmatprep.subr.mxu0 0.0
    %2118 = vmatpush2.msra.mxu0 0.0
    %2119 = vmatprep.subr.mxu0 0.0
    %2120 = vmatpush2.msra.mxu0 0.0
    %2121 = vmatprep.subr.mxu0 0.0
    %2122 = vmatpush2.msra.mxu0 0.0
    %2123 = vmatprep.subr.mxu0 0.0
    %2124 = vmatpush2.msra.mxu0 0.0
    %2125 = vmatprep.subr.mxu0 0.0
    %2126 = vmatpush2.msra.mxu0 0.0
    %2127 = vmatprep.subr.mxu0 0.0
    %2128 = vmatpush2.msra.mxu0 0.0
    %2129 = vmatprep.subr.mxu0 0.0
    %2130 = vmatpush2.msra.mxu0 0.0
    %2131 = vmatprep.subr.mxu0 0.0
    %2132 = vmatpush2.msra.mxu0 0.0
    %2133 = vmatprep.subr.mxu0 0.0
    %2134 = vmatpush2.msra.mxu0 0.0
    %2135 = vmatprep.mubr.f32.mxu0 0.0
    %2136 = vmatmul.mubr.f32.gmra.mxu0 %v2066
    %v2137 = vpop.f32.mrf.mxu0
    %v2138 = vadd.f32 0.0, %v2137
    %v2139 = vpop.f32.mrf.mxu0
    %2140 = vmatprep.mubr.f32.mxu0 0.0
    %2141 = vmatmul.mubr.f32.gmra.mxu0 %v2069
    %v2142 = vpop.f32.mrf.mxu0
    %v2143 = vadd.f32 0.0, %v2142
    %v2144 = vpop.f32.mrf.mxu0
    %2145 = vdwg.mxu0
    %v2147 = vsel %vm79, %v1956, 0
    %v2150 = vsel %vm79, %v1957, 0
    %2152 = vmatprep.subr.mxu0 0.0
    %2153 = vmatpush1.msra.mxu0 0.0
    %2154 = vmatprep.subr.mxu0 0.0
    %2155 = vmatpush1.msra.mxu0 0.0
    %2156 = vmatprep.subr.mxu0 0.0
    %2157 = vmatpush1.msra.mxu0 0.0
    %2158 = vmatprep.subr.mxu0 0.0
    %2159 = vmatpush1.msra.mxu0 0.0
    %2160 = vmatprep.subr.mxu0 0.0
    %2161 = vmatpush1.msra.mxu0 0.0
    %2162 = vmatprep.subr.mxu0 0.0
    %2163 = vmatpush1.msra.mxu0 0.0
    %2164 = vmatprep.subr.mxu0 0.0
    %2165 = vmatpush1.msra.mxu0 0.0
    %2166 = vmatprep.subr.mxu0 0.0
    %2167 = vmatpush1.msra.mxu0 0.0
    %2168 = vmatprep.subr.mxu0 0.0
    %2169 = vmatpush1.msra.mxu0 0.0
    %2170 = vmatprep.subr.mxu0 0.0
    %2171 = vmatpush1.msra.mxu0 0.0
    %2172 = vmatprep.subr.mxu0 0.0
    %2173 = vmatpush1.msra.mxu0 0.0
    %2174 = vmatprep.subr.mxu0 0.0
    %2175 = vmatpush1.msra.mxu0 0.0
    %2176 = vmatprep.subr.mxu0 0.0
    %2177 = vmatpush1.msra.mxu0 0.0
    %2178 = vmatprep.subr.mxu0 0.0
    %2179 = vmatpush1.msra.mxu0 0.0
    %2180 = vmatprep.subr.mxu0 0.0
    %2181 = vmatpush1.msra.mxu0 %v338
    %2182 = vmatprep.subr.mxu0 0.0
    %2183 = vmatpush1.msra.mxu0 %v333
    %2184 = vmatprep.subr.mxu0 0.0
    %2185 = vmatpush2.msra.mxu0 0.0
    %2186 = vmatprep.subr.mxu0 0.0
    %2187 = vmatpush2.msra.mxu0 0.0
    %2188 = vmatprep.subr.mxu0 0.0
    %2189 = vmatpush2.msra.mxu0 0.0
    %2190 = vmatprep.subr.mxu0 0.0
    %2191 = vmatpush2.msra.mxu0 0.0
    %2192 = vmatprep.subr.mxu0 0.0
    %2193 = vmatpush2.msra.mxu0 0.0
    %2194 = vmatprep.subr.mxu0 0.0
    %2195 = vmatpush2.msra.mxu0 0.0
    %2196 = vmatprep.subr.mxu0 0.0
    %2197 = vmatpush2.msra.mxu0 0.0
    %2198 = vmatprep.subr.mxu0 0.0
    %2199 = vmatpush2.msra.mxu0 0.0
    %2200 = vmatprep.subr.mxu0 0.0
    %2201 = vmatpush2.msra.mxu0 0.0
    %2202 = vmatprep.subr.mxu0 0.0
    %2203 = vmatpush2.msra.mxu0 0.0
    %2204 = vmatprep.subr.mxu0 0.0
    %2205 = vmatpush2.msra.mxu0 0.0
    %2206 = vmatprep.subr.mxu0 0.0
    %2207 = vmatpush2.msra.mxu0 0.0
    %2208 = vmatprep.subr.mxu0 0.0
    %2209 = vmatpush2.msra.mxu0 0.0
    %2210 = vmatprep.subr.mxu0 0.0
    %2211 = vmatpush2.msra.mxu0 0.0
    %2212 = vmatprep.subr.mxu0 0.0
    %2213 = vmatpush2.msra.mxu0 0.0
    %2214 = vmatprep.subr.mxu0 0.0
    %2215 = vmatpush2.msra.mxu0 0.0
    %2216 = vmatprep.mubr.f32.mxu0 0.0
    %2217 = vmatmul.mubr.f32.gmra.mxu0 %v2147
    %v2218 = vpop.f32.mrf.mxu0
    %v2219 = vadd.f32 0.0, %v2218
    %v2220 = vpop.f32.mrf.mxu0
    %2221 = vmatprep.mubr.f32.mxu0 0.0
    %2222 = vmatmul.mubr.f32.gmra.mxu0 %v2150
    %v2223 = vpop.f32.mrf.mxu0
    %v2224 = vadd.f32 0.0, %v2223
    %v2225 = vpop.f32.mrf.mxu0
    %2226 = vdwg.mxu0
    %v2228 = vsel %vm79, %v1958, 0
    %v2231 = vsel %vm79, %v1959, 0
    %2233 = vmatprep.subr.mxu0 0.0
    %2234 = vmatpush1.msra.mxu0 0.0
    %2235 = vmatprep.subr.mxu0 0.0
    %2236 = vmatpush1.msra.mxu0 0.0
    %2237 = vmatprep.subr.mxu0 0.0
    %2238 = vmatpush1.msra.mxu0 0.0
    %2239 = vmatprep.subr.mxu0 0.0
    %2240 = vmatpush1.msra.mxu0 0.0
    %2241 = vmatprep.subr.mxu0 0.0
    %2242 = vmatpush1.msra.mxu0 0.0
    %2243 = vmatprep.subr.mxu0 0.0
    %2244 = vmatpush1.msra.mxu0 0.0
    %2245 = vmatprep.subr.mxu0 0.0
    %2246 = vmatpush1.msra.mxu0 0.0
    %2247 = vmatprep.subr.mxu0 0.0
    %2248 = vmatpush1.msra.mxu0 0.0
    %2249 = vmatprep.subr.mxu0 0.0
    %2250 = vmatpush1.msra.mxu0 0.0
    %2251 = vmatprep.subr.mxu0 0.0
    %2252 = vmatpush1.msra.mxu0 0.0
    %2253 = vmatprep.subr.mxu0 0.0
    %2254 = vmatpush1.msra.mxu0 0.0
    %2255 = vmatprep.subr.mxu0 0.0
    %2256 = vmatpush1.msra.mxu0 0.0
    %2257 = vmatprep.subr.mxu0 0.0
    %2258 = vmatpush1.msra.mxu0 0.0
    %2259 = vmatprep.subr.mxu0 0.0
    %2260 = vmatpush1.msra.mxu0 0.0
    %2261 = vmatprep.subr.mxu0 0.0
    %2262 = vmatpush1.msra.mxu0 %v425
    %2263 = vmatprep.subr.mxu0 0.0
    %2264 = vmatpush1.msra.mxu0 %v420
    %2265 = vmatprep.subr.mxu0 0.0
    %2266 = vmatpush2.msra.mxu0 0.0
    %2267 = vmatprep.subr.mxu0 0.0
    %2268 = vmatpush2.msra.mxu0 0.0
    %2269 = vmatprep.subr.mxu0 0.0
    %2270 = vmatpush2.msra.mxu0 0.0
    %2271 = vmatprep.subr.mxu0 0.0
    %2272 = vmatpush2.msra.mxu0 0.0
    %2273 = vmatprep.subr.mxu0 0.0
    %2274 = vmatpush2.msra.mxu0 0.0
    %2275 = vmatprep.subr.mxu0 0.0
    %2276 = vmatpush2.msra.mxu0 0.0
    %2277 = vmatprep.subr.mxu0 0.0
    %2278 = vmatpush2.msra.mxu0 0.0
    %2279 = vmatprep.subr.mxu0 0.0
    %2280 = vmatpush2.msra.mxu0 0.0
    %2281 = vmatprep.subr.mxu0 0.0
    %2282 = vmatpush2.msra.mxu0 0.0
    %2283 = vmatprep.subr.mxu0 0.0
    %2284 = vmatpush2.msra.mxu0 0.0
    %2285 = vmatprep.subr.mxu0 0.0
    %2286 = vmatpush2.msra.mxu0 0.0
    %2287 = vmatprep.subr.mxu0 0.0
    %2288 = vmatpush2.msra.mxu0 0.0
    %2289 = vmatprep.subr.mxu0 0.0
    %2290 = vmatpush2.msra.mxu0 0.0
    %2291 = vmatprep.subr.mxu0 0.0
    %2292 = vmatpush2.msra.mxu0 0.0
    %2293 = vmatprep.subr.mxu0 0.0
    %2294 = vmatpush2.msra.mxu0 0.0
    %2295 = vmatprep.subr.mxu0 0.0
    %2296 = vmatpush2.msra.mxu0 0.0
    %2297 = vmatprep.mubr.f32.mxu0 0.0
    %2298 = vmatmul.mubr.f32.gmra.mxu0 %v2228
    %v2299 = vpop.f32.mrf.mxu0
    %v2300 = vadd.f32 0.0, %v2299
    %v2301 = vpop.f32.mrf.mxu0
    %2302 = vmatprep.mubr.f32.mxu0 0.0
    %2303 = vmatmul.mubr.f32.gmra.mxu0 %v2231
    %v2304 = vpop.f32.mrf.mxu0
    %v2305 = vadd.f32 0.0, %v2304
    %v2306 = vpop.f32.mrf.mxu0
    %2307 = vdwg.mxu0
    %v2309 = vsel %vm79, %v1960, 0
    %v2312 = vsel %vm79, %v1961, 0
    %2314 = vmatprep.subr.mxu0 0.0
    %2315 = vmatpush1.msra.mxu0 0.0
    %2316 = vmatprep.subr.mxu0 0.0
    %2317 = vmatpush1.msra.mxu0 0.0
    %2318 = vmatprep.subr.mxu0 0.0
    %2319 = vmatpush1.msra.mxu0 0.0
    %2320 = vmatprep.subr.mxu0 0.0
    %2321 = vmatpush1.msra.mxu0 0.0
    %2322 = vmatprep.subr.mxu0 0.0
    %2323 = vmatpush1.msra.mxu0 0.0
    %2324 = vmatprep.subr.mxu0 0.0
    %2325 = vmatpush1.msra.mxu0 0.0
    %2326 = vmatprep.subr.mxu0 0.0
    %2327 = vmatpush1.msra.mxu0 0.0
    %2328 = vmatprep.subr.mxu0 0.0
    %2329 = vmatpush1.msra.mxu0 0.0
    %2330 = vmatprep.subr.mxu0 0.0
    %2331 = vmatpush1.msra.mxu0 0.0
    %2332 = vmatprep.subr.mxu0 0.0
    %2333 = vmatpush1.msra.mxu0 0.0
    %2334 = vmatprep.subr.mxu0 0.0
    %2335 = vmatpush1.msra.mxu0 0.0
    %2336 = vmatprep.subr.mxu0 0.0
    %2337 = vmatpush1.msra.mxu0 0.0
    %2338 = vmatprep.subr.mxu0 0.0
    %2339 = vmatpush1.msra.mxu0 0.0
    %2340 = vmatprep.subr.mxu0 0.0
    %2341 = vmatpush1.msra.mxu0 0.0
    %2342 = vmatprep.subr.mxu0 0.0
    %2343 = vmatpush1.msra.mxu0 %v512
    %2344 = vmatprep.subr.mxu0 0.0
    %2345 = vmatpush1.msra.mxu0 %v507
    %2346 = vmatprep.subr.mxu0 0.0
    %2347 = vmatpush2.msra.mxu0 0.0
    %2348 = vmatprep.subr.mxu0 0.0
    %2349 = vmatpush2.msra.mxu0 0.0
    %2350 = vmatprep.subr.mxu0 0.0
    %2351 = vmatpush2.msra.mxu0 0.0
    %2352 = vmatprep.subr.mxu0 0.0
    %2353 = vmatpush2.msra.mxu0 0.0
    %2354 = vmatprep.subr.mxu0 0.0
    %2355 = vmatpush2.msra.mxu0 0.0
    %2356 = vmatprep.subr.mxu0 0.0
    %2357 = vmatpush2.msra.mxu0 0.0
    %2358 = vmatprep.subr.mxu0 0.0
    %2359 = vmatpush2.msra.mxu0 0.0
    %2360 = vmatprep.subr.mxu0 0.0
    %2361 = vmatpush2.msra.mxu0 0.0
    %2362 = vmatprep.subr.mxu0 0.0
    %2363 = vmatpush2.msra.mxu0 0.0
    %2364 = vmatprep.subr.mxu0 0.0
    %2365 = vmatpush2.msra.mxu0 0.0
    %2366 = vmatprep.subr.mxu0 0.0
    %2367 = vmatpush2.msra.mxu0 0.0
    %2368 = vmatprep.subr.mxu0 0.0
    %2369 = vmatpush2.msra.mxu0 0.0
    %2370 = vmatprep.subr.mxu0 0.0
    %2371 = vmatpush2.msra.mxu0 0.0
    %2372 = vmatprep.subr.mxu0 0.0
    %2373 = vmatpush2.msra.mxu0 0.0
    %2374 = vmatprep.subr.mxu0 0.0
    %2375 = vmatpush2.msra.mxu0 0.0
    %2376 = vmatprep.subr.mxu0 0.0
    %2377 = vmatpush2.msra.mxu0 0.0
    %2378 = vmatprep.mubr.f32.mxu0 0.0
    %2379 = vmatmul.mubr.f32.gmra.mxu0 %v2309
    %v2380 = vpop.f32.mrf.mxu0
    %v2381 = vadd.f32 0.0, %v2380
    %v2382 = vpop.f32.mrf.mxu0
    %2383 = vmatprep.mubr.f32.mxu0 0.0
    %2384 = vmatmul.mubr.f32.gmra.mxu0 %v2312
    %v2385 = vpop.f32.mrf.mxu0
    %v2386 = vadd.f32 0.0, %v2385
    %v2387 = vpop.f32.mrf.mxu0
    %2388 = vdwg.mxu0
    %v2390 = vsel %vm79, %v1962, 0
    %v2393 = vsel %vm79, %v1963, 0
    %2395 = vmatprep.subr.mxu0 0.0
    %2396 = vmatpush1.msra.mxu0 0.0
    %2397 = vmatprep.subr.mxu0 0.0
    %2398 = vmatpush1.msra.mxu0 0.0
    %2399 = vmatprep.subr.mxu0 0.0
    %2400 = vmatpush1.msra.mxu0 0.0
    %2401 = vmatprep.subr.mxu0 0.0
    %2402 = vmatpush1.msra.mxu0 0.0
    %2403 = vmatprep.subr.mxu0 0.0
    %2404 = vmatpush1.msra.mxu0 0.0
    %2405 = vmatprep.subr.mxu0 0.0
    %2406 = vmatpush1.msra.mxu0 0.0
    %2407 = vmatprep.subr.mxu0 0.0
    %2408 = vmatpush1.msra.mxu0 0.0
    %2409 = vmatprep.subr.mxu0 0.0
    %2410 = vmatpush1.msra.mxu0 0.0
    %2411 = vmatprep.subr.mxu0 0.0
    %2412 = vmatpush1.msra.mxu0 0.0
    %2413 = vmatprep.subr.mxu0 0.0
    %2414 = vmatpush1.msra.mxu0 0.0
    %2415 = vmatprep.subr.mxu0 0.0
    %2416 = vmatpush1.msra.mxu0 0.0
    %2417 = vmatprep.subr.mxu0 0.0
    %2418 = vmatpush1.msra.mxu0 0.0
    %2419 = vmatprep.subr.mxu0 0.0
    %2420 = vmatpush1.msra.mxu0 0.0
    %2421 = vmatprep.subr.mxu0 0.0
    %2422 = vmatpush1.msra.mxu0 0.0
    %2423 = vmatprep.subr.mxu0 0.0
    %2424 = vmatpush1.msra.mxu0 %v599
    %2425 = vmatprep.subr.mxu0 0.0
    %2426 = vmatpush1.msra.mxu0 %v594
    %2427 = vmatprep.subr.mxu0 0.0
    %2428 = vmatpush2.msra.mxu0 0.0
    %2429 = vmatprep.subr.mxu0 0.0
    %2430 = vmatpush2.msra.mxu0 0.0
    %2431 = vmatprep.subr.mxu0 0.0
    %2432 = vmatpush2.msra.mxu0 0.0
    %2433 = vmatprep.subr.mxu0 0.0
    %2434 = vmatpush2.msra.mxu0 0.0
    %2435 = vmatprep.subr.mxu0 0.0
    %2436 = vmatpush2.msra.mxu0 0.0
    %2437 = vmatprep.subr.mxu0 0.0
    %2438 = vmatpush2.msra.mxu0 0.0
    %2439 = vmatprep.subr.mxu0 0.0
    %2440 = vmatpush2.msra.mxu0 0.0
    %2441 = vmatprep.subr.mxu0 0.0
    %2442 = vmatpush2.msra.mxu0 0.0
    %2443 = vmatprep.subr.mxu0 0.0
    %2444 = vmatpush2.msra.mxu0 0.0
    %2445 = vmatprep.subr.mxu0 0.0
    %2446 = vmatpush2.msra.mxu0 0.0
    %2447 = vmatprep.subr.mxu0 0.0
    %2448 = vmatpush2.msra.mxu0 0.0
    %2449 = vmatprep.subr.mxu0 0.0
    %2450 = vmatpush2.msra.mxu0 0.0
    %2451 = vmatprep.subr.mxu0 0.0
    %2452 = vmatpush2.msra.mxu0 0.0
    %2453 = vmatprep.subr.mxu0 0.0
    %2454 = vmatpush2.msra.mxu0 0.0
    %2455 = vmatprep.subr.mxu0 0.0
    %2456 = vmatpush2.msra.mxu0 0.0
    %2457 = vmatprep.subr.mxu0 0.0
    %2458 = vmatpush2.msra.mxu0 0.0
    %2459 = vmatprep.mubr.f32.mxu0 0.0
    %2460 = vmatmul.mubr.f32.gmra.mxu0 %v2390
    %v2461 = vpop.f32.mrf.mxu0
    %v2462 = vadd.f32 0.0, %v2461
    %v2463 = vpop.f32.mrf.mxu0
    %2464 = vmatprep.mubr.f32.mxu0 0.0
    %2465 = vmatmul.mubr.f32.gmra.mxu0 %v2393
    %v2466 = vpop.f32.mrf.mxu0
    %v2467 = vadd.f32 0.0, %v2466
    %v2468 = vpop.f32.mrf.mxu0
    %2469 = vdwg.mxu0
    %v2471 = vsel %vm79, %v1964, 0
    %v2474 = vsel %vm79, %v1965, 0
    %2476 = vmatprep.subr.mxu0 0.0
    %2477 = vmatpush1.msra.mxu0 0.0
    %2478 = vmatprep.subr.mxu0 0.0
    %2479 = vmatpush1.msra.mxu0 0.0
    %2480 = vmatprep.subr.mxu0 0.0
    %2481 = vmatpush1.msra.mxu0 0.0
    %2482 = vmatprep.subr.mxu0 0.0
    %2483 = vmatpush1.msra.mxu0 0.0
    %2484 = vmatprep.subr.mxu0 0.0
    %2485 = vmatpush1.msra.mxu0 0.0
    %2486 = vmatprep.subr.mxu0 0.0
    %2487 = vmatpush1.msra.mxu0 0.0
    %2488 = vmatprep.subr.mxu0 0.0
    %2489 = vmatpush1.msra.mxu0 0.0
    %2490 = vmatprep.subr.mxu0 0.0
    %2491 = vmatpush1.msra.mxu0 0.0
    %2492 = vmatprep.subr.mxu0 0.0
    %2493 = vmatpush1.msra.mxu0 0.0
    %2494 = vmatprep.subr.mxu0 0.0
    %2495 = vmatpush1.msra.mxu0 0.0
    %2496 = vmatprep.subr.mxu0 0.0
    %2497 = vmatpush1.msra.mxu0 0.0
    %2498 = vmatprep.subr.mxu0 0.0
    %2499 = vmatpush1.msra.mxu0 0.0
    %2500 = vmatprep.subr.mxu0 0.0
    %2501 = vmatpush1.msra.mxu0 0.0
    %2502 = vmatprep.subr.mxu0 0.0
    %2503 = vmatpush1.msra.mxu0 0.0
    %2504 = vmatprep.subr.mxu0 0.0
    %2505 = vmatpush1.msra.mxu0 %v686
    %2506 = vmatprep.subr.mxu0 0.0
    %2507 = vmatpush1.msra.mxu0 %v681
    %2508 = vmatprep.subr.mxu0 0.0
    %2509 = vmatpush2.msra.mxu0 0.0
    %2510 = vmatprep.subr.mxu0 0.0
    %2511 = vmatpush2.msra.mxu0 0.0
    %2512 = vmatprep.subr.mxu0 0.0
    %2513 = vmatpush2.msra.mxu0 0.0
    %2514 = vmatprep.subr.mxu0 0.0
    %2515 = vmatpush2.msra.mxu0 0.0
    %2516 = vmatprep.subr.mxu0 0.0
    %2517 = vmatpush2.msra.mxu0 0.0
    %2518 = vmatprep.subr.mxu0 0.0
    %2519 = vmatpush2.msra.mxu0 0.0
    %2520 = vmatprep.subr.mxu0 0.0
    %2521 = vmatpush2.msra.mxu0 0.0
    %2522 = vmatprep.subr.mxu0 0.0
    %2523 = vmatpush2.msra.mxu0 0.0
    %2524 = vmatprep.subr.mxu0 0.0
    %2525 = vmatpush2.msra.mxu0 0.0
    %2526 = vmatprep.subr.mxu0 0.0
    %2527 = vmatpush2.msra.mxu0 0.0
    %2528 = vmatprep.subr.mxu0 0.0
    %2529 = vmatpush2.msra.mxu0 0.0
    %2530 = vmatprep.subr.mxu0 0.0
    %2531 = vmatpush2.msra.mxu0 0.0
    %2532 = vmatprep.subr.mxu0 0.0
    %2533 = vmatpush2.msra.mxu0 0.0
    %2534 = vmatprep.subr.mxu0 0.0
    %2535 = vmatpush2.msra.mxu0 0.0
    %2536 = vmatprep.subr.mxu0 0.0
    %2537 = vmatpush2.msra.mxu0 0.0
    %2538 = vmatprep.subr.mxu0 0.0
    %2539 = vmatpush2.msra.mxu0 0.0
    %2540 = vmatprep.mubr.f32.mxu0 0.0
    %2541 = vmatmul.mubr.f32.gmra.mxu0 %v2471
    %v2542 = vpop.f32.mrf.mxu0
    %v2543 = vadd.f32 0.0, %v2542
    %v2544 = vpop.f32.mrf.mxu0
    %2545 = vmatprep.mubr.f32.mxu0 0.0
    %2546 = vmatmul.mubr.f32.gmra.mxu0 %v2474
    %v2547 = vpop.f32.mrf.mxu0
    %v2548 = vadd.f32 0.0, %v2547
    %v2549 = vpop.f32.mrf.mxu0
    %2550 = vdwg.mxu0
    %v2552 = vsel %vm79, %v1966, 0
    %v2555 = vsel %vm79, %v1967, 0
    %2557 = vmatprep.subr.mxu0 0.0
    %2558 = vmatpush1.msra.mxu0 0.0
    %2559 = vmatprep.subr.mxu0 0.0
    %2560 = vmatpush1.msra.mxu0 0.0
    %2561 = vmatprep.subr.mxu0 0.0
    %2562 = vmatpush1.msra.mxu0 0.0
    %2563 = vmatprep.subr.mxu0 0.0
    %2564 = vmatpush1.msra.mxu0 0.0
    %2565 = vmatprep.subr.mxu0 0.0
    %2566 = vmatpush1.msra.mxu0 0.0
    %2567 = vmatprep.subr.mxu0 0.0
    %2568 = vmatpush1.msra.mxu0 0.0
    %2569 = vmatprep.subr.mxu0 0.0
    %2570 = vmatpush1.msra.mxu0 0.0
    %2571 = vmatprep.subr.mxu0 0.0
    %2572 = vmatpush1.msra.mxu0 0.0
    %2573 = vmatprep.subr.mxu0 0.0
    %2574 = vmatpush1.msra.mxu0 0.0
    %2575 = vmatprep.subr.mxu0 0.0
    %2576 = vmatpush1.msra.mxu0 0.0
    %2577 = vmatprep.subr.mxu0 0.0
    %2578 = vmatpush1.msra.mxu0 0.0
    %2579 = vmatprep.subr.mxu0 0.0
    %2580 = vmatpush1.msra.mxu0 0.0
    %2581 = vmatprep.subr.mxu0 0.0
    %2582 = vmatpush1.msra.mxu0 0.0
    %2583 = vmatprep.subr.mxu0 0.0
    %2584 = vmatpush1.msra.mxu0 0.0
    %2585 = vmatprep.subr.mxu0 0.0
    %2586 = vmatpush1.msra.mxu0 %v773
    %2587 = vmatprep.subr.mxu0 0.0
    %2588 = vmatpush1.msra.mxu0 %v768
    %2589 = vmatprep.subr.mxu0 0.0
    %2590 = vmatpush2.msra.mxu0 0.0
    %2591 = vmatprep.subr.mxu0 0.0
    %2592 = vmatpush2.msra.mxu0 0.0
    %2593 = vmatprep.subr.mxu0 0.0
    %2594 = vmatpush2.msra.mxu0 0.0
    %2595 = vmatprep.subr.mxu0 0.0
    %2596 = vmatpush2.msra.mxu0 0.0
    %2597 = vmatprep.subr.mxu0 0.0
    %2598 = vmatpush2.msra.mxu0 0.0
    %2599 = vmatprep.subr.mxu0 0.0
    %2600 = vmatpush2.msra.mxu0 0.0
    %2601 = vmatprep.subr.mxu0 0.0
    %2602 = vmatpush2.msra.mxu0 0.0
    %2603 = vmatprep.subr.mxu0 0.0
    %2604 = vmatpush2.msra.mxu0 0.0
    %2605 = vmatprep.subr.mxu0 0.0
    %2606 = vmatpush2.msra.mxu0 0.0
    %2607 = vmatprep.subr.mxu0 0.0
    %2608 = vmatpush2.msra.mxu0 0.0
    %2609 = vmatprep.subr.mxu0 0.0
    %2610 = vmatpush2.msra.mxu0 0.0
    %2611 = vmatprep.subr.mxu0 0.0
    %2612 = vmatpush2.msra.mxu0 0.0
    %2613 = vmatprep.subr.mxu0 0.0
    %2614 = vmatpush2.msra.mxu0 0.0
    %2615 = vmatprep.subr.mxu0 0.0
    %2616 = vmatpush2.msra.mxu0 0.0
    %2617 = vmatprep.subr.mxu0 0.0
    %2618 = vmatpush2.msra.mxu0 0.0
    %2619 = vmatprep.subr.mxu0 0.0
    %2620 = vmatpush2.msra.mxu0 0.0
    %2621 = vmatprep.mubr.f32.mxu0 0.0
    %2622 = vmatmul.mubr.f32.gmra.mxu0 %v2552
    %v2623 = vpop.f32.mrf.mxu0
    %v2624 = vadd.f32 0.0, %v2623
    %v2625 = vpop.f32.mrf.mxu0
    %2626 = vmatprep.mubr.f32.mxu0 0.0
    %2627 = vmatmul.mubr.f32.gmra.mxu0 %v2555
    %v2628 = vpop.f32.mrf.mxu0
    %v2629 = vadd.f32 0.0, %v2628
    %v2630 = vpop.f32.mrf.mxu0
    %2631 = vdwg.mxu0
    %v2633 = vsel %vm79, %v1968, 0
    %v2636 = vsel %vm79, %v1969, 0
    %2638 = vmatprep.subr.mxu0 0.0
    %2639 = vmatpush1.msra.mxu0 0.0
    %2640 = vmatprep.subr.mxu0 0.0
    %2641 = vmatpush1.msra.mxu0 0.0
    %2642 = vmatprep.subr.mxu0 0.0
    %2643 = vmatpush1.msra.mxu0 0.0
    %2644 = vmatprep.subr.mxu0 0.0
    %2645 = vmatpush1.msra.mxu0 0.0
    %2646 = vmatprep.subr.mxu0 0.0
    %2647 = vmatpush1.msra.mxu0 0.0
    %2648 = vmatprep.subr.mxu0 0.0
    %2649 = vmatpush1.msra.mxu0 0.0
    %2650 = vmatprep.subr.mxu0 0.0
    %2651 = vmatpush1.msra.mxu0 0.0
    %2652 = vmatprep.subr.mxu0 0.0
    %2653 = vmatpush1.msra.mxu0 0.0
    %2654 = vmatprep.subr.mxu0 0.0
    %2655 = vmatpush1.msra.mxu0 0.0
    %2656 = vmatprep.subr.mxu0 0.0
    %2657 = vmatpush1.msra.mxu0 0.0
    %2658 = vmatprep.subr.mxu0 0.0
    %2659 = vmatpush1.msra.mxu0 0.0
    %2660 = vmatprep.subr.mxu0 0.0
    %2661 = vmatpush1.msra.mxu0 0.0
    %2662 = vmatprep.subr.mxu0 0.0
    %2663 = vmatpush1.msra.mxu0 0.0
    %2664 = vmatprep.subr.mxu0 0.0
    %2665 = vmatpush1.msra.mxu0 0.0
    %2666 = vmatprep.subr.mxu0 0.0
    %2667 = vmatpush1.msra.mxu0 %v860
    %2668 = vmatprep.subr.mxu0 0.0
    %2669 = vmatpush1.msra.mxu0 %v855
    %2670 = vmatprep.subr.mxu0 0.0
    %2671 = vmatpush2.msra.mxu0 0.0
    %2672 = vmatprep.subr.mxu0 0.0
    %2673 = vmatpush2.msra.mxu0 0.0
    %2674 = vmatprep.subr.mxu0 0.0
    %2675 = vmatpush2.msra.mxu0 0.0
    %2676 = vmatprep.subr.mxu0 0.0
    %2677 = vmatpush2.msra.mxu0 0.0
    %2678 = vmatprep.subr.mxu0 0.0
    %2679 = vmatpush2.msra.mxu0 0.0
    %2680 = vmatprep.subr.mxu0 0.0
    %2681 = vmatpush2.msra.mxu0 0.0
    %2682 = vmatprep.subr.mxu0 0.0
    %2683 = vmatpush2.msra.mxu0 0.0
    %2684 = vmatprep.subr.mxu0 0.0
    %2685 = vmatpush2.msra.mxu0 0.0
    %2686 = vmatprep.subr.mxu0 0.0
    %2687 = vmatpush2.msra.mxu0 0.0
    %2688 = vmatprep.subr.mxu0 0.0
    %2689 = vmatpush2.msra.mxu0 0.0
    %2690 = vmatprep.subr.mxu0 0.0
    %2691 = vmatpush2.msra.mxu0 0.0
    %2692 = vmatprep.subr.mxu0 0.0
    %2693 = vmatpush2.msra.mxu0 0.0
    %2694 = vmatprep.subr.mxu0 0.0
    %2695 = vmatpush2.msra.mxu0 0.0
    %2696 = vmatprep.subr.mxu0 0.0
    %2697 = vmatpush2.msra.mxu0 0.0
    %2698 = vmatprep.subr.mxu0 0.0
    %2699 = vmatpush2.msra.mxu0 0.0
    %2700 = vmatprep.subr.mxu0 0.0
    %2701 = vmatpush2.msra.mxu0 0.0
    %2702 = vmatprep.mubr.f32.mxu0 0.0
    %2703 = vmatmul.mubr.f32.gmra.mxu0 %v2633
    %v2704 = vpop.f32.mrf.mxu0
    %v2705 = vadd.f32 0.0, %v2704
    %v2706 = vpop.f32.mrf.mxu0
    %2707 = vmatprep.mubr.f32.mxu0 0.0
    %2708 = vmatmul.mubr.f32.gmra.mxu0 %v2636
    %v2709 = vpop.f32.mrf.mxu0
    %v2710 = vadd.f32 0.0, %v2709
    %v2711 = vpop.f32.mrf.mxu0
    %2712 = vdwg.mxu0
    %v2714 = vsel %vm79, %v1970, 0
    %v2717 = vsel %vm79, %v1971, 0
    %2719 = vmatprep.subr.mxu0 0.0
    %2720 = vmatpush1.msra.mxu0 0.0
    %2721 = vmatprep.subr.mxu0 0.0
    %2722 = vmatpush1.msra.mxu0 0.0
    %2723 = vmatprep.subr.mxu0 0.0
    %2724 = vmatpush1.msra.mxu0 0.0
    %2725 = vmatprep.subr.mxu0 0.0
    %2726 = vmatpush1.msra.mxu0 0.0
    %2727 = vmatprep.subr.mxu0 0.0
    %2728 = vmatpush1.msra.mxu0 0.0
    %2729 = vmatprep.subr.mxu0 0.0
    %2730 = vmatpush1.msra.mxu0 0.0
    %2731 = vmatprep.subr.mxu0 0.0
    %2732 = vmatpush1.msra.mxu0 0.0
    %2733 = vmatprep.subr.mxu0 0.0
    %2734 = vmatpush1.msra.mxu0 0.0
    %2735 = vmatprep.subr.mxu0 0.0
    %2736 = vmatpush1.msra.mxu0 0.0
    %2737 = vmatprep.subr.mxu0 0.0
    %2738 = vmatpush1.msra.mxu0 0.0
    %2739 = vmatprep.subr.mxu0 0.0
    %2740 = vmatpush1.msra.mxu0 0.0
    %2741 = vmatprep.subr.mxu0 0.0
    %2742 = vmatpush1.msra.mxu0 0.0
    %2743 = vmatprep.subr.mxu0 0.0
    %2744 = vmatpush1.msra.mxu0 0.0
    %2745 = vmatprep.subr.mxu0 0.0
    %2746 = vmatpush1.msra.mxu0 0.0
    %2747 = vmatprep.subr.mxu0 0.0
    %2748 = vmatpush1.msra.mxu0 %v947
    %2749 = vmatprep.subr.mxu0 0.0
    %2750 = vmatpush1.msra.mxu0 %v942
    %2751 = vmatprep.subr.mxu0 0.0
    %2752 = vmatpush2.msra.mxu0 0.0
    %2753 = vmatprep.subr.mxu0 0.0
    %2754 = vmatpush2.msra.mxu0 0.0
    %2755 = vmatprep.subr.mxu0 0.0
    %2756 = vmatpush2.msra.mxu0 0.0
    %2757 = vmatprep.subr.mxu0 0.0
    %2758 = vmatpush2.msra.mxu0 0.0
    %2759 = vmatprep.subr.mxu0 0.0
    %2760 = vmatpush2.msra.mxu0 0.0
    %2761 = vmatprep.subr.mxu0 0.0
    %2762 = vmatpush2.msra.mxu0 0.0
    %2763 = vmatprep.subr.mxu0 0.0
    %2764 = vmatpush2.msra.mxu0 0.0
    %2765 = vmatprep.subr.mxu0 0.0
    %2766 = vmatpush2.msra.mxu0 0.0
    %2767 = vmatprep.subr.mxu0 0.0
    %2768 = vmatpush2.msra.mxu0 0.0
    %2769 = vmatprep.subr.mxu0 0.0
    %2770 = vmatpush2.msra.mxu0 0.0
    %2771 = vmatprep.subr.mxu0 0.0
    %2772 = vmatpush2.msra.mxu0 0.0
    %2773 = vmatprep.subr.mxu0 0.0
    %2774 = vmatpush2.msra.mxu0 0.0
    %2775 = vmatprep.subr.mxu0 0.0
    %2776 = vmatpush2.msra.mxu0 0.0
    %2777 = vmatprep.subr.mxu0 0.0
    %2778 = vmatpush2.msra.mxu0 0.0
    %2779 = vmatprep.subr.mxu0 0.0
    %2780 = vmatpush2.msra.mxu0 0.0
    %2781 = vmatprep.subr.mxu0 0.0
    %2782 = vmatpush2.msra.mxu0 0.0
    %2783 = vmatprep.mubr.f32.mxu0 0.0
    %2784 = vmatmul.mubr.f32.gmra.mxu0 %v2714
    %v2785 = vpop.f32.mrf.mxu0
    %v2786 = vadd.f32 0.0, %v2785
    %v2787 = vpop.f32.mrf.mxu0
    %2788 = vmatprep.mubr.f32.mxu0 0.0
    %2789 = vmatmul.mubr.f32.gmra.mxu0 %v2717
    %v2790 = vpop.f32.mrf.mxu0
    %v2791 = vadd.f32 0.0, %v2790
    %v2792 = vpop.f32.mrf.mxu0
    %2793 = vdwg.mxu0
    %v2795 = vsel %vm79, %v1972, 0
    %v2798 = vsel %vm79, %v1973, 0
    %2800 = vmatprep.subr.mxu0 0.0
    %2801 = vmatpush1.msra.mxu0 0.0
    %2802 = vmatprep.subr.mxu0 0.0
    %2803 = vmatpush1.msra.mxu0 0.0
    %2804 = vmatprep.subr.mxu0 0.0
    %2805 = vmatpush1.msra.mxu0 0.0
    %2806 = vmatprep.subr.mxu0 0.0
    %2807 = vmatpush1.msra.mxu0 0.0
    %2808 = vmatprep.subr.mxu0 0.0
    %2809 = vmatpush1.msra.mxu0 0.0
    %2810 = vmatprep.subr.mxu0 0.0
    %2811 = vmatpush1.msra.mxu0 0.0
    %2812 = vmatprep.subr.mxu0 0.0
    %2813 = vmatpush1.msra.mxu0 0.0
    %2814 = vmatprep.subr.mxu0 0.0
    %2815 = vmatpush1.msra.mxu0 0.0
    %2816 = vmatprep.subr.mxu0 0.0
    %2817 = vmatpush1.msra.mxu0 0.0
    %2818 = vmatprep.subr.mxu0 0.0
    %2819 = vmatpush1.msra.mxu0 0.0
    %2820 = vmatprep.subr.mxu0 0.0
    %2821 = vmatpush1.msra.mxu0 0.0
    %2822 = vmatprep.subr.mxu0 0.0
    %2823 = vmatpush1.msra.mxu0 0.0
    %2824 = vmatprep.subr.mxu0 0.0
    %2825 = vmatpush1.msra.mxu0 0.0
    %2826 = vmatprep.subr.mxu0 0.0
    %2827 = vmatpush1.msra.mxu0 0.0
    %2828 = vmatprep.subr.mxu0 0.0
    %2829 = vmatpush1.msra.mxu0 %v1034
    %2830 = vmatprep.subr.mxu0 0.0
    %2831 = vmatpush1.msra.mxu0 %v1029
    %2832 = vmatprep.subr.mxu0 0.0
    %2833 = vmatpush2.msra.mxu0 0.0
    %2834 = vmatprep.subr.mxu0 0.0
    %2835 = vmatpush2.msra.mxu0 0.0
    %2836 = vmatprep.subr.mxu0 0.0
    %2837 = vmatpush2.msra.mxu0 0.0
    %2838 = vmatprep.subr.mxu0 0.0
    %2839 = vmatpush2.msra.mxu0 0.0
    %2840 = vmatprep.subr.mxu0 0.0
    %2841 = vmatpush2.msra.mxu0 0.0
    %2842 = vmatprep.subr.mxu0 0.0
    %2843 = vmatpush2.msra.mxu0 0.0
    %2844 = vmatprep.subr.mxu0 0.0
    %2845 = vmatpush2.msra.mxu0 0.0
    %2846 = vmatprep.subr.mxu0 0.0
    %2847 = vmatpush2.msra.mxu0 0.0
    %2848 = vmatprep.subr.mxu0 0.0
    %2849 = vmatpush2.msra.mxu0 0.0
    %2850 = vmatprep.subr.mxu0 0.0
    %2851 = vmatpush2.msra.mxu0 0.0
    %2852 = vmatprep.subr.mxu0 0.0
    %2853 = vmatpush2.msra.mxu0 0.0
    %2854 = vmatprep.subr.mxu0 0.0
    %2855 = vmatpush2.msra.mxu0 0.0
    %2856 = vmatprep.subr.mxu0 0.0
    %2857 = vmatpush2.msra.mxu0 0.0
    %2858 = vmatprep.subr.mxu0 0.0
    %2859 = vmatpush2.msra.mxu0 0.0
    %2860 = vmatprep.subr.mxu0 0.0
    %2861 = vmatpush2.msra.mxu0 0.0
    %2862 = vmatprep.subr.mxu0 0.0
    %2863 = vmatpush2.msra.mxu0 0.0
    %2864 = vmatprep.mubr.f32.mxu0 0.0
    %2865 = vmatmul.mubr.f32.gmra.mxu0 %v2795
    %v2866 = vpop.f32.mrf.mxu0
    %v2867 = vadd.f32 0.0, %v2866
    %v2868 = vpop.f32.mrf.mxu0
    %2869 = vmatprep.mubr.f32.mxu0 0.0
    %2870 = vmatmul.mubr.f32.gmra.mxu0 %v2798
    %v2871 = vpop.f32.mrf.mxu0
    %v2872 = vadd.f32 0.0, %v2871
    %v2873 = vpop.f32.mrf.mxu0
    %2874 = vdwg.mxu0
    %v2876 = vsel %vm79, %v1974, 0
    %v2879 = vsel %vm79, %v1975, 0
    %2881 = vmatprep.subr.mxu0 0.0
    %2882 = vmatpush1.msra.mxu0 0.0
    %2883 = vmatprep.subr.mxu0 0.0
    %2884 = vmatpush1.msra.mxu0 0.0
    %2885 = vmatprep.subr.mxu0 0.0
    %2886 = vmatpush1.msra.mxu0 0.0
    %2887 = vmatprep.subr.mxu0 0.0
    %2888 = vmatpush1.msra.mxu0 0.0
    %2889 = vmatprep.subr.mxu0 0.0
    %2890 = vmatpush1.msra.mxu0 0.0
    %2891 = vmatprep.subr.mxu0 0.0
    %2892 = vmatpush1.msra.mxu0 0.0
    %2893 = vmatprep.subr.mxu0 0.0
    %2894 = vmatpush1.msra.mxu0 0.0
    %2895 = vmatprep.subr.mxu0 0.0
    %2896 = vmatpush1.msra.mxu0 0.0
    %2897 = vmatprep.subr.mxu0 0.0
    %2898 = vmatpush1.msra.mxu0 0.0
    %2899 = vmatprep.subr.mxu0 0.0
    %2900 = vmatpush1.msra.mxu0 0.0
    %2901 = vmatprep.subr.mxu0 0.0
    %2902 = vmatpush1.msra.mxu0 0.0
    %2903 = vmatprep.subr.mxu0 0.0
    %2904 = vmatpush1.msra.mxu0 0.0
    %2905 = vmatprep.subr.mxu0 0.0
    %2906 = vmatpush1.msra.mxu0 0.0
    %2907 = vmatprep.subr.mxu0 0.0
    %2908 = vmatpush1.msra.mxu0 0.0
    %2909 = vmatprep.subr.mxu0 0.0
    %2910 = vmatpush1.msra.mxu0 %v1121
    %2911 = vmatprep.subr.mxu0 0.0
    %2912 = vmatpush1.msra.mxu0 %v1116
    %2913 = vmatprep.subr.mxu0 0.0
    %2914 = vmatpush2.msra.mxu0 0.0
    %2915 = vmatprep.subr.mxu0 0.0
    %2916 = vmatpush2.msra.mxu0 0.0
    %2917 = vmatprep.subr.mxu0 0.0
    %2918 = vmatpush2.msra.mxu0 0.0
    %2919 = vmatprep.subr.mxu0 0.0
    %2920 = vmatpush2.msra.mxu0 0.0
    %2921 = vmatprep.subr.mxu0 0.0
    %2922 = vmatpush2.msra.mxu0 0.0
    %2923 = vmatprep.subr.mxu0 0.0
    %2924 = vmatpush2.msra.mxu0 0.0
    %2925 = vmatprep.subr.mxu0 0.0
    %2926 = vmatpush2.msra.mxu0 0.0
    %2927 = vmatprep.subr.mxu0 0.0
    %2928 = vmatpush2.msra.mxu0 0.0
    %2929 = vmatprep.subr.mxu0 0.0
    %2930 = vmatpush2.msra.mxu0 0.0
    %2931 = vmatprep.subr.mxu0 0.0
    %2932 = vmatpush2.msra.mxu0 0.0
    %2933 = vmatprep.subr.mxu0 0.0
    %2934 = vmatpush2.msra.mxu0 0.0
    %2935 = vmatprep.subr.mxu0 0.0
    %2936 = vmatpush2.msra.mxu0 0.0
    %2937 = vmatprep.subr.mxu0 0.0
    %2938 = vmatpush2.msra.mxu0 0.0
    %2939 = vmatprep.subr.mxu0 0.0
    %2940 = vmatpush2.msra.mxu0 0.0
    %2941 = vmatprep.subr.mxu0 0.0
    %2942 = vmatpush2.msra.mxu0 0.0
    %2943 = vmatprep.subr.mxu0 0.0
    %2944 = vmatpush2.msra.mxu0 0.0
    %2945 = vmatprep.mubr.f32.mxu0 0.0
    %2946 = vmatmul.mubr.f32.gmra.mxu0 %v2876
    %v2947 = vpop.f32.mrf.mxu0
    %v2948 = vadd.f32 0.0, %v2947
    %v2949 = vpop.f32.mrf.mxu0
    %2950 = vmatprep.mubr.f32.mxu0 0.0
    %2951 = vmatmul.mubr.f32.gmra.mxu0 %v2879
    %v2952 = vpop.f32.mrf.mxu0
    %v2953 = vadd.f32 0.0, %v2952
    %v2954 = vpop.f32.mrf.mxu0
    %2955 = vdwg.mxu0
    %v2957 = vsel %vm79, %v1976, 0
    %v2960 = vsel %vm79, %v1977, 0
    %2962 = vmatprep.subr.mxu0 0.0
    %2963 = vmatpush1.msra.mxu0 0.0
    %2964 = vmatprep.subr.mxu0 0.0
    %2965 = vmatpush1.msra.mxu0 0.0
    %2966 = vmatprep.subr.mxu0 0.0
    %2967 = vmatpush1.msra.mxu0 0.0
    %2968 = vmatprep.subr.mxu0 0.0
    %2969 = vmatpush1.msra.mxu0 0.0
    %2970 = vmatprep.subr.mxu0 0.0
    %2971 = vmatpush1.msra.mxu0 0.0
    %2972 = vmatprep.subr.mxu0 0.0
    %2973 = vmatpush1.msra.mxu0 0.0
    %2974 = vmatprep.subr.mxu0 0.0
    %2975 = vmatpush1.msra.mxu0 0.0
    %2976 = vmatprep.subr.mxu0 0.0
    %2977 = vmatpush1.msra.mxu0 0.0
    %2978 = vmatprep.subr.mxu0 0.0
    %2979 = vmatpush1.msra.mxu0 0.0
    %2980 = vmatprep.subr.mxu0 0.0
    %2981 = vmatpush1.msra.mxu0 0.0
    %2982 = vmatprep.subr.mxu0 0.0
    %2983 = vmatpush1.msra.mxu0 0.0
    %2984 = vmatprep.subr.mxu0 0.0
    %2985 = vmatpush1.msra.mxu0 0.0
    %2986 = vmatprep.subr.mxu0 0.0
    %2987 = vmatpush1.msra.mxu0 0.0
    %2988 = vmatprep.subr.mxu0 0.0
    %2989 = vmatpush1.msra.mxu0 0.0
    %2990 = vmatprep.subr.mxu0 0.0
    %2991 = vmatpush1.msra.mxu0 %v1208
    %2992 = vmatprep.subr.mxu0 0.0
    %2993 = vmatpush1.msra.mxu0 %v1203
    %2994 = vmatprep.subr.mxu0 0.0
    %2995 = vmatpush2.msra.mxu0 0.0
    %2996 = vmatprep.subr.mxu0 0.0
    %2997 = vmatpush2.msra.mxu0 0.0
    %2998 = vmatprep.subr.mxu0 0.0
    %2999 = vmatpush2.msra.mxu0 0.0
    %3000 = vmatprep.subr.mxu0 0.0
    %3001 = vmatpush2.msra.mxu0 0.0
    %3002 = vmatprep.subr.mxu0 0.0
    %3003 = vmatpush2.msra.mxu0 0.0
    %3004 = vmatprep.subr.mxu0 0.0
    %3005 = vmatpush2.msra.mxu0 0.0
    %3006 = vmatprep.subr.mxu0 0.0
    %3007 = vmatpush2.msra.mxu0 0.0
    %3008 = vmatprep.subr.mxu0 0.0
    %3009 = vmatpush2.msra.mxu0 0.0
    %3010 = vmatprep.subr.mxu0 0.0
    %3011 = vmatpush2.msra.mxu0 0.0
    %3012 = vmatprep.subr.mxu0 0.0
    %3013 = vmatpush2.msra.mxu0 0.0
    %3014 = vmatprep.subr.mxu0 0.0
    %3015 = vmatpush2.msra.mxu0 0.0
    %3016 = vmatprep.subr.mxu0 0.0
    %3017 = vmatpush2.msra.mxu0 0.0
    %3018 = vmatprep.subr.mxu0 0.0
    %3019 = vmatpush2.msra.mxu0 0.0
    %3020 = vmatprep.subr.mxu0 0.0
    %3021 = vmatpush2.msra.mxu0 0.0
    %3022 = vmatprep.subr.mxu0 0.0
    %3023 = vmatpush2.msra.mxu0 0.0
    %3024 = vmatprep.subr.mxu0 0.0
    %3025 = vmatpush2.msra.mxu0 0.0
    %3026 = vmatprep.mubr.f32.mxu0 0.0
    %3027 = vmatmul.mubr.f32.gmra.mxu0 %v2957
    %v3028 = vpop.f32.mrf.mxu0
    %v3029 = vadd.f32 0.0, %v3028
    %v3030 = vpop.f32.mrf.mxu0
    %3031 = vmatprep.mubr.f32.mxu0 0.0
    %3032 = vmatmul.mubr.f32.gmra.mxu0 %v2960
    %v3033 = vpop.f32.mrf.mxu0
    %v3034 = vadd.f32 0.0, %v3033
    %v3035 = vpop.f32.mrf.mxu0
    %3036 = vdwg.mxu0
    %v3038 = vsel %vm79, %v1978, 0
    %v3041 = vsel %vm79, %v1979, 0
    %3043 = vmatprep.subr.mxu0 0.0
    %3044 = vmatpush1.msra.mxu0 0.0
    %3045 = vmatprep.subr.mxu0 0.0
    %3046 = vmatpush1.msra.mxu0 0.0
    %3047 = vmatprep.subr.mxu0 0.0
    %3048 = vmatpush1.msra.mxu0 0.0
    %3049 = vmatprep.subr.mxu0 0.0
    %3050 = vmatpush1.msra.mxu0 0.0
    %3051 = vmatprep.subr.mxu0 0.0
    %3052 = vmatpush1.msra.mxu0 0.0
    %3053 = vmatprep.subr.mxu0 0.0
    %3054 = vmatpush1.msra.mxu0 0.0
    %3055 = vmatprep.subr.mxu0 0.0
    %3056 = vmatpush1.msra.mxu0 0.0
    %3057 = vmatprep.subr.mxu0 0.0
    %3058 = vmatpush1.msra.mxu0 0.0
    %3059 = vmatprep.subr.mxu0 0.0
    %3060 = vmatpush1.msra.mxu0 0.0
    %3061 = vmatprep.subr.mxu0 0.0
    %3062 = vmatpush1.msra.mxu0 0.0
    %3063 = vmatprep.subr.mxu0 0.0
    %3064 = vmatpush1.msra.mxu0 0.0
    %3065 = vmatprep.subr.mxu0 0.0
    %3066 = vmatpush1.msra.mxu0 0.0
    %3067 = vmatprep.subr.mxu0 0.0
    %3068 = vmatpush1.msra.mxu0 0.0
    %3069 = vmatprep.subr.mxu0 0.0
    %3070 = vmatpush1.msra.mxu0 0.0
    %3071 = vmatprep.subr.mxu0 0.0
    %3072 = vmatpush1.msra.mxu0 %v1295
    %3073 = vmatprep.subr.mxu0 0.0
    %3074 = vmatpush1.msra.mxu0 %v1290
    %3075 = vmatprep.subr.mxu0 0.0
    %3076 = vmatpush2.msra.mxu0 0.0
    %3077 = vmatprep.subr.mxu0 0.0
    %3078 = vmatpush2.msra.mxu0 0.0
    %3079 = vmatprep.subr.mxu0 0.0
    %3080 = vmatpush2.msra.mxu0 0.0
    %3081 = vmatprep.subr.mxu0 0.0
    %3082 = vmatpush2.msra.mxu0 0.0
    %3083 = vmatprep.subr.mxu0 0.0
    %3084 = vmatpush2.msra.mxu0 0.0
    %3085 = vmatprep.subr.mxu0 0.0
    %3086 = vmatpush2.msra.mxu0 0.0
    %3087 = vmatprep.subr.mxu0 0.0
    %3088 = vmatpush2.msra.mxu0 0.0
    %3089 = vmatprep.subr.mxu0 0.0
    %3090 = vmatpush2.msra.mxu0 0.0
    %3091 = vmatprep.subr.mxu0 0.0
    %3092 = vmatpush2.msra.mxu0 0.0
    %3093 = vmatprep.subr.mxu0 0.0
    %3094 = vmatpush2.msra.mxu0 0.0
    %3095 = vmatprep.subr.mxu0 0.0
    %3096 = vmatpush2.msra.mxu0 0.0
    %3097 = vmatprep.subr.mxu0 0.0
    %3098 = vmatpush2.msra.mxu0 0.0
    %3099 = vmatprep.subr.mxu0 0.0
    %3100 = vmatpush2.msra.mxu0 0.0
    %3101 = vmatprep.subr.mxu0 0.0
    %3102 = vmatpush2.msra.mxu0 0.0
    %3103 = vmatprep.subr.mxu0 0.0
    %3104 = vmatpush2.msra.mxu0 0.0
    %3105 = vmatprep.subr.mxu0 0.0
    %3106 = vmatpush2.msra.mxu0 0.0
    %3107 = vmatprep.mubr.f32.mxu0 0.0
    %3108 = vmatmul.mubr.f32.gmra.mxu0 %v3038
    %v3109 = vpop.f32.mrf.mxu0
    %v3110 = vadd.f32 0.0, %v3109
    %v3111 = vpop.f32.mrf.mxu0
    %3112 = vmatprep.mubr.f32.mxu0 0.0
    %3113 = vmatmul.mubr.f32.gmra.mxu0 %v3041
    %v3114 = vpop.f32.mrf.mxu0
    %v3115 = vadd.f32 0.0, %v3114
    %v3116 = vpop.f32.mrf.mxu0
    %3117 = vdwg.mxu0
    %v3119 = vsel %vm79, %v1980, 0
    %v3122 = vsel %vm79, %v1981, 0
    %3124 = vmatprep.subr.mxu0 0.0
    %3125 = vmatpush1.msra.mxu0 0.0
    %3126 = vmatprep.subr.mxu0 0.0
    %3127 = vmatpush1.msra.mxu0 0.0
    %3128 = vmatprep.subr.mxu0 0.0
    %3129 = vmatpush1.msra.mxu0 0.0
    %3130 = vmatprep.subr.mxu0 0.0
    %3131 = vmatpush1.msra.mxu0 0.0
    %3132 = vmatprep.subr.mxu0 0.0
    %3133 = vmatpush1.msra.mxu0 0.0
    %3134 = vmatprep.subr.mxu0 0.0
    %3135 = vmatpush1.msra.mxu0 0.0
    %3136 = vmatprep.subr.mxu0 0.0
    %3137 = vmatpush1.msra.mxu0 0.0
    %3138 = vmatprep.subr.mxu0 0.0
    %3139 = vmatpush1.msra.mxu0 0.0
    %3140 = vmatprep.subr.mxu0 0.0
    %3141 = vmatpush1.msra.mxu0 0.0
    %3142 = vmatprep.subr.mxu0 0.0
    %3143 = vmatpush1.msra.mxu0 0.0
    %3144 = vmatprep.subr.mxu0 0.0
    %3145 = vmatpush1.msra.mxu0 0.0
    %3146 = vmatprep.subr.mxu0 0.0
    %3147 = vmatpush1.msra.mxu0 0.0
    %3148 = vmatprep.subr.mxu0 0.0
    %3149 = vmatpush1.msra.mxu0 0.0
    %3150 = vmatprep.subr.mxu0 0.0
    %3151 = vmatpush1.msra.mxu0 0.0
    %3152 = vmatprep.subr.mxu0 0.0
    %3153 = vmatpush1.msra.mxu0 %v1382
    %3154 = vmatprep.subr.mxu0 0.0
    %3155 = vmatpush1.msra.mxu0 %v1377
    %3156 = vmatprep.subr.mxu0 0.0
    %3157 = vmatpush2.msra.mxu0 0.0
    %3158 = vmatprep.subr.mxu0 0.0
    %3159 = vmatpush2.msra.mxu0 0.0
    %3160 = vmatprep.subr.mxu0 0.0
    %3161 = vmatpush2.msra.mxu0 0.0
    %3162 = vmatprep.subr.mxu0 0.0
    %3163 = vmatpush2.msra.mxu0 0.0
    %3164 = vmatprep.subr.mxu0 0.0
    %3165 = vmatpush2.msra.mxu0 0.0
    %3166 = vmatprep.subr.mxu0 0.0
    %3167 = vmatpush2.msra.mxu0 0.0
    %3168 = vmatprep.subr.mxu0 0.0
    %3169 = vmatpush2.msra.mxu0 0.0
    %3170 = vmatprep.subr.mxu0 0.0
    %3171 = vmatpush2.msra.mxu0 0.0
    %3172 = vmatprep.subr.mxu0 0.0
    %3173 = vmatpush2.msra.mxu0 0.0
    %3174 = vmatprep.subr.mxu0 0.0
    %3175 = vmatpush2.msra.mxu0 0.0
    %3176 = vmatprep.subr.mxu0 0.0
    %3177 = vmatpush2.msra.mxu0 0.0
    %3178 = vmatprep.subr.mxu0 0.0
    %3179 = vmatpush2.msra.mxu0 0.0
    %3180 = vmatprep.subr.mxu0 0.0
    %3181 = vmatpush2.msra.mxu0 0.0
    %3182 = vmatprep.subr.mxu0 0.0
    %3183 = vmatpush2.msra.mxu0 0.0
    %3184 = vmatprep.subr.mxu0 0.0
    %3185 = vmatpush2.msra.mxu0 0.0
    %3186 = vmatprep.subr.mxu0 0.0
    %3187 = vmatpush2.msra.mxu0 0.0
    %3188 = vmatprep.mubr.f32.mxu0 0.0
    %3189 = vmatmul.mubr.f32.gmra.mxu0 %v3119
    %v3190 = vpop.f32.mrf.mxu0
    %v3191 = vadd.f32 0.0, %v3190
    %v3192 = vpop.f32.mrf.mxu0
    %3193 = vmatprep.mubr.f32.mxu0 0.0
    %3194 = vmatmul.mubr.f32.gmra.mxu0 %v3122
    %v3195 = vpop.f32.mrf.mxu0
    %v3196 = vadd.f32 0.0, %v3195
    %v3197 = vpop.f32.mrf.mxu0
    %3198 = vdwg.mxu0
    %v3200 = vsel %vm79, %v1982, 0
    %v3203 = vsel %vm79, %v1983, 0
    %3205 = vmatprep.subr.mxu0 0.0
    %3206 = vmatpush1.msra.mxu0 0.0
    %3207 = vmatprep.subr.mxu0 0.0
    %3208 = vmatpush1.msra.mxu0 0.0
    %3209 = vmatprep.subr.mxu0 0.0
    %3210 = vmatpush1.msra.mxu0 0.0
    %3211 = vmatprep.subr.mxu0 0.0
    %3212 = vmatpush1.msra.mxu0 0.0
    %3213 = vmatprep.subr.mxu0 0.0
    %3214 = vmatpush1.msra.mxu0 0.0
    %3215 = vmatprep.subr.mxu0 0.0
    %3216 = vmatpush1.msra.mxu0 0.0
    %3217 = vmatprep.subr.mxu0 0.0
    %3218 = vmatpush1.msra.mxu0 0.0
    %3219 = vmatprep.subr.mxu0 0.0
    %3220 = vmatpush1.msra.mxu0 0.0
    %3221 = vmatprep.subr.mxu0 0.0
    %3222 = vmatpush1.msra.mxu0 0.0
    %3223 = vmatprep.subr.mxu0 0.0
    %3224 = vmatpush1.msra.mxu0 0.0
    %3225 = vmatprep.subr.mxu0 0.0
    %3226 = vmatpush1.msra.mxu0 0.0
    %3227 = vmatprep.subr.mxu0 0.0
    %3228 = vmatpush1.msra.mxu0 0.0
    %3229 = vmatprep.subr.mxu0 0.0
    %3230 = vmatpush1.msra.mxu0 0.0
    %3231 = vmatprep.subr.mxu0 0.0
    %3232 = vmatpush1.msra.mxu0 0.0
    %3233 = vmatprep.subr.mxu0 0.0
    %3234 = vmatpush1.msra.mxu0 %v1469
    %3235 = vmatprep.subr.mxu0 0.0
    %3236 = vmatpush1.msra.mxu0 %v1464
    %3237 = vmatprep.subr.mxu0 0.0
    %3238 = vmatpush2.msra.mxu0 0.0
    %3239 = vmatprep.subr.mxu0 0.0
    %3240 = vmatpush2.msra.mxu0 0.0
    %3241 = vmatprep.subr.mxu0 0.0
    %3242 = vmatpush2.msra.mxu0 0.0
    %3243 = vmatprep.subr.mxu0 0.0
    %3244 = vmatpush2.msra.mxu0 0.0
    %3245 = vmatprep.subr.mxu0 0.0
    %3246 = vmatpush2.msra.mxu0 0.0
    %3247 = vmatprep.subr.mxu0 0.0
    %3248 = vmatpush2.msra.mxu0 0.0
    %3249 = vmatprep.subr.mxu0 0.0
    %3250 = vmatpush2.msra.mxu0 0.0
    %3251 = vmatprep.subr.mxu0 0.0
    %3252 = vmatpush2.msra.mxu0 0.0
    %3253 = vmatprep.subr.mxu0 0.0
    %3254 = vmatpush2.msra.mxu0 0.0
    %3255 = vmatprep.subr.mxu0 0.0
    %3256 = vmatpush2.msra.mxu0 0.0
    %3257 = vmatprep.subr.mxu0 0.0
    %3258 = vmatpush2.msra.mxu0 0.0
    %3259 = vmatprep.subr.mxu0 0.0
    %3260 = vmatpush2.msra.mxu0 0.0
    %3261 = vmatprep.subr.mxu0 0.0
    %3262 = vmatpush2.msra.mxu0 0.0
    %3263 = vmatprep.subr.mxu0 0.0
    %3264 = vmatpush2.msra.mxu0 0.0
    %3265 = vmatprep.subr.mxu0 0.0
    %3266 = vmatpush2.msra.mxu0 0.0
    %3267 = vmatprep.subr.mxu0 0.0
    %3268 = vmatpush2.msra.mxu0 0.0
    %3269 = vmatprep.mubr.f32.mxu0 0.0
    %3270 = vmatmul.mubr.f32.gmra.mxu0 %v3200
    %v3271 = vpop.f32.mrf.mxu0
    %v3272 = vadd.f32 0.0, %v3271
    %v3273 = vpop.f32.mrf.mxu0
    %3274 = vmatprep.mubr.f32.mxu0 0.0
    %3275 = vmatmul.mubr.f32.gmra.mxu0 %v3203
    %v3276 = vpop.f32.mrf.mxu0
    %v3277 = vadd.f32 0.0, %v3276
    %v3278 = vpop.f32.mrf.mxu0
    %3279 = vdwg.mxu0
    %3280 = vst.msk [vmem:[#allocation2] sm:$0xff] %vm79, %v2057
    %3281 = vst.msk [vmem:[#allocation2 + $0x8] sm:$0xff] %vm79, %v2062
    %3282 = vst.msk [vmem:[#allocation2 + $0x10] sm:$0xff] %vm79, %v2138
    %3283 = vst.msk [vmem:[#allocation2 + $0x18] sm:$0xff] %vm79, %v2143
    %3284 = vst.msk [vmem:[#allocation2 + $0x20] sm:$0xff] %vm79, %v2219
    %3285 = vst.msk [vmem:[#allocation2 + $0x28] sm:$0xff] %vm79, %v2224
    %3286 = vst.msk [vmem:[#allocation2 + $0x30] sm:$0xff] %vm79, %v2300
    %3287 = vst.msk [vmem:[#allocation2 + $0x38] sm:$0xff] %vm79, %v2305
    %3288 = vst.msk [vmem:[#allocation2 + $0x40] sm:$0xff] %vm79, %v2381
    %3289 = vst.msk [vmem:[#allocation2 + $0x48] sm:$0xff] %vm79, %v2386
    %3290 = vst.msk [vmem:[#allocation2 + $0x50] sm:$0xff] %vm79, %v2462
    %3291 = vst.msk [vmem:[#allocation2 + $0x58] sm:$0xff] %vm79, %v2467
    %3292 = vst.msk [vmem:[#allocation2 + $0x60] sm:$0xff] %vm79, %v2543
    %3293 = vst.msk [vmem:[#allocation2 + $0x68] sm:$0xff] %vm79, %v2548
    %3294 = vst.msk [vmem:[#allocation2 + $0x70] sm:$0xff] %vm79, %v2624
    %3295 = vst.msk [vmem:[#allocation2 + $0x78] sm:$0xff] %vm79, %v2629
    %3296 = vst.msk [vmem:[#allocation2 + $0x80] sm:$0xff] %vm79, %v2705
    %3297 = vst.msk [vmem:[#allocation2 + $0x88] sm:$0xff] %vm79, %v2710
    %3298 = vst.msk [vmem:[#allocation2 + $0x90] sm:$0xff] %vm79, %v2786
    %3299 = vst.msk [vmem:[#allocation2 + $0x98] sm:$0xff] %vm79, %v2791
    %3300 = vst.msk [vmem:[#allocation2 + $0xa0] sm:$0xff] %vm79, %v2867
    %3301 = vst.msk [vmem:[#allocation2 + $0xa8] sm:$0xff] %vm79, %v2872
    %3302 = vst.msk [vmem:[#allocation2 + $0xb0] sm:$0xff] %vm79, %v2948
    %3303 = vst.msk [vmem:[#allocation2 + $0xb8] sm:$0xff] %vm79, %v2953
    %3304 = vst.msk [vmem:[#allocation2 + $0xc0] sm:$0xff] %vm79, %v3029
    %3305 = vst.msk [vmem:[#allocation2 + $0xc8] sm:$0xff] %vm79, %v3034
    %3306 = vst.msk [vmem:[#allocation2 + $0xd0] sm:$0xff] %vm79, %v3110
    %3307 = vst.msk [vmem:[#allocation2 + $0xd8] sm:$0xff] %vm79, %v3115
    %3308 = vst.msk [vmem:[#allocation2 + $0xe0] sm:$0xff] %vm79, %v3191
    %3309 = vst.msk [vmem:[#allocation2 + $0xe8] sm:$0xff] %vm79, %v3196
    %3310 = vst.msk [vmem:[#allocation2 + $0xf0] sm:$0xff] %vm79, %v3272
    %3311 = vst.msk [vmem:[#allocation2 + $0xf8] sm:$0xff] %vm79, %v3277
    // Predicated region
    $region14: #{model_forward.3} parent=1 // pred_check
      _
    $region15: #{model_forward.3} parent=1 // pred_check_branch
      %3313 = sbr.rel (0) target = $region17
    $region16: #{model_forward.3} parent=1 // pred_region
      %s3315 = ssub.s32 4096, 4096
      %3316 = vsyncadd [#allocation3], %s3315
      %s3317 = sshll.u32 [#allocation2], 4
      %s3318 = int_to_ptr.vmem [resolvable:$true] %s3317
      %3323 = dma.vmem_to_hbm [thread:$0]  %s3318, 4096, %s3, [#allocation3], 128, 128, 8
    $region17: #{model_forward.3} parent=1 // pred_fallthru
      _
    // Predicated region
    $region18: #{model_forward.3} parent=1 // pred_check
      _
    $region19: #{model_forward.3} parent=1 // pred_check_branch
      %3325 = sbr.rel (0) target = $region21
    $region20: #{model_forward.3} parent=1 // pred_region
      %3326 = dma.done [#allocation3], 4096
    $region21: #{model_forward.3} parent=1 // pred_fallthru
      _
    %3327 = vsyncpa [#allocation3], 1

</llo_original>
